<compile_context>
chip_gen: v7x
topology: tpu7x:2x2x1
jax: 0.10.0
libtpu: 0.0.40
codegen_flags: <defaults>
</compile_context>

<pallas_src>
import math

import jax
import jax.numpy as jnp
from jax import lax
from jax.experimental import pallas as pl
from jax.experimental.pallas import tpu as pltpu

# ----------------------------- config (small demo sizes) -----------------------------
TAGS = ['PAD', 'B-MISC', 'I-MISC', 'B-PER', 'I-PER', 'B-ORG', 'I-ORG',
        'B-LOC', 'I-LOC', 'O', 'X', 'CLS', 'SEP']
NUM_TAGS = len(TAGS)            # 13
BATCH = 2
SEQ = 8
HIDDEN = 32                     # stands in for hidden_dim=768
NUM_HEADS = 4
HEAD_DIM = HIDDEN // NUM_HEADS
FFN = 64
NUM_LAYERS = 2
VOCAB = 128
MAX_POS = 16
LN_EPS = 1e-12
NEG_INF_BIAS = -10000.0         # classic BERT additive attention-mask bias


# ----------------------------- in-kernel helpers -----------------------------
def _layer_norm(x, g, b):
    mu = jnp.mean(x, axis=-1, keepdims=True)
    var = jnp.mean(jnp.square(x - mu), axis=-1, keepdims=True)
    return (x - mu) * lax.rsqrt(var + LN_EPS) * g + b


# ----------------------------- kernel 1: fused BERT encoder + hidden2tag -----------------------------
def encoder_kernel(ids_ref, mask_ref,
                   wemb_ref, pemb_ref, temb_ref, eg_ref, eb_ref,
                   wq_ref, bq_ref, wk_ref, bk_ref, wv_ref, bv_ref,
                   wo_ref, bo_ref, g1_ref, be1_ref,
                   w1_ref, fb1_ref, w2_ref, fb2_ref, g2_ref, be2_ref,
                   tagw_ref, tagb_ref, em_ref):
    B, S, T = em_ref.shape
    BS = B * S
    V, H = wemb_ref.shape
    L = wq_ref.shape[0]
    nH, dh = NUM_HEADS, HEAD_DIM
    scale = 1.0 / math.sqrt(dh)

    # additive attention-mask bias computed in-kernel from the (B,1,S) mask
    bias = (1.0 - mask_ref[...]) * NEG_INF_BIAS                      # (B, 1, S)

    # ---- embeddings: in-kernel one-hot (iota compare) + MXU gather-matmul ----
    # TODO(synk): at real vocab sizes replace the one-hot matmul with a scalar-prefetch row gather.
    onehot = (ids_ref[...] ==
              lax.broadcasted_iota(jnp.int32, (BS, V), 1)).astype(jnp.bfloat16)
    we = jnp.dot(onehot, wemb_ref[...], preferred_element_type=jnp.float32)  # (BS, H)
    x = (we.reshape(B, S, H)
         + pemb_ref[0:S, :][None, :, :]                              # positions 0..S-1
         + temb_ref[0:1, :][None, :, :])                             # token_type_ids == 0
    x2 = _layer_norm(x, eg_ref[...], eb_ref[...]).reshape(BS, H)     # (BS, H) f32

    # ---- encoder stack: loop layers in-kernel over stacked (L, ...) weights ----
    def layer_body(l, h_in):
        h_bf = h_in.astype(jnp.bfloat16)
        q = jnp.dot(h_bf, wq_ref[l], preferred_element_type=jnp.float32) + bq_ref[l]
        k = jnp.dot(h_bf, wk_ref[l], preferred_element_type=jnp.float32) + bk_ref[l]
        v = jnp.dot(h_bf, wv_ref[l], preferred_element_type=jnp.float32) + bv_ref[l]
        q3 = q.reshape(B, S, H)
        k3 = k.reshape(B, S, H)
        v3 = v.reshape(B, S, H)

        ctx_heads = []
        for h in range(nH):                                          # static unroll over heads
            sl = slice(h * dh, (h + 1) * dh)
            qh = q3[:, :, sl].astype(jnp.bfloat16)
            kh = k3[:, :, sl].astype(jnp.bfloat16)
            vh = v3[:, :, sl].astype(jnp.bfloat16)
            s = jnp.einsum('bqd,bkd->bqk', qh, kh,
                           preferred_element_type=jnp.float32) * scale + bias
            s = s - jnp.max(s, axis=-1, keepdims=True)
            p = jnp.exp(s)
            p = p * pl.reciprocal(jnp.sum(p, axis=-1, keepdims=True), approx=True)
            ctx_heads.append(jnp.einsum('bqk,bkd->bqd', p.astype(jnp.bfloat16), vh,
                                        preferred_element_type=jnp.float32))
        ctx = jnp.concatenate(ctx_heads, axis=-1).reshape(BS, H)     # concat(heads)
        attn = jnp.dot(ctx.astype(jnp.bfloat16), wo_ref[l],
                       preferred_element_type=jnp.float32) + bo_ref[l]

        h1 = _layer_norm(h_in + attn, g1_ref[l], be1_ref[l])         # attn residual + LN
        ff = jnp.dot(h1.astype(jnp.bfloat16), w1_ref[l],
                     preferred_element_type=jnp.float32) + fb1_ref[l]
        # TODO(synk): HF BERT uses erf-GELU; tanh-approx GELU used here.
        ff = jax.nn.gelu(ff, approximate=True)
        ff = jnp.dot(ff.astype(jnp.bfloat16), w2_ref[l],
                     preferred_element_type=jnp.float32) + fb2_ref[l]
        return _layer_norm(h1 + ff, g2_ref[l], be2_ref[l])           # FFN residual + LN

    hidden = lax.fori_loop(0, L, layer_body, x2)                     # (BS, H)

    # dropout(p=0.2) is identity at inference; hidden2tag fused here.
    em = jnp.dot(hidden.astype(jnp.bfloat16), tagw_ref[...],
                 preferred_element_type=jnp.float32) + tagb_ref[...]
    em_ref[...] = em.reshape(B, S, T)


# ----------------------------- kernel 2: CRF Viterbi decode -----------------------------
def viterbi_kernel(len_ref, em_ref, trans_ref, start_ref, endcol_ref,
                   path_ref, score_scr, bp_scr):
    # grid axis = batch; em_ref is this sequence's emissions (S, T)
    b = pl.program_id(0)
    S, T = em_ref.shape
    length = len_ref[b]
    seq_end = length - 1

    trans = trans_ref[...]                                   # (T, T): trans[prev, next]
    iota_prev = lax.broadcasted_iota(jnp.int32, (T, T), 0)   # prev-tag (sublane) index
    eye = iota_prev == lax.broadcasted_iota(jnp.int32, (T, T), 1)
    iota_t = lax.broadcasted_iota(jnp.int32, (1, T), 1)
    iota_s = lax.broadcasted_iota(jnp.int32, (1, S), 1)
    iota_col = lax.broadcasted_iota(jnp.int32, (T, 1), 0)

    def row_to_col(row):
        # (1,T) -> (T,1) relayout via identity-mask select + lane reduce (no transpose op)
        return jnp.sum(jnp.where(eye, row, 0.0), axis=1, keepdims=True)

    # ---- forward max-sum recursion (torchcrf._viterbi_decode), vectorized over tags ----
    score_scr[...] = row_to_col(start_ref[...] + em_ref[pl.ds(0, 1), :])   # (T, 1)

    def fwd_body(i, carry):
        sc = score_scr[...]                                  # (T,1) best score ending in prev tag
        cand = sc + trans                                    # (T,T): cand[p,c] = sc[p]+trans[p,c]
        mx = jnp.max(cand, axis=0, keepdims=True)            # (1,T) best over prev tag
        bp = jnp.min(jnp.where(cand == mx, iota_prev, T),
                     axis=0, keepdims=True).astype(jnp.int32)   # first-index argmax
        new_col = row_to_col(mx + em_ref[pl.ds(i, 1), :])
        score_scr[...] = jnp.where(i < length, new_col, sc)  # mask update past seq end
        bp_scr[pl.ds(i, 1), :] = bp                          # backpointers
        return carry

    lax.fori_loop(1, S, fwd_body, 0)

    # ---- backtrack ----
    final = score_scr[...] + endcol_ref[...]                 # (T, 1)
    mx = jnp.max(final)
    last_tag = jnp.min(jnp.where(final == mx, iota_col, T)).astype(jnp.int32)
    row0 = jnp.where(iota_s == seq_end, last_tag, 0).astype(jnp.int32)

    def bwd_body(j, row):
        k = S - 2 - j
        tag_next = jnp.sum(jnp.where(iota_s == k + 1, row, 0))
        bp_row = bp_scr[pl.ds(k + 1, 1), :]
        tag_k = jnp.sum(jnp.where(iota_t == tag_next, bp_row, 0))
        return jnp.where((iota_s == k) & (k < seq_end), tag_k, row)

    path_ref[...] = lax.fori_loop(0, S - 1, bwd_body, row0)  # positions >= length are 0 (PAD)


# ----------------------------- pallas_call wrappers -----------------------------
def _full_vmem(n):
    return [pl.BlockSpec(memory_space=pltpu.MemorySpace.VMEM) for _ in range(n)]


def encoder_emissions(params, ids_col, mask_row):
    """Fused embeddings + NUM_LAYERS encoder layers + hidden2tag -> emissions (B,S,T)."""
    B = mask_row.shape[0]
    S = mask_row.shape[2]
    args = (ids_col, mask_row,
            params['word_emb'], params['pos_emb'], params['type_emb'],
            params['emb_ln_g'], params['emb_ln_b'],
            params['wq'], params['bq'], params['wk'], params['bk'],
            params['wv'], params['bv'], params['wo'], params['bo'],
            params['ln1_g'], params['ln1_b'],
            params['w1'], params['b1'], params['w2'], params['b2'],
            params['ln2_g'], params['ln2_b'],
            params['tag_w'], params['tag_b'])
    return pl.pallas_call(
        encoder_kernel,
        out_shape=jax.ShapeDtypeStruct((B, S, NUM_TAGS), jnp.float32),
        in_specs=_full_vmem(len(args)),
        out_specs=pl.BlockSpec(memory_space=pltpu.MemorySpace.VMEM),
    )(*args)


def crf_decode(emissions, lengths, start, end, trans):
    B, S, T = emissions.shape
    grid_spec = pltpu.PrefetchScalarGridSpec(
        num_scalar_prefetch=1,                     # lengths live in SMEM
        grid=(B,),
        in_specs=[
            pl.BlockSpec((None, S, T), lambda b, lens: (b, 0, 0)),   # this batch's emissions
            pl.BlockSpec((T, T), lambda b, lens: (0, 0)),            # transitions[prev, next]
            pl.BlockSpec((1, T), lambda b, lens: (0, 0)),            # start_transitions (row)
            pl.BlockSpec((T, 1), lambda b, lens: (0, 0)),            # end_transitions (column)
        ],
        # per-b output block so the batch grid can run 'parallel' across cores (v7x)
        out_specs=pl.BlockSpec((None, 1, S), lambda b, lens: (b, 0, 0)),
        scratch_shapes=[pltpu.VMEM((T, 1), jnp.float32),             # viterbi score column
                        pltpu.VMEM((S, T), jnp.int32)],              # backpointers
    )
    out = pl.pallas_call(
        viterbi_kernel,
        out_shape=jax.ShapeDtypeStruct((B, 1, S), jnp.int32),
        grid_spec=grid_spec,
        compiler_params=pltpu.CompilerParams(dimension_semantics=("parallel",)),
    )(lengths, emissions, trans, start, end.reshape(T, 1))
    return out.reshape(B, S)


def bert_gat_crf_ner_forward(params, input_ids, attention_mask):
    """Equivalent of BertGatCRFNerModel.forward({'input_ids', 'attention_mask'})."""
    B, S = input_ids.shape
    ids_col = input_ids.reshape(B * S, 1).astype(jnp.int32)
    mask_row = attention_mask.astype(jnp.float32).reshape(B, 1, S)

    emissions = encoder_emissions(params, ids_col, mask_row)   # fused BERT + hidden2tag
    # self.dropout(p=0.2): identity in inference mode
    lengths = attention_mask.astype(jnp.int32).sum(axis=-1)
    paths = crf_decode(emissions, lengths, params['crf_start'],
                       params['crf_end'], params['crf_trans'])  # CRF.decode (Viterbi)
    return paths                                  # (B, S) int32, PAD(0) after length


# ----------------------------- deterministic parameter init -----------------------------
def init_params(key):
    def nrm(k, shape, std=0.02):
        return std * jax.random.normal(k, shape, dtype=jnp.float32)

    keys = iter(jax.random.split(key, 8 + NUM_LAYERS * 12))
    ones_h = jnp.ones((1, HIDDEN), jnp.float32)
    zeros_h = jnp.zeros((1, HIDDEN), jnp.float32)

    wq, bq, wk, bk, wv, bv, wo, bo = ([] for _ in range(8))
    w1, b1, w2, b2 = ([] for _ in range(4))
    for _ in range(NUM_LAYERS):
        wq.append(nrm(next(keys), (HIDDEN, HIDDEN))); bq.append(nrm(next(keys), (1, HIDDEN)))
        wk.append(nrm(next(keys), (HIDDEN, HIDDEN))); bk.append(nrm(next(keys), (1, HIDDEN)))
        wv.append(nrm(next(keys), (HIDDEN, HIDDEN))); bv.append(nrm(next(keys), (1, HIDDEN)))
        wo.append(nrm(next(keys), (HIDDEN, HIDDEN))); bo.append(nrm(next(keys), (1, HIDDEN)))
        w1.append(nrm(next(keys), (HIDDEN, FFN)));    b1.append(nrm(next(keys), (1, FFN)))
        w2.append(nrm(next(keys), (FFN, HIDDEN)));    b2.append(nrm(next(keys), (1, HIDDEN)))

    st_bf16 = lambda xs: jnp.stack(xs).astype(jnp.bfloat16)   # MXU operands stored bf16
    st_f32 = lambda xs: jnp.stack(xs)

    params = {
        'word_emb': nrm(next(keys), (VOCAB, HIDDEN)).astype(jnp.bfloat16),
        'pos_emb': nrm(next(keys), (MAX_POS, HIDDEN)),
        'type_emb': nrm(next(keys), (2, HIDDEN)),
        'emb_ln_g': ones_h, 'emb_ln_b': zeros_h,
        # per-layer weights stacked along a leading (L, ...) axis for the in-kernel layer loop
        'wq': st_bf16(wq), 'bq': st_f32(bq),
        'wk': st_bf16(wk), 'bk': st_f32(bk),
        'wv': st_bf16(wv), 'bv': st_f32(bv),
        'wo': st_bf16(wo), 'bo': st_f32(bo),
        'ln1_g': jnp.ones((NUM_LAYERS, 1, HIDDEN), jnp.float32),
        'ln1_b': jnp.zeros((NUM_LAYERS, 1, HIDDEN), jnp.float32),
        'w1': st_bf16(w1), 'b1': st_f32(b1),
        'w2': st_bf16(w2), 'b2': st_f32(b2),
        'ln2_g': jnp.ones((NUM_LAYERS, 1, HIDDEN), jnp.float32),
        'ln2_b': jnp.zeros((NUM_LAYERS, 1, HIDDEN), jnp.float32),
        'tag_w': nrm(next(keys), (HIDDEN, NUM_TAGS)).astype(jnp.bfloat16),
        'tag_b': jnp.zeros((1, NUM_TAGS), jnp.float32),
        'crf_start': jax.random.uniform(next(keys), (1, NUM_TAGS), jnp.float32, -0.1, 0.1),
        'crf_end': jax.random.uniform(next(keys), (1, NUM_TAGS), jnp.float32, -0.1, 0.1),
        'crf_trans': jax.random.uniform(next(keys), (NUM_TAGS, NUM_TAGS), jnp.float32, -0.1, 0.1),
    }
    return params


# ----------------------------- main -----------------------------
if __name__ == "__main__":
    key = jax.random.PRNGKey(0)
    pkey, ikey = jax.random.split(key)
    params = init_params(pkey)

    input_ids = jax.random.randint(ikey, (BATCH, SEQ), 0, VOCAB, dtype=jnp.int32)
    attention_mask = jnp.array([[1, 1, 1, 1, 1, 1, 1, 1],
                                [1, 1, 1, 1, 1, 0, 0, 0]], dtype=jnp.int32)

    fwd = jax.jit(bert_gat_crf_ner_forward)
    paths = fwd(params, input_ids, attention_mask)
    jax.block_until_ready(paths)
    print("KERNEL_OK")
</pallas_src>

<mosaic_0001>
module attributes {stable_mosaic.version = 11 : i64} {
  func.func @viterbi_kernel(%arg0: i32, %arg1: memref<2xi32, #tpu.memory_space<smem>>, %arg2: memref<1x8x13xf32, #tpu.memory_space<vmem>>, %arg3: memref<13x13xf32, #tpu.memory_space<vmem>>, %arg4: memref<1x13xf32, #tpu.memory_space<vmem>>, %arg5: memref<13x1xf32, #tpu.memory_space<vmem>>, %arg6: memref<1x1x8xi32, #tpu.memory_space<vmem>>, %arg7: memref<13x1xf32, #tpu.memory_space<vmem>>, %arg8: memref<8x13xi32, #tpu.memory_space<vmem>>) attributes {dimension_semantics = [#tpu.dimension_semantics<parallel>], iteration_bounds = array<i64: 2>, scalar_prefetch = 1 : i64, scratch_operands = 2 : i64, tpu.core_type = #tpu.core_type<tc>, window_params = [{transform_indices = @transform_0, window_bounds = array<i64: 1, 8, 13>}, {pipeline_mode = #tpu.pipeline_mode<synchronous>, transform_indices = @transform_1, window_bounds = array<i64: 13, 13>}, {pipeline_mode = #tpu.pipeline_mode<synchronous>, transform_indices = @transform_2, window_bounds = array<i64: 1, 13>}, {pipeline_mode = #tpu.pipeline_mode<synchronous>, transform_indices = @transform_3, window_bounds = array<i64: 13, 1>}, {transform_indices = @transform_4, window_bounds = array<i64: 1, 1, 8>}]} {
    %0 = arith.index_cast %arg0 : i32 to index
    %1 = memref.load %arg1[%0] : memref<2xi32, #tpu.memory_space<smem>>
    %c1_i32 = arith.constant 1 : i32
    %2 = arith.subi %1, %c1_i32 : i32
    %c0 = arith.constant 0 : index
    %c0_0 = arith.constant 0 : index
    %3 = vector.load %arg3[%c0, %c0_0] : memref<13x13xf32, #tpu.memory_space<vmem>>, vector<13x13xf32>
    %4 = tpu.iota {dimensions = array<i32: 0>} : vector<13x13xi32>
    %5 = tpu.iota {dimensions = array<i32: 1>} : vector<13x13xi32>
    %6 = arith.cmpi eq, %4, %5 : vector<13x13xi32>
    %7 = tpu.iota {dimensions = array<i32: 1>} : vector<1x13xi32>
    %8 = tpu.iota {dimensions = array<i32: 1>} : vector<1x8xi32>
    %9 = tpu.iota {dimensions = array<i32: 0>} : vector<13x1xi32>
    %c0_1 = arith.constant 0 : index
    %c0_2 = arith.constant 0 : index
    %10 = vector.load %arg4[%c0_1, %c0_2] : memref<1x13xf32, #tpu.memory_space<vmem>>, vector<1x13xf32>
    %c0_3 = arith.constant 0 : index
    %c0_4 = arith.constant 0 : index
    %c0_5 = arith.constant 0 : index
    %11 = vector.load %arg2[%c0_3, %c0_4, %c0_5] : memref<1x8x13xf32, #tpu.memory_space<vmem>>, vector<1x1x13xf32>
    %12 = vector.shape_cast %11 : vector<1x1x13xf32> to vector<1x13xf32>
    %13 = arith.addf %10, %12 : vector<1x13xf32>
    %cst = arith.constant 0.000000e+00 : f32
    %14 = vector.shape_cast %13 : vector<1x13xf32> to vector<1x13xf32>
    %15 = vector.broadcast %14 : vector<1x13xf32> to vector<13x13xf32>
    %16 = vector.broadcast %cst : f32 to vector<13x13xf32>
    %17 = arith.select %6, %15, %16 : vector<13x13xi1>, vector<13x13xf32>
    %cst_6 = arith.constant dense<0.000000e+00> : vector<13xf32>
    %18 = vector.multi_reduction <add>, %17, %cst_6 [1] : vector<13x13xf32> to vector<13xf32>
    %19 = vector.shape_cast %18 : vector<13xf32> to vector<13x1xf32>
    %c0_7 = arith.constant 0 : index
    %c0_8 = arith.constant 0 : index
    %20 = vector.load %arg7[%c0_7, %c0_8] : memref<13x1xf32, #tpu.memory_space<vmem>>, vector<13x1xf32>
    tpu.vector_store %arg7[%c0_7, %c0_8], %19 {strides = array<i32>} : memref<13x1xf32, #tpu.memory_space<vmem>>, vector<13x1xf32>,
    %c1_i32_9 = arith.constant 1 : i32
    %c7_i32 = arith.constant 7 : i32
    %21 = arith.addi %c1_i32_9, %c7_i32 : i32
    %c1_i32_10 = arith.constant 1 : i32
    scf.for %arg9 = %c1_i32_9 to %21 step %c1_i32_10  : i32 {
      %c0_25 = arith.constant 0 : index
      %c0_26 = arith.constant 0 : index
      %47 = vector.load %arg7[%c0_25, %c0_26] : memref<13x1xf32, #tpu.memory_space<vmem>>, vector<13x1xf32>
      %48 = vector.broadcast %47 : vector<13x1xf32> to vector<13x13xf32>
      %49 = arith.addf %48, %3 : vector<13x13xf32>
      %cst_27 = arith.constant dense<0xFF800000> : vector<13xf32>
      %50 = vector.multi_reduction <maximumf>, %49, %cst_27 [0] : vector<13x13xf32> to vector<13xf32>
      %51 = vector.shape_cast %50 : vector<13xf32> to vector<1x13xf32>
      %52 = vector.broadcast %51 : vector<1x13xf32> to vector<13x13xf32>
      %53 = arith.cmpf oeq, %49, %52 : vector<13x13xf32>
      %c13_i32_28 = arith.constant 13 : i32
      %54 = vector.broadcast %c13_i32_28 : i32 to vector<13x13xi32>
      %55 = arith.select %53, %4, %54 : vector<13x13xi1>, vector<13x13xi32>
      %cst_29 = arith.constant dense<2147483647> : vector<13xi32>
      %56 = vector.multi_reduction <minsi>, %55, %cst_29 [0] : vector<13x13xi32> to vector<13xi32>
      %57 = vector.shape_cast %56 : vector<13xi32> to vector<1x13xi32>
      %c0_30 = arith.constant 0 : index
      %58 = arith.index_cast %arg9 : i32 to index
      %c0_31 = arith.constant 0 : index
      %59 = vector.load %arg2[%c0_30, %58, %c0_31] : memref<1x8x13xf32, #tpu.memory_space<vmem>>, vector<1x1x13xf32>
      %60 = vector.shape_cast %59 : vector<1x1x13xf32> to vector<1x13xf32>
      %61 = arith.addf %51, %60 : vector<1x13xf32>
      %cst_32 = arith.constant 0.000000e+00 : f32
      %62 = vector.shape_cast %61 : vector<1x13xf32> to vector<1x13xf32>
      %63 = vector.broadcast %62 : vector<1x13xf32> to vector<13x13xf32>
      %64 = vector.broadcast %cst_32 : f32 to vector<13x13xf32>
      %65 = arith.select %6, %63, %64 : vector<13x13xi1>, vector<13x13xf32>
      %cst_33 = arith.constant dense<0.000000e+00> : vector<13xf32>
      %66 = vector.multi_reduction <add>, %65, %cst_33 [1] : vector<13x13xf32> to vector<13xf32>
      %67 = vector.shape_cast %66 : vector<13xf32> to vector<13x1xf32>
      %68 = arith.cmpi slt, %arg9, %1 : i32
      %69 = arith.select %68, %67, %47 : vector<13x1xf32>
      %c0_34 = arith.constant 0 : index
      %c0_35 = arith.constant 0 : index
      %70 = vector.load %arg7[%c0_34, %c0_35] : memref<13x1xf32, #tpu.memory_space<vmem>>, vector<13x1xf32>
      tpu.vector_store %arg7[%c0_34, %c0_35], %69 {strides = array<i32>} : memref<13x1xf32, #tpu.memory_space<vmem>>, vector<13x1xf32>,
      %71 = arith.index_cast %arg9 : i32 to index
      %c0_36 = arith.constant 0 : index
      %72 = vector.load %arg8[%71, %c0_36] : memref<8x13xi32, #tpu.memory_space<vmem>>, vector<1x13xi32>
      tpu.vector_store %arg8[%71, %c0_36], %57 {strides = array<i32>} : memref<8x13xi32, #tpu.memory_space<vmem>>, vector<1x13xi32>,
    }
    %c7_i32_11 = arith.constant 7 : i32
    %c0_12 = arith.constant 0 : index
    %c0_13 = arith.constant 0 : index
    %22 = vector.load %arg7[%c0_12, %c0_13] : memref<13x1xf32, #tpu.memory_space<vmem>>, vector<13x1xf32>
    %c0_14 = arith.constant 0 : index
    %c0_15 = arith.constant 0 : index
    %23 = vector.load %arg5[%c0_14, %c0_15] : memref<13x1xf32, #tpu.memory_space<vmem>>, vector<13x1xf32>
    %24 = arith.addf %22, %23 : vector<13x1xf32>
    %25 = vector.shape_cast %24 : vector<13x1xf32> to vector<1x13x1xf32>
    %cst_16 = arith.constant dense<0xFF800000> : vector<1xf32>
    %26 = vector.multi_reduction <maximumf>, %25, %cst_16 [1, 2] : vector<1x13x1xf32> to vector<1xf32>
    %27 = vector.shape_cast %26 : vector<1xf32> to vector<1x1x1xf32>
    %28 = vector.extract %27[0, 0, 0] : f32 from vector<1x1x1xf32>
    %29 = vector.broadcast %28 : f32 to vector<13x1xf32>
    %30 = arith.cmpf oeq, %24, %29 : vector<13x1xf32>
    %c13_i32 = arith.constant 13 : i32
    %31 = vector.broadcast %c13_i32 : i32 to vector<13x1xi32>
    %32 = arith.select %30, %9, %31 : vector<13x1xi1>, vector<13x1xi32>
    %33 = vector.shape_cast %32 : vector<13x1xi32> to vector<1x13x1xi32>
    %cst_17 = arith.constant dense<2147483647> : vector<1xi32>
    %34 = vector.multi_reduction <minsi>, %33, %cst_17 [1, 2] : vector<1x13x1xi32> to vector<1xi32>
    %35 = vector.shape_cast %34 : vector<1xi32> to vector<1x1x1xi32>
    %36 = vector.extract %35[0, 0, 0] : i32 from vector<1x1x1xi32>
    %37 = vector.broadcast %2 : i32 to vector<1x8xi32>
    %38 = arith.cmpi eq, %8, %37 : vector<1x8xi32>
    %c0_i32 = arith.constant 0 : i32
    %39 = vector.broadcast %36 : i32 to vector<1x8xi32>
    %40 = vector.broadcast %c0_i32 : i32 to vector<1x8xi32>
    %41 = arith.select %38, %39, %40 : vector<1x8xi1>, vector<1x8xi32>
    %c0_i32_18 = arith.constant 0 : i32
    %c7_i32_19 = arith.constant 7 : i32
    %42 = arith.addi %c0_i32_18, %c7_i32_19 : i32
    %c1_i32_20 = arith.constant 1 : i32
    %43 = scf.for %arg9 = %c0_i32_18 to %42 step %c1_i32_20 iter_args(%arg10 = %41) -> (vector<1x8xi32>)  : i32 {
      %c6_i32 = arith.constant 6 : i32
      %47 = arith.subi %c6_i32, %arg9 : i32
      %c1_i32_25 = arith.constant 1 : i32
      %48 = arith.addi %47, %c1_i32_25 : i32
      %49 = vector.broadcast %48 : i32 to vector<1x8xi32>
      %50 = arith.cmpi eq, %8, %49 : vector<1x8xi32>
      %c0_i32_26 = arith.constant 0 : i32
      %51 = vector.broadcast %c0_i32_26 : i32 to vector<1x8xi32>
      %52 = arith.select %50, %arg10, %51 : vector<1x8xi1>, vector<1x8xi32>
      %53 = vector.shape_cast %52 : vector<1x8xi32> to vector<1x1x8xi32>
      %cst_27 = arith.constant dense<0> : vector<1xi32>
      %54 = vector.multi_reduction <add>, %53, %cst_27 [1, 2] : vector<1x1x8xi32> to vector<1xi32>
      %55 = vector.shape_cast %54 : vector<1xi32> to vector<1x1x1xi32>
      %56 = vector.extract %55[0, 0, 0] : i32 from vector<1x1x1xi32>
      %c1_i32_28 = arith.constant 1 : i32
      %57 = arith.addi %47, %c1_i32_28 : i32
      %58 = arith.index_cast %57 : i32 to index
      %c0_29 = arith.constant 0 : index
      %59 = vector.load %arg8[%58, %c0_29] : memref<8x13xi32, #tpu.memory_space<vmem>>, vector<1x13xi32>
      %60 = vector.broadcast %56 : i32 to vector<1x13xi32>
      %61 = arith.cmpi eq, %7, %60 : vector<1x13xi32>
      %c0_i32_30 = arith.constant 0 : i32
      %62 = vector.broadcast %c0_i32_30 : i32 to vector<1x13xi32>
      %63 = arith.select %61, %59, %62 : vector<1x13xi1>, vector<1x13xi32>
      %64 = vector.shape_cast %63 : vector<1x13xi32> to vector<1x1x13xi32>
      %cst_31 = arith.constant dense<0> : vector<1xi32>
      %65 = vector.multi_reduction <add>, %64, %cst_31 [1, 2] : vector<1x1x13xi32> to vector<1xi32>
      %66 = vector.shape_cast %65 : vector<1xi32> to vector<1x1x1xi32>
      %67 = vector.extract %66[0, 0, 0] : i32 from vector<1x1x1xi32>
      %68 = vector.broadcast %47 : i32 to vector<1x8xi32>
      %69 = arith.cmpi eq, %8, %68 : vector<1x8xi32>
      %70 = arith.cmpi slt, %47, %2 : i32
      %71 = vector.broadcast %70 : i1 to vector<1x8xi1>
      %72 = arith.andi %69, %71 : vector<1x8xi1>
      %73 = vector.broadcast %67 : i32 to vector<1x8xi32>
      %74 = arith.select %72, %73, %arg10 : vector<1x8xi1>, vector<1x8xi32>
      scf.yield %74 : vector<1x8xi32>
    }
    %c7_i32_21 = arith.constant 7 : i32
    %c0_22 = arith.constant 0 : index
    %c0_23 = arith.constant 0 : index
    %c0_24 = arith.constant 0 : index
    %44 = vector.load %arg6[%c0_22, %c0_23, %c0_24] : memref<1x1x8xi32, #tpu.memory_space<vmem>>, vector<1x1x8xi32>
    %45 = vector.shape_cast %44 : vector<1x1x8xi32> to vector<1x8xi32>
    %46 = vector.shape_cast %43 : vector<1x8xi32> to vector<1x1x8xi32>
    tpu.vector_store %arg6[%c0_22, %c0_23, %c0_24], %46 {strides = array<i32>} : memref<1x1x8xi32, #tpu.memory_space<vmem>>, vector<1x1x8xi32>,
    return
  }
  func.func @transform_0(%arg0: i32, %arg1: memref<2xi32, #tpu.memory_space<smem>>) -> (i32, i32, i32) {
    %c0_i32 = arith.constant 0 : i32
    %c0_i32_0 = arith.constant 0 : i32
    %c0_i32_1 = arith.constant 0 : i32
    return %arg0, %c0_i32, %c0_i32_0 : i32, i32, i32
  }
  func.func @transform_1(%arg0: i32, %arg1: memref<2xi32, #tpu.memory_space<smem>>) -> (i32, i32) {
    %c0_i32 = arith.constant 0 : i32
    %c0_i32_0 = arith.constant 0 : i32
    %c0_i32_1 = arith.constant 0 : i32
    return %c0_i32, %c0_i32_0 : i32, i32
  }
  func.func @transform_2(%arg0: i32, %arg1: memref<2xi32, #tpu.memory_space<smem>>) -> (i32, i32) {
    %c0_i32 = arith.constant 0 : i32
    %c0_i32_0 = arith.constant 0 : i32
    %c0_i32_1 = arith.constant 0 : i32
    return %c0_i32, %c0_i32_0 : i32, i32
  }
  func.func @transform_3(%arg0: i32, %arg1: memref<2xi32, #tpu.memory_space<smem>>) -> (i32, i32) {
    %c0_i32 = arith.constant 0 : i32
    %c0_i32_0 = arith.constant 0 : i32
    %c0_i32_1 = arith.constant 0 : i32
    return %c0_i32, %c0_i32_0 : i32, i32
  }
  func.func @transform_4(%arg0: i32, %arg1: memref<2xi32, #tpu.memory_space<smem>>) -> (i32, i32, i32) {
    %c0_i32 = arith.constant 0 : i32
    %c0_i32_0 = arith.constant 0 : i32
    %c0_i32_1 = arith.constant 0 : i32
    return %arg0, %c0_i32, %c0_i32_0 : i32, i32, i32
  }
}

module attributes {stable_mosaic.version = 11 : i64} {
  func.func @encoder_kernel(%arg0: memref<16x1xi32, #tpu.memory_space<vmem>>, %arg1: memref<2x1x8xf32, #tpu.memory_space<vmem>>, %arg2: memref<128x32xbf16, #tpu.memory_space<vmem>>, %arg3: memref<16x32xf32, #tpu.memory_space<vmem>>, %arg4: memref<2x32xf32, #tpu.memory_space<vmem>>, %arg5: memref<1x32xf32, #tpu.memory_space<vmem>>, %arg6: memref<1x32xf32, #tpu.memory_space<vmem>>, %arg7: memref<2x32x32xbf16, #tpu.memory_space<vmem>>, %arg8: memref<2x1x32xf32, #tpu.memory_space<vmem>>, %arg9: memref<2x32x32xbf16, #tpu.memory_space<vmem>>, %arg10: memref<2x1x32xf32, #tpu.memory_space<vmem>>, %arg11: memref<2x32x32xbf16, #tpu.memory_space<vmem>>, %arg12: memref<2x1x32xf32, #tpu.memory_space<vmem>>, %arg13: memref<2x32x32xbf16, #tpu.memory_space<vmem>>, %arg14: memref<2x1x32xf32, #tpu.memory_space<vmem>>, %arg15: memref<2x1x32xf32, #tpu.memory_space<vmem>>, %arg16: memref<2x1x32xf32, #tpu.memory_space<vmem>>, %arg17: memref<2x32x64xbf16, #tpu.memory_space<vmem>>, %arg18: memref<2x1x64xf32, #tpu.memory_space<vmem>>, %arg19: memref<2x64x32xbf16, #tpu.memory_space<vmem>>, %arg20: memref<2x1x32xf32, #tpu.memory_space<vmem>>, %arg21: memref<2x1x32xf32, #tpu.memory_space<vmem>>, %arg22: memref<2x1x32xf32, #tpu.memory_space<vmem>>, %arg23: memref<32x13xbf16, #tpu.memory_space<vmem>>, %arg24: memref<1x13xf32, #tpu.memory_space<vmem>>, %arg25: memref<2x8x13xf32, #tpu.memory_space<vmem>>) attributes {dimension_semantics = [], scalar_prefetch = 0 : i64, scratch_operands = 0 : i64, tpu.core_type = #tpu.core_type<tc>} {
    %c0 = arith.constant 0 : index
    %c0_0 = arith.constant 0 : index
    %c0_1 = arith.constant 0 : index
    %0 = vector.load %arg1[%c0, %c0_0, %c0_1] : memref<2x1x8xf32, #tpu.memory_space<vmem>>, vector<2x1x8xf32>
    %cst = arith.constant 1.000000e+00 : f32
    %1 = vector.broadcast %cst : f32 to vector<2x1x8xf32>
    %2 = arith.subf %1, %0 : vector<2x1x8xf32>
    %cst_2 = arith.constant -1.000000e+04 : f32
    %3 = vector.broadcast %cst_2 : f32 to vector<2x1x8xf32>
    %4 = arith.mulf %2, %3 : vector<2x1x8xf32>
    %c0_3 = arith.constant 0 : index
    %c0_4 = arith.constant 0 : index
    %5 = vector.load %arg0[%c0_3, %c0_4] : memref<16x1xi32, #tpu.memory_space<vmem>>, vector<16x1xi32>
    %6 = tpu.iota {dimensions = array<i32: 1>} : vector<16x128xi32>
    %7 = vector.broadcast %5 : vector<16x1xi32> to vector<16x128xi32>
    %8 = arith.cmpi eq, %7, %6 : vector<16x128xi32>
    %9 = arith.extui %8 : vector<16x128xi1> to vector<16x128xi32>
    %10 = arith.sitofp %9 : vector<16x128xi32> to vector<16x128xf32>
    %11 = arith.truncf %10 : vector<16x128xf32> to vector<16x128xbf16>
    %c0_5 = arith.constant 0 : index
    %c0_6 = arith.constant 0 : index
    %12 = vector.load %arg2[%c0_5, %c0_6] : memref<128x32xbf16, #tpu.memory_space<vmem>>, vector<128x32xbf16>
    %cst_7 = arith.constant dense<0.000000e+00> : vector<16x32xf32>
    %13 = tpu.matmul %11, %12, %cst_7 {dimension_numbers = #tpu.dot_dimension_numbers<[1], [0], [0], [1], [0, 0, 1, 1], [], []>} : vector<16x128xbf16>, vector<128x32xbf16>, vector<16x32xf32> -> vector<16x32xf32>
    %14 = vector.shape_cast %13 : vector<16x32xf32> to vector<2x8x32xf32>
    %c0_8 = arith.constant 0 : index
    %c0_9 = arith.constant 0 : index
    %15 = vector.load %arg3[%c0_8, %c0_9] : memref<16x32xf32, #tpu.memory_space<vmem>>, vector<8x32xf32>
    %16 = vector.shape_cast %15 : vector<8x32xf32> to vector<1x8x32xf32>
    %17 = vector.broadcast %16 : vector<1x8x32xf32> to vector<2x8x32xf32>
    %18 = arith.addf %14, %17 : vector<2x8x32xf32>
    %c0_10 = arith.constant 0 : index
    %c0_11 = arith.constant 0 : index
    %19 = vector.load %arg4[%c0_10, %c0_11] : memref<2x32xf32, #tpu.memory_space<vmem>>, vector<1x32xf32>
    %20 = vector.shape_cast %19 : vector<1x32xf32> to vector<1x1x32xf32>
    %21 = vector.broadcast %20 : vector<1x1x32xf32> to vector<2x8x32xf32>
    %22 = arith.addf %18, %21 : vector<2x8x32xf32>
    %c0_12 = arith.constant 0 : index
    %c0_13 = arith.constant 0 : index
    %23 = vector.load %arg5[%c0_12, %c0_13] : memref<1x32xf32, #tpu.memory_space<vmem>>, vector<1x32xf32>
    %c0_14 = arith.constant 0 : index
    %c0_15 = arith.constant 0 : index
    %24 = vector.load %arg6[%c0_14, %c0_15] : memref<1x32xf32, #tpu.memory_space<vmem>>, vector<1x32xf32>
    %cst_16 = arith.constant dense<0.000000e+00> : vector<2x8xf32>
    %25 = vector.multi_reduction <add>, %22, %cst_16 [2] : vector<2x8x32xf32> to vector<2x8xf32>
    %26 = vector.shape_cast %25 : vector<2x8xf32> to vector<2x8x1xf32>
    %cst_17 = arith.constant 3.200000e+01 : f32
    %27 = vector.broadcast %cst_17 : f32 to vector<2x8x1xf32>
    %28 = arith.divf %26, %27 : vector<2x8x1xf32>
    %29 = vector.broadcast %28 : vector<2x8x1xf32> to vector<2x8x32xf32>
    %30 = arith.subf %22, %29 : vector<2x8x32xf32>
    %31 = arith.mulf %30, %30 : vector<2x8x32xf32>
    %cst_18 = arith.constant dense<0.000000e+00> : vector<2x8xf32>
    %32 = vector.multi_reduction <add>, %31, %cst_18 [2] : vector<2x8x32xf32> to vector<2x8xf32>
    %33 = vector.shape_cast %32 : vector<2x8xf32> to vector<2x8x1xf32>
    %cst_19 = arith.constant 3.200000e+01 : f32
    %34 = vector.broadcast %cst_19 : f32 to vector<2x8x1xf32>
    %35 = arith.divf %33, %34 : vector<2x8x1xf32>
    %36 = vector.broadcast %28 : vector<2x8x1xf32> to vector<2x8x32xf32>
    %37 = arith.subf %22, %36 : vector<2x8x32xf32>
    %cst_20 = arith.constant 9.99999996E-13 : f32
    %38 = vector.broadcast %cst_20 : f32 to vector<2x8x1xf32>
    %39 = arith.addf %35, %38 : vector<2x8x1xf32>
    %40 = math.rsqrt %39 : vector<2x8x1xf32>
    %41 = vector.broadcast %40 : vector<2x8x1xf32> to vector<2x8x32xf32>
    %42 = arith.mulf %37, %41 : vector<2x8x32xf32>
    %43 = vector.shape_cast %23 : vector<1x32xf32> to vector<1x1x32xf32>
    %44 = vector.broadcast %43 : vector<1x1x32xf32> to vector<2x8x32xf32>
    %45 = arith.mulf %42, %44 : vector<2x8x32xf32>
    %46 = vector.shape_cast %24 : vector<1x32xf32> to vector<1x1x32xf32>
    %47 = vector.broadcast %46 : vector<1x1x32xf32> to vector<2x8x32xf32>
    %48 = arith.addf %45, %47 : vector<2x8x32xf32>
    %49 = vector.shape_cast %48 : vector<2x8x32xf32> to vector<16x32xf32>
    %c0_i32 = arith.constant 0 : i32
    %c2_i32 = arith.constant 2 : i32
    %50 = arith.addi %c0_i32, %c2_i32 : i32
    %c1_i32 = arith.constant 1 : i32
    %51 = scf.for %arg26 = %c0_i32 to %50 step %c1_i32 iter_args(%arg27 = %49) -> (vector<16x32xf32>)  : i32 {
      %60 = arith.truncf %arg27 : vector<16x32xf32> to vector<16x32xbf16>
      %61 = arith.index_cast %arg26 : i32 to index
      %c0_30 = arith.constant 0 : index
      %c0_31 = arith.constant 0 : index
      %62 = vector.load %arg7[%61, %c0_30, %c0_31] : memref<2x32x32xbf16, #tpu.memory_space<vmem>>, vector<1x32x32xbf16>
      %63 = vector.shape_cast %62 : vector<1x32x32xbf16> to vector<32x32xbf16>
      %cst_32 = arith.constant dense<0.000000e+00> : vector<16x32xf32>
      %64 = tpu.matmul %60, %63, %cst_32 {dimension_numbers = #tpu.dot_dimension_numbers<[1], [0], [0], [1], [0, 0, 1, 1], [], []>} : vector<16x32xbf16>, vector<32x32xbf16>, vector<16x32xf32> -> vector<16x32xf32>
      %65 = arith.index_cast %arg26 : i32 to index
      %c0_33 = arith.constant 0 : index
      %c0_34 = arith.constant 0 : index
      %66 = vector.load %arg8[%65, %c0_33, %c0_34] : memref<2x1x32xf32, #tpu.memory_space<vmem>>, vector<1x1x32xf32>
      %67 = vector.shape_cast %66 : vector<1x1x32xf32> to vector<1x32xf32>
      %68 = vector.broadcast %67 : vector<1x32xf32> to vector<16x32xf32>
      %69 = arith.addf %64, %68 : vector<16x32xf32>
      %70 = arith.index_cast %arg26 : i32 to index
      %c0_35 = arith.constant 0 : index
      %c0_36 = arith.constant 0 : index
      %71 = vector.load %arg9[%70, %c0_35, %c0_36] : memref<2x32x32xbf16, #tpu.memory_space<vmem>>, vector<1x32x32xbf16>
      %72 = vector.shape_cast %71 : vector<1x32x32xbf16> to vector<32x32xbf16>
      %cst_37 = arith.constant dense<0.000000e+00> : vector<16x32xf32>
      %73 = tpu.matmul %60, %72, %cst_37 {dimension_numbers = #tpu.dot_dimension_numbers<[1], [0], [0], [1], [0, 0, 1, 1], [], []>} : vector<16x32xbf16>, vector<32x32xbf16>, vector<16x32xf32> -> vector<16x32xf32>
      %74 = arith.index_cast %arg26 : i32 to index
      %c0_38 = arith.constant 0 : index
      %c0_39 = arith.constant 0 : index
      %75 = vector.load %arg10[%74, %c0_38, %c0_39] : memref<2x1x32xf32, #tpu.memory_space<vmem>>, vector<1x1x32xf32>
      %76 = vector.shape_cast %75 : vector<1x1x32xf32> to vector<1x32xf32>
      %77 = vector.broadcast %76 : vector<1x32xf32> to vector<16x32xf32>
      %78 = arith.addf %73, %77 : vector<16x32xf32>
      %79 = arith.index_cast %arg26 : i32 to index
      %c0_40 = arith.constant 0 : index
      %c0_41 = arith.constant 0 : index
      %80 = vector.load %arg11[%79, %c0_40, %c0_41] : memref<2x32x32xbf16, #tpu.memory_space<vmem>>, vector<1x32x32xbf16>
      %81 = vector.shape_cast %80 : vector<1x32x32xbf16> to vector<32x32xbf16>
      %cst_42 = arith.constant dense<0.000000e+00> : vector<16x32xf32>
      %82 = tpu.matmul %60, %81, %cst_42 {dimension_numbers = #tpu.dot_dimension_numbers<[1], [0], [0], [1], [0, 0, 1, 1], [], []>} : vector<16x32xbf16>, vector<32x32xbf16>, vector<16x32xf32> -> vector<16x32xf32>
      %83 = arith.index_cast %arg26 : i32 to index
      %c0_43 = arith.constant 0 : index
      %c0_44 = arith.constant 0 : index
      %84 = vector.load %arg12[%83, %c0_43, %c0_44] : memref<2x1x32xf32, #tpu.memory_space<vmem>>, vector<1x1x32xf32>
      %85 = vector.shape_cast %84 : vector<1x1x32xf32> to vector<1x32xf32>
      %86 = vector.broadcast %85 : vector<1x32xf32> to vector<16x32xf32>
      %87 = arith.addf %82, %86 : vector<16x32xf32>
      %88 = vector.shape_cast %69 : vector<16x32xf32> to vector<2x8x32xf32>
      %89 = vector.shape_cast %78 : vector<16x32xf32> to vector<2x8x32xf32>
      %90 = vector.shape_cast %87 : vector<16x32xf32> to vector<2x8x32xf32>
      %91 = vector.extract_strided_slice %88 {offsets = [0, 0, 0], sizes = [2, 8, 8], strides = [1, 1, 1]} : vector<2x8x32xf32> to vector<2x8x8xf32>
      %92 = arith.truncf %91 : vector<2x8x8xf32> to vector<2x8x8xbf16>
      %93 = vector.extract_strided_slice %89 {offsets = [0, 0, 0], sizes = [2, 8, 8], strides = [1, 1, 1]} : vector<2x8x32xf32> to vector<2x8x8xf32>
      %94 = arith.truncf %93 : vector<2x8x8xf32> to vector<2x8x8xbf16>
      %95 = vector.extract_strided_slice %90 {offsets = [0, 0, 0], sizes = [2, 8, 8], strides = [1, 1, 1]} : vector<2x8x32xf32> to vector<2x8x8xf32>
      %96 = arith.truncf %95 : vector<2x8x8xf32> to vector<2x8x8xbf16>
      "tpu.trace_start"() <{level = 10 : i32, message = "bqd,bkd->bqk"}> : () -> ()
      %cst_45 = arith.constant dense<0.000000e+00> : vector<2x8x8xf32>
      %97 = tpu.matmul %92, %94, %cst_45 {dimension_numbers = #tpu.dot_dimension_numbers<[2], [2], [1], [1], [0, 0, 0, 1, 1, 1], [0], [0]>} : vector<2x8x8xbf16>, vector<2x8x8xbf16>, vector<2x8x8xf32> -> vector<2x8x8xf32>
      "tpu.trace_stop"() : () -> ()
      %cst_46 = arith.constant 0.353553385 : f32
      %98 = vector.broadcast %cst_46 : f32 to vector<2x8x8xf32>
      %99 = arith.mulf %97, %98 : vector<2x8x8xf32>
      %100 = vector.broadcast %4 : vector<2x1x8xf32> to vector<2x8x8xf32>
      %101 = arith.addf %99, %100 : vector<2x8x8xf32>
      %cst_47 = arith.constant dense<0xFF800000> : vector<2x8xf32>
      %102 = vector.multi_reduction <maximumf>, %101, %cst_47 [2] : vector<2x8x8xf32> to vector<2x8xf32>
      %103 = vector.shape_cast %102 : vector<2x8xf32> to vector<2x8x1xf32>
      %104 = vector.broadcast %103 : vector<2x8x1xf32> to vector<2x8x8xf32>
      %105 = arith.subf %101, %104 : vector<2x8x8xf32>
      %106 = math.exp %105 : vector<2x8x8xf32>
      %cst_48 = arith.constant dense<0.000000e+00> : vector<2x8xf32>
      %107 = vector.multi_reduction <add>, %106, %cst_48 [2] : vector<2x8x8xf32> to vector<2x8xf32>
      %108 = vector.shape_cast %107 : vector<2x8xf32> to vector<2x8x1xf32>
      %109 = tpu.reciprocal %108 {approx = true} : vector<2x8x1xf32> -> vector<2x8x1xf32>
      %110 = vector.broadcast %109 : vector<2x8x1xf32> to vector<2x8x8xf32>
      %111 = arith.mulf %106, %110 : vector<2x8x8xf32>
      %112 = arith.truncf %111 : vector<2x8x8xf32> to vector<2x8x8xbf16>
      "tpu.trace_start"() <{level = 10 : i32, message = "bqk,bkd->bqd"}> : () -> ()
      %cst_49 = arith.constant dense<0.000000e+00> : vector<2x8x8xf32>
      %113 = tpu.matmul %112, %96, %cst_49 {dimension_numbers = #tpu.dot_dimension_numbers<[2], [1], [1], [2], [0, 0, 0, 1, 1, 2], [0], [0]>} : vector<2x8x8xbf16>, vector<2x8x8xbf16>, vector<2x8x8xf32> -> vector<2x8x8xf32>
      "tpu.trace_stop"() : () -> ()
      %114 = vector.extract_strided_slice %88 {offsets = [0, 0, 8], sizes = [2, 8, 8], strides = [1, 1, 1]} : vector<2x8x32xf32> to vector<2x8x8xf32>
      %115 = arith.truncf %114 : vector<2x8x8xf32> to vector<2x8x8xbf16>
      %116 = vector.extract_strided_slice %89 {offsets = [0, 0, 8], sizes = [2, 8, 8], strides = [1, 1, 1]} : vector<2x8x32xf32> to vector<2x8x8xf32>
      %117 = arith.truncf %116 : vector<2x8x8xf32> to vector<2x8x8xbf16>
      %118 = vector.extract_strided_slice %90 {offsets = [0, 0, 8], sizes = [2, 8, 8], strides = [1, 1, 1]} : vector<2x8x32xf32> to vector<2x8x8xf32>
      %119 = arith.truncf %118 : vector<2x8x8xf32> to vector<2x8x8xbf16>
      "tpu.trace_start"() <{level = 10 : i32, message = "bqd,bkd->bqk"}> : () -> ()
      %cst_50 = arith.constant dense<0.000000e+00> : vector<2x8x8xf32>
      %120 = tpu.matmul %115, %117, %cst_50 {dimension_numbers = #tpu.dot_dimension_numbers<[2], [2], [1], [1], [0, 0, 0, 1, 1, 1], [0], [0]>} : vector<2x8x8xbf16>, vector<2x8x8xbf16>, vector<2x8x8xf32> -> vector<2x8x8xf32>
      "tpu.trace_stop"() : () -> ()
      %cst_51 = arith.constant 0.353553385 : f32
      %121 = vector.broadcast %cst_51 : f32 to vector<2x8x8xf32>
      %122 = arith.mulf %120, %121 : vector<2x8x8xf32>
      %123 = vector.broadcast %4 : vector<2x1x8xf32> to vector<2x8x8xf32>
      %124 = arith.addf %122, %123 : vector<2x8x8xf32>
      %cst_52 = arith.constant dense<0xFF800000> : vector<2x8xf32>
      %125 = vector.multi_reduction <maximumf>, %124, %cst_52 [2] : vector<2x8x8xf32> to vector<2x8xf32>
      %126 = vector.shape_cast %125 : vector<2x8xf32> to vector<2x8x1xf32>
      %127 = vector.broadcast %126 : vector<2x8x1xf32> to vector<2x8x8xf32>
      %128 = arith.subf %124, %127 : vector<2x8x8xf32>
      %129 = math.exp %128 : vector<2x8x8xf32>
      %cst_53 = arith.constant dense<0.000000e+00> : vector<2x8xf32>
      %130 = vector.multi_reduction <add>, %129, %cst_53 [2] : vector<2x8x8xf32> to vector<2x8xf32>
      %131 = vector.shape_cast %130 : vector<2x8xf32> to vector<2x8x1xf32>
      %132 = tpu.reciprocal %131 {approx = true} : vector<2x8x1xf32> -> vector<2x8x1xf32>
      %133 = vector.broadcast %132 : vector<2x8x1xf32> to vector<2x8x8xf32>
      %134 = arith.mulf %129, %133 : vector<2x8x8xf32>
      %135 = arith.truncf %134 : vector<2x8x8xf32> to vector<2x8x8xbf16>
      "tpu.trace_start"() <{level = 10 : i32, message = "bqk,bkd->bqd"}> : () -> ()
      %cst_54 = arith.constant dense<0.000000e+00> : vector<2x8x8xf32>
      %136 = tpu.matmul %135, %119, %cst_54 {dimension_numbers = #tpu.dot_dimension_numbers<[2], [1], [1], [2], [0, 0, 0, 1, 1, 2], [0], [0]>} : vector<2x8x8xbf16>, vector<2x8x8xbf16>, vector<2x8x8xf32> -> vector<2x8x8xf32>
      "tpu.trace_stop"() : () -> ()
      %137 = vector.extract_strided_slice %88 {offsets = [0, 0, 16], sizes = [2, 8, 8], strides = [1, 1, 1]} : vector<2x8x32xf32> to vector<2x8x8xf32>
      %138 = arith.truncf %137 : vector<2x8x8xf32> to vector<2x8x8xbf16>
      %139 = vector.extract_strided_slice %89 {offsets = [0, 0, 16], sizes = [2, 8, 8], strides = [1, 1, 1]} : vector<2x8x32xf32> to vector<2x8x8xf32>
      %140 = arith.truncf %139 : vector<2x8x8xf32> to vector<2x8x8xbf16>
      %141 = vector.extract_strided_slice %90 {offsets = [0, 0, 16], sizes = [2, 8, 8], strides = [1, 1, 1]} : vector<2x8x32xf32> to vector<2x8x8xf32>
      %142 = arith.truncf %141 : vector<2x8x8xf32> to vector<2x8x8xbf16>
      "tpu.trace_start"() <{level = 10 : i32, message = "bqd,bkd->bqk"}> : () -> ()
      %cst_55 = arith.constant dense<0.000000e+00> : vector<2x8x8xf32>
      %143 = tpu.matmul %138, %140, %cst_55 {dimension_numbers = #tpu.dot_dimension_numbers<[2], [2], [1], [1], [0, 0, 0, 1, 1, 1], [0], [0]>} : vector<2x8x8xbf16>, vector<2x8x8xbf16>, vector<2x8x8xf32> -> vector<2x8x8xf32>
      "tpu.trace_stop"() : () -> ()
      %cst_56 = arith.constant 0.353553385 : f32
      %144 = vector.broadcast %cst_56 : f32 to vector<2x8x8xf32>
      %145 = arith.mulf %143, %144 : vector<2x8x8xf32>
      %146 = vector.broadcast %4 : vector<2x1x8xf32> to vector<2x8x8xf32>
      %147 = arith.addf %145, %146 : vector<2x8x8xf32>
      %cst_57 = arith.constant dense<0xFF800000> : vector<2x8xf32>
      %148 = vector.multi_reduction <maximumf>, %147, %cst_57 [2] : vector<2x8x8xf32> to vector<2x8xf32>
      %149 = vector.shape_cast %148 : vector<2x8xf32> to vector<2x8x1xf32>
      %150 = vector.broadcast %149 : vector<2x8x1xf32> to vector<2x8x8xf32>
      %151 = arith.subf %147, %150 : vector<2x8x8xf32>
      %152 = math.exp %151 : vector<2x8x8xf32>
      %cst_58 = arith.constant dense<0.000000e+00> : vector<2x8xf32>
      %153 = vector.multi_reduction <add>, %152, %cst_58 [2] : vector<2x8x8xf32> to vector<2x8xf32>
      %154 = vector.shape_cast %153 : vector<2x8xf32> to vector<2x8x1xf32>
      %155 = tpu.reciprocal %154 {approx = true} : vector<2x8x1xf32> -> vector<2x8x1xf32>
      %156 = vector.broadcast %155 : vector<2x8x1xf32> to vector<2x8x8xf32>
      %157 = arith.mulf %152, %156 : vector<2x8x8xf32>
      %158 = arith.truncf %157 : vector<2x8x8xf32> to vector<2x8x8xbf16>
      "tpu.trace_start"() <{level = 10 : i32, message = "bqk,bkd->bqd"}> : () -> ()
      %cst_59 = arith.constant dense<0.000000e+00> : vector<2x8x8xf32>
      %159 = tpu.matmul %158, %142, %cst_59 {dimension_numbers = #tpu.dot_dimension_numbers<[2], [1], [1], [2], [0, 0, 0, 1, 1, 2], [0], [0]>} : vector<2x8x8xbf16>, vector<2x8x8xbf16>, vector<2x8x8xf32> -> vector<2x8x8xf32>
      "tpu.trace_stop"() : () -> ()
      %160 = vector.extract_strided_slice %88 {offsets = [0, 0, 24], sizes = [2, 8, 8], strides = [1, 1, 1]} : vector<2x8x32xf32> to vector<2x8x8xf32>
      %161 = arith.truncf %160 : vector<2x8x8xf32> to vector<2x8x8xbf16>
      %162 = vector.extract_strided_slice %89 {offsets = [0, 0, 24], sizes = [2, 8, 8], strides = [1, 1, 1]} : vector<2x8x32xf32> to vector<2x8x8xf32>
      %163 = arith.truncf %162 : vector<2x8x8xf32> to vector<2x8x8xbf16>
      %164 = vector.extract_strided_slice %90 {offsets = [0, 0, 24], sizes = [2, 8, 8], strides = [1, 1, 1]} : vector<2x8x32xf32> to vector<2x8x8xf32>
      %165 = arith.truncf %164 : vector<2x8x8xf32> to vector<2x8x8xbf16>
      "tpu.trace_start"() <{level = 10 : i32, message = "bqd,bkd->bqk"}> : () -> ()
      %cst_60 = arith.constant dense<0.000000e+00> : vector<2x8x8xf32>
      %166 = tpu.matmul %161, %163, %cst_60 {dimension_numbers = #tpu.dot_dimension_numbers<[2], [2], [1], [1], [0, 0, 0, 1, 1, 1], [0], [0]>} : vector<2x8x8xbf16>, vector<2x8x8xbf16>, vector<2x8x8xf32> -> vector<2x8x8xf32>
      "tpu.trace_stop"() : () -> ()
      %cst_61 = arith.constant 0.353553385 : f32
      %167 = vector.broadcast %cst_61 : f32 to vector<2x8x8xf32>
      %168 = arith.mulf %166, %167 : vector<2x8x8xf32>
      %169 = vector.broadcast %4 : vector<2x1x8xf32> to vector<2x8x8xf32>
      %170 = arith.addf %168, %169 : vector<2x8x8xf32>
      %cst_62 = arith.constant dense<0xFF800000> : vector<2x8xf32>
      %171 = vector.multi_reduction <maximumf>, %170, %cst_62 [2] : vector<2x8x8xf32> to vector<2x8xf32>
      %172 = vector.shape_cast %171 : vector<2x8xf32> to vector<2x8x1xf32>
      %173 = vector.broadcast %172 : vector<2x8x1xf32> to vector<2x8x8xf32>
      %174 = arith.subf %170, %173 : vector<2x8x8xf32>
      %175 = math.exp %174 : vector<2x8x8xf32>
      %cst_63 = arith.constant dense<0.000000e+00> : vector<2x8xf32>
      %176 = vector.multi_reduction <add>, %175, %cst_63 [2] : vector<2x8x8xf32> to vector<2x8xf32>
      %177 = vector.shape_cast %176 : vector<2x8xf32> to vector<2x8x1xf32>
      %178 = tpu.reciprocal %177 {approx = true} : vector<2x8x1xf32> -> vector<2x8x1xf32>
      %179 = vector.broadcast %178 : vector<2x8x1xf32> to vector<2x8x8xf32>
      %180 = arith.mulf %175, %179 : vector<2x8x8xf32>
      %181 = arith.truncf %180 : vector<2x8x8xf32> to vector<2x8x8xbf16>
      "tpu.trace_start"() <{level = 10 : i32, message = "bqk,bkd->bqd"}> : () -> ()
      %cst_64 = arith.constant dense<0.000000e+00> : vector<2x8x8xf32>
      %182 = tpu.matmul %181, %165, %cst_64 {dimension_numbers = #tpu.dot_dimension_numbers<[2], [1], [1], [2], [0, 0, 0, 1, 1, 2], [0], [0]>} : vector<2x8x8xbf16>, vector<2x8x8xbf16>, vector<2x8x8xf32> -> vector<2x8x8xf32>
      "tpu.trace_stop"() : () -> ()
      %183 = tpu.concatenate %113, %136, %159, %182 in 2 : vector<2x8x8xf32>, vector<2x8x8xf32>, vector<2x8x8xf32>, vector<2x8x8xf32> -> vector<2x8x32xf32>
      %184 = vector.shape_cast %183 : vector<2x8x32xf32> to vector<16x32xf32>
      %185 = arith.truncf %184 : vector<16x32xf32> to vector<16x32xbf16>
      %186 = arith.index_cast %arg26 : i32 to index
      %c0_65 = arith.constant 0 : index
      %c0_66 = arith.constant 0 : index
      %187 = vector.load %arg13[%186, %c0_65, %c0_66] : memref<2x32x32xbf16, #tpu.memory_space<vmem>>, vector<1x32x32xbf16>
      %188 = vector.shape_cast %187 : vector<1x32x32xbf16> to vector<32x32xbf16>
      %cst_67 = arith.constant dense<0.000000e+00> : vector<16x32xf32>
      %189 = tpu.matmul %185, %188, %cst_67 {dimension_numbers = #tpu.dot_dimension_numbers<[1], [0], [0], [1], [0, 0, 1, 1], [], []>} : vector<16x32xbf16>, vector<32x32xbf16>, vector<16x32xf32> -> vector<16x32xf32>
      %190 = arith.index_cast %arg26 : i32 to index
      %c0_68 = arith.constant 0 : index
      %c0_69 = arith.constant 0 : index
      %191 = vector.load %arg14[%190, %c0_68, %c0_69] : memref<2x1x32xf32, #tpu.memory_space<vmem>>, vector<1x1x32xf32>
      %192 = vector.shape_cast %191 : vector<1x1x32xf32> to vector<1x32xf32>
      %193 = vector.broadcast %192 : vector<1x32xf32> to vector<16x32xf32>
      %194 = arith.addf %189, %193 : vector<16x32xf32>
      %195 = arith.addf %arg27, %194 : vector<16x32xf32>
      %196 = arith.index_cast %arg26 : i32 to index
      %c0_70 = arith.constant 0 : index
      %c0_71 = arith.constant 0 : index
      %197 = vector.load %arg15[%196, %c0_70, %c0_71] : memref<2x1x32xf32, #tpu.memory_space<vmem>>, vector<1x1x32xf32>
      %198 = vector.shape_cast %197 : vector<1x1x32xf32> to vector<1x32xf32>
      %199 = arith.index_cast %arg26 : i32 to index
      %c0_72 = arith.constant 0 : index
      %c0_73 = arith.constant 0 : index
      %200 = vector.load %arg16[%199, %c0_72, %c0_73] : memref<2x1x32xf32, #tpu.memory_space<vmem>>, vector<1x1x32xf32>
      %201 = vector.shape_cast %200 : vector<1x1x32xf32> to vector<1x32xf32>
      %cst_74 = arith.constant dense<0.000000e+00> : vector<16xf32>
      %202 = vector.multi_reduction <add>, %195, %cst_74 [1] : vector<16x32xf32> to vector<16xf32>
      %203 = vector.shape_cast %202 : vector<16xf32> to vector<16x1xf32>
      %cst_75 = arith.constant 3.200000e+01 : f32
      %204 = vector.broadcast %cst_75 : f32 to vector<16x1xf32>
      %205 = arith.divf %203, %204 : vector<16x1xf32>
      %206 = vector.broadcast %205 : vector<16x1xf32> to vector<16x32xf32>
      %207 = arith.subf %195, %206 : vector<16x32xf32>
      %208 = arith.mulf %207, %207 : vector<16x32xf32>
      %cst_76 = arith.constant dense<0.000000e+00> : vector<16xf32>
      %209 = vector.multi_reduction <add>, %208, %cst_76 [1] : vector<16x32xf32> to vector<16xf32>
      %210 = vector.shape_cast %209 : vector<16xf32> to vector<16x1xf32>
      %cst_77 = arith.constant 3.200000e+01 : f32
      %211 = vector.broadcast %cst_77 : f32 to vector<16x1xf32>
      %212 = arith.divf %210, %211 : vector<16x1xf32>
      %213 = vector.broadcast %205 : vector<16x1xf32> to vector<16x32xf32>
      %214 = arith.subf %195, %213 : vector<16x32xf32>
      %cst_78 = arith.constant 9.99999996E-13 : f32
      %215 = vector.broadcast %cst_78 : f32 to vector<16x1xf32>
      %216 = arith.addf %212, %215 : vector<16x1xf32>
      %217 = math.rsqrt %216 : vector<16x1xf32>
      %218 = vector.broadcast %217 : vector<16x1xf32> to vector<16x32xf32>
      %219 = arith.mulf %214, %218 : vector<16x32xf32>
      %220 = vector.broadcast %198 : vector<1x32xf32> to vector<16x32xf32>
      %221 = arith.mulf %219, %220 : vector<16x32xf32>
      %222 = vector.broadcast %201 : vector<1x32xf32> to vector<16x32xf32>
      %223 = arith.addf %221, %222 : vector<16x32xf32>
      %224 = arith.truncf %223 : vector<16x32xf32> to vector<16x32xbf16>
      %225 = arith.index_cast %arg26 : i32 to index
      %c0_79 = arith.constant 0 : index
      %c0_80 = arith.constant 0 : index
      %226 = vector.load %arg17[%225, %c0_79, %c0_80] : memref<2x32x64xbf16, #tpu.memory_space<vmem>>, vector<1x32x64xbf16>
      %227 = vector.shape_cast %226 : vector<1x32x64xbf16> to vector<32x64xbf16>
      %cst_81 = arith.constant dense<0.000000e+00> : vector<16x64xf32>
      %228 = tpu.matmul %224, %227, %cst_81 {dimension_numbers = #tpu.dot_dimension_numbers<[1], [0], [0], [1], [0, 0, 1, 1], [], []>} : vector<16x32xbf16>, vector<32x64xbf16>, vector<16x64xf32> -> vector<16x64xf32>
      %229 = arith.index_cast %arg26 : i32 to index
      %c0_82 = arith.constant 0 : index
      %c0_83 = arith.constant 0 : index
      %230 = vector.load %arg18[%229, %c0_82, %c0_83] : memref<2x1x64xf32, #tpu.memory_space<vmem>>, vector<1x1x64xf32>
      %231 = vector.shape_cast %230 : vector<1x1x64xf32> to vector<1x64xf32>
      %232 = vector.broadcast %231 : vector<1x64xf32> to vector<16x64xf32>
      %233 = arith.addf %228, %232 : vector<16x64xf32>
      %234 = arith.mulf %233, %233 : vector<16x64xf32>
      %235 = arith.mulf %233, %234 : vector<16x64xf32>
      %cst_84 = arith.constant 4.471500e-02 : f32
      %236 = vector.broadcast %cst_84 : f32 to vector<16x64xf32>
      %237 = arith.mulf %236, %235 : vector<16x64xf32>
      %238 = arith.addf %233, %237 : vector<16x64xf32>
      %cst_85 = arith.constant 0.797884583 : f32
      %239 = vector.broadcast %cst_85 : f32 to vector<16x64xf32>
      %240 = arith.mulf %239, %238 : vector<16x64xf32>
      %241 = math.tanh %240 : vector<16x64xf32>
      %cst_86 = arith.constant 1.000000e+00 : f32
      %242 = vector.broadcast %cst_86 : f32 to vector<16x64xf32>
      %243 = arith.addf %242, %241 : vector<16x64xf32>
      %cst_87 = arith.constant 5.000000e-01 : f32
      %244 = vector.broadcast %cst_87 : f32 to vector<16x64xf32>
      %245 = arith.mulf %244, %243 : vector<16x64xf32>
      %246 = arith.mulf %233, %245 : vector<16x64xf32>
      %247 = arith.truncf %246 : vector<16x64xf32> to vector<16x64xbf16>
      %248 = arith.index_cast %arg26 : i32 to index
      %c0_88 = arith.constant 0 : index
      %c0_89 = arith.constant 0 : index
      %249 = vector.load %arg19[%248, %c0_88, %c0_89] : memref<2x64x32xbf16, #tpu.memory_space<vmem>>, vector<1x64x32xbf16>
      %250 = vector.shape_cast %249 : vector<1x64x32xbf16> to vector<64x32xbf16>
      %cst_90 = arith.constant dense<0.000000e+00> : vector<16x32xf32>
      %251 = tpu.matmul %247, %250, %cst_90 {dimension_numbers = #tpu.dot_dimension_numbers<[1], [0], [0], [1], [0, 0, 1, 1], [], []>} : vector<16x64xbf16>, vector<64x32xbf16>, vector<16x32xf32> -> vector<16x32xf32>
      %252 = arith.index_cast %arg26 : i32 to index
      %c0_91 = arith.constant 0 : index
      %c0_92 = arith.constant 0 : index
      %253 = vector.load %arg20[%252, %c0_91, %c0_92] : memref<2x1x32xf32, #tpu.memory_space<vmem>>, vector<1x1x32xf32>
      %254 = vector.shape_cast %253 : vector<1x1x32xf32> to vector<1x32xf32>
      %255 = vector.broadcast %254 : vector<1x32xf32> to vector<16x32xf32>
      %256 = arith.addf %251, %255 : vector<16x32xf32>
      %257 = arith.addf %223, %256 : vector<16x32xf32>
      %258 = arith.index_cast %arg26 : i32 to index
      %c0_93 = arith.constant 0 : index
      %c0_94 = arith.constant 0 : index
      %259 = vector.load %arg21[%258, %c0_93, %c0_94] : memref<2x1x32xf32, #tpu.memory_space<vmem>>, vector<1x1x32xf32>
      %260 = vector.shape_cast %259 : vector<1x1x32xf32> to vector<1x32xf32>
      %261 = arith.index_cast %arg26 : i32 to index
      %c0_95 = arith.constant 0 : index
      %c0_96 = arith.constant 0 : index
      %262 = vector.load %arg22[%261, %c0_95, %c0_96] : memref<2x1x32xf32, #tpu.memory_space<vmem>>, vector<1x1x32xf32>
      %263 = vector.shape_cast %262 : vector<1x1x32xf32> to vector<1x32xf32>
      %cst_97 = arith.constant dense<0.000000e+00> : vector<16xf32>
      %264 = vector.multi_reduction <add>, %257, %cst_97 [1] : vector<16x32xf32> to vector<16xf32>
      %265 = vector.shape_cast %264 : vector<16xf32> to vector<16x1xf32>
      %cst_98 = arith.constant 3.200000e+01 : f32
      %266 = vector.broadcast %cst_98 : f32 to vector<16x1xf32>
      %267 = arith.divf %265, %266 : vector<16x1xf32>
      %268 = vector.broadcast %267 : vector<16x1xf32> to vector<16x32xf32>
      %269 = arith.subf %257, %268 : vector<16x32xf32>
      %270 = arith.mulf %269, %269 : vector<16x32xf32>
      %cst_99 = arith.constant dense<0.000000e+00> : vector<16xf32>
      %271 = vector.multi_reduction <add>, %270, %cst_99 [1] : vector<16x32xf32> to vector<16xf32>
      %272 = vector.shape_cast %271 : vector<16xf32> to vector<16x1xf32>
      %cst_100 = arith.constant 3.200000e+01 : f32
      %273 = vector.broadcast %cst_100 : f32 to vector<16x1xf32>
      %274 = arith.divf %272, %273 : vector<16x1xf32>
      %275 = vector.broadcast %267 : vector<16x1xf32> to vector<16x32xf32>
      %276 = arith.subf %257, %275 : vector<16x32xf32>
      %cst_101 = arith.constant 9.99999996E-13 : f32
      %277 = vector.broadcast %cst_101 : f32 to vector<16x1xf32>
      %278 = arith.addf %274, %277 : vector<16x1xf32>
      %279 = math.rsqrt %278 : vector<16x1xf32>
      %280 = vector.broadcast %279 : vector<16x1xf32> to vector<16x32xf32>
      %281 = arith.mulf %276, %280 : vector<16x32xf32>
      %282 = vector.broadcast %260 : vector<1x32xf32> to vector<16x32xf32>
      %283 = arith.mulf %281, %282 : vector<16x32xf32>
      %284 = vector.broadcast %263 : vector<1x32xf32> to vector<16x32xf32>
      %285 = arith.addf %283, %284 : vector<16x32xf32>
      scf.yield %285 : vector<16x32xf32>
    }
    %c2_i32_21 = arith.constant 2 : i32
    %52 = arith.truncf %51 : vector<16x32xf32> to vector<16x32xbf16>
    %c0_22 = arith.constant 0 : index
    %c0_23 = arith.constant 0 : index
    %53 = vector.load %arg23[%c0_22, %c0_23] : memref<32x13xbf16, #tpu.memory_space<vmem>>, vector<32x13xbf16>
    %cst_24 = arith.constant dense<0.000000e+00> : vector<16x13xf32>
    %54 = tpu.matmul %52, %53, %cst_24 {dimension_numbers = #tpu.dot_dimension_numbers<[1], [0], [0], [1], [0, 0, 1, 1], [], []>} : vector<16x32xbf16>, vector<32x13xbf16>, vector<16x13xf32> -> vector<16x13xf32>
    %c0_25 = arith.constant 0 : index
    %c0_26 = arith.constant 0 : index
    %55 = vector.load %arg24[%c0_25, %c0_26] : memref<1x13xf32, #tpu.memory_space<vmem>>, vector<1x13xf32>
    %56 = vector.broadcast %55 : vector<1x13xf32> to vector<16x13xf32>
    %57 = arith.addf %54, %56 : vector<16x13xf32>
    %58 = vector.shape_cast %57 : vector<16x13xf32> to vector<2x8x13xf32>
    %c0_27 = arith.constant 0 : index
    %c0_28 = arith.constant 0 : index
    %c0_29 = arith.constant 0 : index
    %59 = vector.load %arg25[%c0_27, %c0_28, %c0_29] : memref<2x8x13xf32, #tpu.memory_space<vmem>>, vector<2x8x13xf32>
    tpu.vector_store %arg25[%c0_27, %c0_28, %c0_29], %58 {strides = array<i32>} : memref<2x8x13xf32, #tpu.memory_space<vmem>>, vector<2x8x13xf32>,
    return
  }
}

</mosaic_0001>

<llo_original>
// kernel: bert_gat_crf_ner_forward.3
$region0: #{bert_gat_crf_ner_forward.3}
  #allocation0 [shape = 'u32[]', space=smem, size = 0x4, offset = 0x4, fixed_abs, tag = 'smem constant byte address 0x4 - core index']
  #allocation1 [shape = 'u32[144,128]{1,0:T(1,128)}', space=vmem, size = 0x12000, scoped, tag = 'internal scratch']
  #allocation2 [shape = 'f32[13,1]{1,0:T(8,128)}', space=vmem, size = 0x2000, scoped, tag = 'scratch operand']
  #allocation3 [shape = 's32[8,13]{1,0:T(8,128)}', space=vmem, size = 0x1000, scoped, tag = 'scratch operand']
  #allocation4 [shape = 's32[1]{0}', space=sflag, size = 0x4, scoped, tag = 'scoped memory for bert_gat_crf_ner_forward.3']
  #allocation5 [shape = 'u8[512]{0}', space=smem, size = 0x200, scoped, tag = 'prefetched SMEM operand 0']
  %s0 = inlined_call_operand.vmem [shape: s32[2], index: 0, kind: input, shape index: {}]
  %s1 = inlined_call_operand.vmem [shape: f32[2,8,13], index: 1, kind: input, shape index: {}]
  %s2 = inlined_call_operand.vmem [shape: f32[13,13], index: 2, kind: input, shape index: {}]
  %s3 = inlined_call_operand.vmem [shape: f32[1,13], index: 3, kind: input, shape index: {}]
  %s4 = inlined_call_operand.vmem [shape: f32[13,1], index: 4, kind: input, shape index: {}]
  %s5 = inlined_call_operand.hbm [shape: s32[2,1,8], index: 5, kind: output, shape index: {}]
  %s6 = sld [smem:[#allocation0]]
  $region63: #{bert_gat_crf_ner_forward.3} parent=0
    _
  %s8 = ssub.s32 1, %s6
  %s9 = scalar_select 0, %s8, %s6
  %s10 = sshll.u32 %s0, 4
  %s11 = int_to_ptr.vmem [resolvable:$true] %s10
  %13 = dma.vmem_to_smem %s11, 16, [#allocation5], [#allocation4]
  %14 = dma.done [#allocation4], 16
  %15 = sfence
  $region1: #{bert_gat_crf_ner_forward.3} parent=0
    #allocation6 [shape = 'u8[1024]{0}', space=vmem, size = 0x400, scoped, tag = 'output window, operand 0']
    #allocation7 [shape = 's32[2]{0}', space=sflag, size = 0x8, scoped, tag = 'scoped memory for bert_gat_crf_ner_forward.3']
    %16 = vsyncpa [#allocation7], 0
    %s17 = scalar_lea.sflag [#allocation7], 1
    %18 = vsyncpa %s17, 0
    loop: start=0, step=1, limit=4
    $region2: #{bert_gat_crf_ner_forward.3} parent=1 // loop_pre_header
      _
    $region3: #{bert_gat_crf_ner_forward.3} parent=1 // loop_header
      %s20 = sphi 0, %s24
      %p21 = scmp.ge.s32.totalorder %s20, 4
      %s30 = sphi 0, %s32
      %s33 = sphi 0, %s30
      %s34 = sphi 0, %s33
      %s50 = sphi 0, %s34
      %s54 = sphi 0, %s54
      %s56 = sphi 0, %s54
      %s57 = sphi 0, %s56
      %s71 = sphi 0, %s57
      %s75 = sphi 0, %s75
      %s77 = sphi 0, %s75
      %s78 = sphi 0, %s77
      %s92 = sphi 0, %s78
      %s96 = sphi 0, %s96
      %s98 = sphi 0, %s96
      %s99 = sphi 0, %s98
      %s113 = sphi 0, %s99
      %s119 = sphi 0, %s121
      %s122 = sphi 0, %s119
      %s123 = sphi 0, %s122
      %s139 = sphi 0, %s123
    $region4: #{bert_gat_crf_ner_forward.3} parent=1 // loop_header_branch
      %23 = sbr.rel (%p21) target = $region8
    $region5: #{bert_gat_crf_ner_forward.3} parent=1 // loop_body
      %s25 = ssub.s32 %s20, 1
      %s26 = ssub.s32 %s20, 2
      %s27 = sadd.s32 %s20, 1
      %s28 = ssub.s32 %s20, %s27
      %p29 = scmp.eq.s32.totalorder %s28, 0
      %s31 = sadd.s32 %s30, 1
      %s32 = scalar_select %p29, %s30, %s31
      %p35 = pneg %p29
      %p36 = scmp.eq.s32.totalorder %s20, 1
      %p37 = por %p35, %p36
      %p38 = scmp.ne.s32.totalorder %s30, %s33
      %p39 = scmp.eq.s32.totalorder %s20, 0
      %p40 = por %p38, %p39
      %p41 = scmp.ne.s32.totalorder %s30, %s33
      %p42 = scmp.eq.s32.totalorder %s25, 1
      %p43 = por %p41, %p42
      %p44 = scmp.ne.s32.totalorder %s33, %s34
      %p45 = scmp.eq.s32.totalorder %s25, 0
      %p46 = por %p44, %p45
      %p47 = scmp.ne.s32.totalorder %s33, %s34
      %p48 = scmp.eq.s32.totalorder %s26, 1
      %p49 = por %p47, %p48
      %p51 = scmp.ne.s32.totalorder %s34, %s50
      %p52 = scmp.eq.s32.totalorder %s26, 0
      %p53 = por %p51, %p52
      %s55 = sadd.s32 %s54, 1
      %p58 = scmp.eq.s32.totalorder %s20, 1
      %p59 = scmp.ne.s32.totalorder %s54, %s56
      %p60 = scmp.eq.s32.totalorder %s20, 0
      %p61 = por %p59, %p60
      %p62 = scmp.ne.s32.totalorder %s54, %s56
      %p63 = scmp.eq.s32.totalorder %s25, 1
      %p64 = por %p62, %p63
      %p65 = scmp.ne.s32.totalorder %s56, %s57
      %p66 = scmp.eq.s32.totalorder %s25, 0
      %p67 = por %p65, %p66
      %p68 = scmp.ne.s32.totalorder %s56, %s57
      %p69 = scmp.eq.s32.totalorder %s26, 1
      %p70 = por %p68, %p69
      %p72 = scmp.ne.s32.totalorder %s57, %s71
      %p73 = scmp.eq.s32.totalorder %s26, 0
      %p74 = por %p72, %p73
      %s76 = sadd.s32 %s75, 1
      %p79 = scmp.eq.s32.totalorder %s20, 1
      %p80 = scmp.ne.s32.totalorder %s75, %s77
      %p81 = scmp.eq.s32.totalorder %s20, 0
      %p82 = por %p80, %p81
      %p83 = scmp.ne.s32.totalorder %s75, %s77
      %p84 = scmp.eq.s32.totalorder %s25, 1
      %p85 = por %p83, %p84
      %p86 = scmp.ne.s32.totalorder %s77, %s78
      %p87 = scmp.eq.s32.totalorder %s25, 0
      %p88 = por %p86, %p87
      %p89 = scmp.ne.s32.totalorder %s77, %s78
      %p90 = scmp.eq.s32.totalorder %s26, 1
      %p91 = por %p89, %p90
      %p93 = scmp.ne.s32.totalorder %s78, %s92
      %p94 = scmp.eq.s32.totalorder %s26, 0
      %p95 = por %p93, %p94
      %s97 = sadd.s32 %s96, 1
      %p100 = scmp.eq.s32.totalorder %s20, 1
      %p101 = scmp.ne.s32.totalorder %s96, %s98
      %p102 = scmp.eq.s32.totalorder %s20, 0
      %p103 = por %p101, %p102
      %p104 = scmp.ne.s32.totalorder %s96, %s98
      %p105 = scmp.eq.s32.totalorder %s25, 1
      %p106 = por %p104, %p105
      %p107 = scmp.ne.s32.totalorder %s98, %s99
      %p108 = scmp.eq.s32.totalorder %s25, 0
      %p109 = por %p107, %p108
      %p110 = scmp.ne.s32.totalorder %s98, %s99
      %p111 = scmp.eq.s32.totalorder %s26, 1
      %p112 = por %p110, %p111
      %p114 = scmp.ne.s32.totalorder %s99, %s113
      %p115 = scmp.eq.s32.totalorder %s26, 0
      %p116 = por %p114, %p115
      %s117 = ssub.s32 %s20, %s27
      %p118 = scmp.eq.s32.totalorder %s117, 0
      %s120 = sadd.s32 %s119, 1
      %s121 = scalar_select %p118, %s119, %s120
      %p124 = pneg %p118
      %p125 = scmp.eq.s32.totalorder %s20, 1
      %p126 = por %p124, %p125
      %p127 = scmp.ne.s32.totalorder %s119, %s122
      %p128 = scmp.eq.s32.totalorder %s20, 0
      %p129 = por %p127, %p128
      %p130 = scmp.ne.s32.totalorder %s119, %s122
      %p131 = scmp.eq.s32.totalorder %s25, 1
      %p132 = por %p130, %p131
      %p133 = scmp.ne.s32.totalorder %s122, %s123
      %p134 = scmp.eq.s32.totalorder %s25, 0
      %p135 = por %p133, %p134
      %p136 = scmp.ne.s32.totalorder %s122, %s123
      %p137 = scmp.eq.s32.totalorder %s26, 1
      %p138 = por %p136, %p137
      %p140 = scmp.ne.s32.totalorder %s123, %s139
      %p141 = scmp.eq.s32.totalorder %s26, 0
      %p142 = por %p140, %p141
      %p143 = scmp.le.s32.totalorder 1, %s20
      %p144 = scmp.lt.s32.totalorder %s20, 3
      %p145 = pnand %p143, %p144
      %p146 = pneg %p145
      // Predicated region
      $region9: #{bert_gat_crf_ner_forward.3} parent=5 // pred_check
        _
      $region10: #{bert_gat_crf_ner_forward.3} parent=5 // pred_check_branch
        %148 = sbr.rel (%p145) target = $region12
      $region11: #{bert_gat_crf_ner_forward.3} parent=5 // pred_region
        %s149 = ssub.s32 %s20, 1
        // Predicated region
        $region13: #{bert_gat_crf_ner_forward.3} parent=11 // pred_check
          %p150 = pneg %p67
        $region14: #{bert_gat_crf_ner_forward.3} parent=11 // pred_check_branch
          %152 = sbr.rel (%p150) target = $region16
        $region15: #{bert_gat_crf_ner_forward.3} parent=11 // pred_region
          _
        $region16: #{bert_gat_crf_ner_forward.3} parent=11 // pred_fallthru
          _
        // Predicated region
        $region17: #{bert_gat_crf_ner_forward.3} parent=11 // pred_check
          %p153 = pneg %p88
        $region18: #{bert_gat_crf_ner_forward.3} parent=11 // pred_check_branch
          %155 = sbr.rel (%p153) target = $region20
        $region19: #{bert_gat_crf_ner_forward.3} parent=11 // pred_region
          _
        $region20: #{bert_gat_crf_ner_forward.3} parent=11 // pred_fallthru
          _
        // Predicated region
        $region21: #{bert_gat_crf_ner_forward.3} parent=11 // pred_check
          %p156 = pneg %p109
        $region22: #{bert_gat_crf_ner_forward.3} parent=11 // pred_check_branch
          %158 = sbr.rel (%p156) target = $region24
        $region23: #{bert_gat_crf_ner_forward.3} parent=11 // pred_region
          _
        $region24: #{bert_gat_crf_ner_forward.3} parent=11 // pred_fallthru
          _
      $region12: #{bert_gat_crf_ner_forward.3} parent=5 // pred_fallthru
        _
      %p159 = scmp.lt.s32.totalorder %s20, 2
      // Predicated region
      $region25: #{bert_gat_crf_ner_forward.3} parent=5 // pred_check
        %p160 = pneg %p159
      $region26: #{bert_gat_crf_ner_forward.3} parent=5 // pred_check_branch
        %162 = sbr.rel (%p160) target = $region28
      $region27: #{bert_gat_crf_ner_forward.3} parent=5 // pred_region
        // Predicated region
        $region29: #{bert_gat_crf_ner_forward.3} parent=27 // pred_check
          %p163 = pneg %p40
        $region30: #{bert_gat_crf_ner_forward.3} parent=27 // pred_check_branch
          %165 = sbr.rel (%p163) target = $region32
        $region31: #{bert_gat_crf_ner_forward.3} parent=27 // pred_region
          %p166 = scmp.lt.s32.totalorder %s20, 1
          %s167 = scalar_select %p166, %s20, 1
          %s168 = smul.addr %s167, 8
          %s169 = scalar_lea.vmem %s1, %s168
        $region32: #{bert_gat_crf_ner_forward.3} parent=27 // pred_fallthru
          _
      $region28: #{bert_gat_crf_ner_forward.3} parent=5 // pred_fallthru
        _
      %p170 = scmp.le.s32.totalorder 1, %s20
      %p171 = scmp.lt.s32.totalorder %s20, 3
      %p172 = pnand %p170, %p171
      %p173 = pneg %p172
      // Predicated region
      $region33: #{bert_gat_crf_ner_forward.3} parent=5 // pred_check
        _
      $region34: #{bert_gat_crf_ner_forward.3} parent=5 // pred_check_branch
        %175 = sbr.rel (%p172) target = $region36
      $region35: #{bert_gat_crf_ner_forward.3} parent=5 // pred_region
        %s176 = ssub.s32 %s20, 1
        %p177 = scmp.lt.s32.totalorder %s25, 1
        %s178 = scalar_select %p177, %s25, 1
        %s179 = smul.addr %s178, 8
        %s180 = scalar_lea.vmem %s1, %s179
        %p181 = pneg %p46
        %p182 = pneg %p43
        %p183 = pneg %p67
        %p184 = pneg %p64
        %p185 = pneg %p88
        %p186 = pneg %p85
        %p187 = pneg %p109
        %p188 = pneg %p106
        %p189 = pneg %p135
        %p190 = pneg %p132
        %s191 = sand.u32 %s122, 1
        %s192 = scalar_lea.sflag [#allocation7], %s191
        %s193 = sand.u32 %s122, 1
        %s194 = scalar_lea.vmem [#allocation6], %s193
        %p195 = scmp.lt.s32.totalorder %s25, 1
        %s196 = scalar_select %p195, %s25, 1
        %s197 = smul.addr %s196, 8
        %s198 = scalar_lea.vmem %s1, %s197
        %s199 = sld [smem:[#allocation5 + %s25]]
        %s200 = ssub.s32 %s199, 1
        %v201 = vld [vmem:[%s2] sm:$0xff]
        %v202 = vld [vmem:[%s2 + $0x8] sm:$0x1f]
        %v203 = vlaneseq
        %v204 = vshrl.u32 %v203, 7
        %v205 = vadd.s32 %v204, 8
        %v206 = vlaneseq
        %v207 = vand.u32 %v206, 127
        %vm208 = vcmp.eq.s32.totalorder %v204, %v207
        %vm209 = vcmp.eq.s32.totalorder %v205, %v207
        %v210 = vld [vmem:[%s3] sm:$0x1]
        %v211 = vld [vmem:[%s198] sm:$0x1]
        %v212 = vadd.f32 %v210, %v211
        %v214 = vlaneseq
        %v215 = vshrl.u32 %v214, 7
        %v216 = vsub.s32 0, %v215
        %v217 = vrot.slane %v212, %v216
        %v219 = vsel %vm208, %v217, 0.0
        %v220 = vsel %vm209, %v217, 0.0
        %vm221 = vcmask 105472
        %v222 = vsel %vm221, %v219, 0.0
        %223 = vadd.xlane.f32.xlu0 %v222
        %v224 = vpop.xlane.xlu0 %223
        %vm225 = vcmask 102400
        %v226 = vsel %vm225, %v220, 0.0
        %227 = vadd.xlane.f32.xlu0 %v226
        %v228 = vpop.xlane.xlu0 %227
        %vm229 = vcmask 7168
        %230 = vst.msk [vmem:[#allocation2] sm:$0xff] %vm229, %v224
        %vm231 = vcmask 4096
        %232 = vst.msk [vmem:[#allocation2 + $0x8] sm:$0x1f] %vm231, %v228
        loop: start=1, step=1, limit=8
        $region37: #{bert_gat_crf_ner_forward.3} parent=35 // loop_pre_header
          _
        $region38: #{bert_gat_crf_ner_forward.3} parent=35 // loop_header
          %s234 = sphi 1, %s238
          %p235 = scmp.ge.s32.totalorder %s234, 8
        $region39: #{bert_gat_crf_ner_forward.3} parent=35 // loop_header_branch
          %237 = sbr.rel (%p235) target = $region43
        $region40: #{bert_gat_crf_ner_forward.3} parent=35 // loop_body
          %v239 = vld [vmem:[#allocation2] sm:$0xff]
          %v240 = vld [vmem:[#allocation2 + $0x8] sm:$0x1f]
          %242 = vset.pattern.permute.xlu0 0
          %243 = vperm.xlu0 %242, %v239
          %v244 = vpop.permute.xlu0 %243
          %247 = vset.pattern.permute.xlu0 0
          %248 = vperm.xlu0 %247, %v240
          %v249 = vpop.permute.xlu0 %248
          %v251 = vadd.f32 %v244, %v201
          %v252 = vadd.f32 %v249, %v202
          %v253 = vsel %vm221, %v251, -inf
          %v254 = vsel %vm225, %v252, -inf
          %v255 = vmax.f32 %v253, %v254
          %v256 = vrot.slane %v255, 4
          %v257 = vmax.f32 %v255, %v256
          %v258 = vrot.slane %v257, 2
          %v259 = vmax.f32 %v257, %v258
          %v260 = vrot.slane %v259, 1
          %v261 = vmax.f32 %v259, %v260
          %vm262 = vcmp.eq.f32.partialorder %v251, %v261
          %vm263 = vcmp.eq.f32.partialorder %v252, %v261
          %v264 = vsel %vm262, %v204, 13
          %v265 = vsel %vm263, %v205, 13
          %v266 = vsel %vm221, %v264, 2147483647
          %v267 = vsel %vm225, %v265, 2147483647
          %vm268 = vcmp.lt.s32.totalorder %v266, %v267
          %v269 = vsel %vm268, %v266, %v267
          %v270 = vrot.slane %v269, 4
          %vm271 = vcmp.lt.s32.totalorder %v269, %v270
          %v272 = vsel %vm271, %v269, %v270
          %v273 = vrot.slane %v272, 2
          %vm274 = vcmp.lt.s32.totalorder %v272, %v273
          %v275 = vsel %vm274, %v272, %v273
          %v276 = vrot.slane %v275, 1
          %vm277 = vcmp.lt.s32.totalorder %v275, %v276
          %v278 = vsel %vm277, %v275, %v276
          %s279 = scalar_lea.vmem %s198, %s234
          %v280 = vld [vmem:[%s279] sm:$0x1]
          %v281 = vadd.f32 %v261, %v280
          %v282 = vlaneseq
          %v283 = vshrl.u32 %v282, 7
          %v284 = vsub.s32 0, %v283
          %v285 = vrot.slane %v281, %v284
          %v286 = vsel %vm208, %v285, 0.0
          %v287 = vsel %vm209, %v285, 0.0
          %v288 = vsel %vm221, %v286, 0.0
          %289 = vadd.xlane.f32.xlu0 %v288
          %v290 = vpop.xlane.xlu0 %289
          %v291 = vsel %vm225, %v287, 0.0
          %292 = vadd.xlane.f32.xlu0 %v291
          %v293 = vpop.xlane.xlu0 %292
          %p294 = scmp.lt.s32.totalorder %s234, %s199
          %s295 = scalar_select %p294, 1, 0
          %v296 = vstv %s295
          %vm297 = vcmp.eq.s32.totalorder %v296, 1
          %v298 = vsel %vm297, %v290, %v239
          %v299 = vsel %vm297, %v293, %v240
          %300 = vst.msk [vmem:[#allocation2] sm:$0xff] %vm229, %v298
          %301 = vst.msk [vmem:[#allocation2 + $0x8] sm:$0x1f] %vm231, %v299
          %s302 = scalar_lea.vmem [#allocation3], %s234
          %vm303 = vcmask 98304
          %304 = vst.msk [vmem:[%s302] sm:$0x1] %vm303, %v278
        $region41: #{bert_gat_crf_ner_forward.3} parent=35 // loop_footer
          %s238 = sadd.s32 1, %s234
        $region42: #{bert_gat_crf_ner_forward.3} parent=35 // loop_footer_branch
          %233 = sbr.rel target = $region38
        $region43: #{bert_gat_crf_ner_forward.3} parent=35 // loop_exit
          _
        %v305 = vld [vmem:[#allocation2] sm:$0xff]
        %v306 = vld [vmem:[#allocation2 + $0x8] sm:$0x1f]
        %v307 = vld [vmem:[%s4] sm:$0xff]
        %v308 = vld [vmem:[%s4 + $0x8] sm:$0x1f]
        %v309 = vadd.f32 %v305, %v307
        %v310 = vadd.f32 %v306, %v308
        %v311 = vsel %vm229, %v309, -inf
        %v312 = vsel %vm231, %v310, -inf
        %v313 = vmax.f32 %v311, %v312
        %314 = vmax.xlane.f32.xlu0 %v313
        %v315 = vpop.xlane.xlu0 %314
        %v316 = vrot.slane %v315, 4
        %v317 = vmax.f32 %v315, %v316
        %v318 = vrot.slane %v317, 2
        %v319 = vmax.f32 %v317, %v318
        %v320 = vrot.slane %v319, 1
        %v321 = vmax.f32 %v319, %v320
        %s322 = vtos %v321
        %v323 = vstv %s322
        %vm324 = vcmp.eq.f32.partialorder %v309, %v323
        %vm325 = vcmp.eq.f32.partialorder %v310, %v323
        %v326 = vsel %vm324, %v204, 13
        %v327 = vsel %vm325, %v205, 13
        %v328 = vsel %vm229, %v326, 2147483647
        %v329 = vsel %vm231, %v327, 2147483647
        %vm330 = vcmp.lt.s32.totalorder %v328, %v329
        %v331 = vsel %vm330, %v328, %v329
        %v332 = vand.u32 %v331, 65535
        %v333 = vshra.s32 %v331, 16
        %v334 = vcvt.s32.f32 %v332
        %v335 = vcvt.s32.f32 %v333
        %336 = vmin.xlane.f32.xlu0 %v335
        %v337 = vpop.xlane.xlu0 %336
        %vm338 = vcmp.eq.f32.partialorder %v335, %v337
        %v339 = vsel %vm338, %v334, inf
        %340 = vmin.xlane.f32.xlu0 %v339
        %v341 = vpop.xlane.xlu0 %340
        %v342 = vcvt.f32.s32 %v341
        %v343 = vcvt.f32.s32 %v337
        %v344 = vshll.u32 %v343, 16
        %v345 = vadd.s32 %v344, %v342
        %v346 = vrot.slane %v345, 4
        %vm347 = vcmp.lt.s32.totalorder %v345, %v346
        %v348 = vsel %vm347, %v345, %v346
        %v349 = vrot.slane %v348, 2
        %vm350 = vcmp.lt.s32.totalorder %v348, %v349
        %v351 = vsel %vm350, %v348, %v349
        %v352 = vrot.slane %v351, 1
        %vm353 = vcmp.lt.s32.totalorder %v351, %v352
        %v354 = vsel %vm353, %v351, %v352
        %s355 = vtos %v354
        %v356 = vstv %s200
        %vm357 = vcmp.eq.s32.totalorder %v207, %v356
        %v358 = vstv %s355
        %v359 = vsel %vm357, %v358, 0
        loop: start=0, step=1, limit=7
        $region44: #{bert_gat_crf_ner_forward.3} parent=35 // loop_pre_header
          _
        $region45: #{bert_gat_crf_ner_forward.3} parent=35 // loop_header
          %s361 = sphi 0, %s365
          %p362 = scmp.ge.s32.totalorder %s361, 7
          %v366 = vphi %v359, %v421
        $region46: #{bert_gat_crf_ner_forward.3} parent=35 // loop_header_branch
          %364 = sbr.rel (%p362) target = $region50
        $region47: #{bert_gat_crf_ner_forward.3} parent=35 // loop_body
          %s367 = ssub.s32 6, %s361
          %s368 = ssub.s32 7, %s361
          %v369 = vstv %s368
          %vm370 = vcmp.eq.s32.totalorder %v207, %v369
          %v371 = vsel %vm370, %v366, 0
          %vm372 = vcmask 64512
          %v373 = vsel %vm372, %v371, 0
          %v374 = vand.u32 %v373, 65535
          %v375 = vshrl.u32 %v373, 16
          %v376 = vcvt.s32.f32 %v374
          %v377 = vcvt.s32.f32 %v375
          %378 = vadd.xlane.f32.xlu0 %v376
          %v379 = vpop.xlane.xlu0 %378
          %380 = vadd.xlane.f32.xlu0 %v377
          %v381 = vpop.xlane.xlu0 %380
          %v382 = vcvt.f32.s32 %v379
          %v383 = vcvt.f32.s32 %v381
          %v384 = vshll.u32 %v383, 16
          %v385 = vadd.s32 %v384, %v382
          %s386 = vtos %v385
          %s387 = scalar_lea.vmem [#allocation3], %s368
          %v388 = vld [vmem:[%s387] sm:$0x1]
          %v389 = vstv %s386
          %vm390 = vcmp.eq.s32.totalorder %v207, %v389
          %v391 = vsel %vm390, %v388, 0
          %vm392 = vcmask 98304
          %v393 = vsel %vm392, %v391, 0
          %v394 = vand.u32 %v393, 65535
          %v395 = vshrl.u32 %v393, 16
          %v396 = vcvt.s32.f32 %v394
          %v397 = vcvt.s32.f32 %v395
          %398 = vadd.xlane.f32.xlu0 %v396
          %v399 = vpop.xlane.xlu0 %398
          %400 = vadd.xlane.f32.xlu0 %v397
          %v401 = vpop.xlane.xlu0 %400
          %v402 = vcvt.f32.s32 %v399
          %v403 = vcvt.f32.s32 %v401
          %v404 = vshll.u32 %v403, 16
          %v405 = vadd.s32 %v404, %v402
          %v406 = vrot.slane %v405, 4
          %v407 = vadd.s32 %v405, %v406
          %v408 = vrot.slane %v407, 2
          %v409 = vadd.s32 %v407, %v408
          %v410 = vrot.slane %v409, 1
          %v411 = vadd.s32 %v409, %v410
          %s412 = vtos %v411
          %v413 = vstv %s367
          %vm414 = vcmp.eq.s32.totalorder %v207, %v413
          %p415 = scmp.lt.s32.totalorder %s367, %s200
          %s416 = scalar_select %p415, 1, 0
          %v417 = vstv %s416
          %vm418 = vcmp.eq.s32.totalorder %v417, 1
          %vm419 = vmand %vm414, %vm418
          %v420 = vstv %s412
          %v421 = vsel %vm419, %v420, %v366
        $region48: #{bert_gat_crf_ner_forward.3} parent=35 // loop_footer
          %s365 = sadd.s32 1, %s361
        $region49: #{bert_gat_crf_ner_forward.3} parent=35 // loop_footer_branch
          %360 = sbr.rel target = $region45
        $region50: #{bert_gat_crf_ner_forward.3} parent=35 // loop_exit
          _
        %vm422 = vcmask 57344
        %423 = vst.msk [vmem:[%s194] sm:$0x1] %vm422, %v366
        %s424 = sand.u32 %s122, 1
        %s425 = scalar_lea.sflag [#allocation7], %s424
        %s426 = sand.u32 %s122, 1
        %s427 = scalar_lea.vmem [#allocation6], %s426
        // Predicated region
        $region51: #{bert_gat_crf_ner_forward.3} parent=35 // pred_check
          %p428 = pneg %p132
        $region52: #{bert_gat_crf_ner_forward.3} parent=35 // pred_check_branch
          %430 = sbr.rel (%p428) target = $region54
        $region53: #{bert_gat_crf_ner_forward.3} parent=35 // pred_region
          %s432 = ssub.s32 16, 16
          %433 = vsyncadd %s425, %s432
          %s434 = smul.addr %s25, 16
          %s435 = scalar_lea.hbm %s5, %s434
          %s437 = sshll.u32 %s427, 4
          %s438 = int_to_ptr.vmem [resolvable:$true] %s437
          %440 = dma.vmem_to_hbm [thread:$0]  %s438, 16, %s435, %s425
        $region54: #{bert_gat_crf_ner_forward.3} parent=35 // pred_fallthru
          _
      $region36: #{bert_gat_crf_ner_forward.3} parent=5 // pred_fallthru
        _
      %p441 = scmp.le.s32.totalorder 2, %s20
      // Predicated region
      $region55: #{bert_gat_crf_ner_forward.3} parent=5 // pred_check
        %p442 = pneg %p441
      $region56: #{bert_gat_crf_ner_forward.3} parent=5 // pred_check_branch
        %444 = sbr.rel (%p442) target = $region58
      $region57: #{bert_gat_crf_ner_forward.3} parent=5 // pred_region
        %s445 = ssub.s32 %s20, 2
        // Predicated region
        $region59: #{bert_gat_crf_ner_forward.3} parent=57 // pred_check
          %p446 = pneg %p138
        $region60: #{bert_gat_crf_ner_forward.3} parent=57 // pred_check_branch
          %448 = sbr.rel (%p446) target = $region62
        $region61: #{bert_gat_crf_ner_forward.3} parent=57 // pred_region
          %s449 = sand.u32 %s123, 1
          %s450 = scalar_lea.sflag [#allocation7], %s449
          %s451 = sand.u32 %s123, 1
          %s452 = scalar_lea.vmem [#allocation6], %s451
          %453 = dma.done %s450, 16
        $region62: #{bert_gat_crf_ner_forward.3} parent=57 // pred_fallthru
          _
      $region58: #{bert_gat_crf_ner_forward.3} parent=5 // pred_fallthru
        _
    $region6: #{bert_gat_crf_ner_forward.3} parent=1 // loop_footer
      %s24 = sadd.s32 1, %s20
    $region7: #{bert_gat_crf_ner_forward.3} parent=1 // loop_footer_branch
      %19 = sbr.rel target = $region3
    $region8: #{bert_gat_crf_ner_forward.3} parent=1 // loop_exit
      _
    %454 = vsyncpa [#allocation7], 1
    %s455 = scalar_lea.sflag [#allocation7], 1
    %456 = vsyncpa %s455, 1

// kernel: bert_gat_crf_ner_forward.2
$region0: #{bert_gat_crf_ner_forward.2}
  #allocation0 [shape = 'u32[]', space=smem, size = 0x4, offset = 0x4, fixed_abs, tag = 'smem constant byte address 0x4 - core index']
  #allocation1 [shape = 'u32[144,128]{1,0:T(1,128)}', space=vmem, size = 0x12000, scoped, tag = 'internal scratch']
  %s0 = inlined_call_operand.vmem [shape: s32[16,1], index: 0, kind: input, shape index: {}]
  %s1 = inlined_call_operand.vmem [shape: f32[2,1,8], index: 1, kind: input, shape index: {}]
  %s2 = inlined_call_operand.vmem [shape: bf16[128,32], index: 2, kind: input, shape index: {}]
  %s3 = inlined_call_operand.vmem [shape: f32[16,32], index: 3, kind: input, shape index: {}]
  %s4 = inlined_call_operand.vmem [shape: f32[2,32], index: 4, kind: input, shape index: {}]
  %s5 = inlined_call_operand.vmem [shape: f32[1,32], index: 5, kind: input, shape index: {}]
  %s6 = inlined_call_operand.vmem [shape: f32[1,32], index: 6, kind: input, shape index: {}]
  %s7 = inlined_call_operand.vmem [shape: bf16[2,32,32], index: 7, kind: input, shape index: {}]
  %s8 = inlined_call_operand.vmem [shape: f32[2,1,32], index: 8, kind: input, shape index: {}]
  %s9 = inlined_call_operand.vmem [shape: bf16[2,32,32], index: 9, kind: input, shape index: {}]
  %s10 = inlined_call_operand.vmem [shape: f32[2,1,32], index: 10, kind: input, shape index: {}]
  %s11 = inlined_call_operand.vmem [shape: bf16[2,32,32], index: 11, kind: input, shape index: {}]
  %s12 = inlined_call_operand.vmem [shape: f32[2,1,32], index: 12, kind: input, shape index: {}]
  %s13 = inlined_call_operand.vmem [shape: bf16[2,32,32], index: 13, kind: input, shape index: {}]
  %s14 = inlined_call_operand.vmem [shape: f32[2,1,32], index: 14, kind: input, shape index: {}]
  %s15 = inlined_call_operand.vmem [shape: f32[2,1,32], index: 15, kind: input, shape index: {}]
  %s16 = inlined_call_operand.vmem [shape: f32[2,1,32], index: 16, kind: input, shape index: {}]
  %s17 = inlined_call_operand.vmem [shape: bf16[2,32,64], index: 17, kind: input, shape index: {}]
  %s18 = inlined_call_operand.vmem [shape: f32[2,1,64], index: 18, kind: input, shape index: {}]
  %s19 = inlined_call_operand.vmem [shape: bf16[2,64,32], index: 19, kind: input, shape index: {}]
  %s20 = inlined_call_operand.vmem [shape: f32[2,1,32], index: 20, kind: input, shape index: {}]
  %s21 = inlined_call_operand.vmem [shape: f32[2,1,32], index: 21, kind: input, shape index: {}]
  %s22 = inlined_call_operand.hbm [shape: f32[2,1,32], index: 22, kind: input, shape index: {}]
  %s23 = inlined_call_operand.vmem [shape: bf16[32,13], index: 23, kind: input, shape index: {}]
  %s24 = inlined_call_operand.hbm [shape: f32[1,13], index: 24, kind: input, shape index: {}]
  %s25 = inlined_call_operand.vmem [shape: f32[2,8,13], index: 25, kind: output, shape index: {}]
  %s26 = sld [smem:[#allocation0]]
  $region125: #{bert_gat_crf_ner_forward.2} parent=0
    _
  %s28 = ssub.s32 1, %s26
  %s29 = scalar_select 0, %s28, %s26
  $region1: #{bert_gat_crf_ner_forward.2} parent=0
    #allocation2 [shape = 'u8[1024]{0}', space=vmem, size = 0x400, scoped, tag = 'input window, operand 22, single buffered']
    #allocation3 [shape = 's32[1]{0}', space=sflag, size = 0x4, scoped, tag = 'scoped memory for bert_gat_crf_ner_forward.2']
    #allocation4 [shape = 'u8[512]{0}', space=vmem, size = 0x400, scoped, tag = 'input window, operand 24, single buffered']
    #allocation5 [shape = 's32[1]{0}', space=sflag, size = 0x4, scoped, tag = 'scoped memory for bert_gat_crf_ner_forward.2']
    %30 = vsyncpa [#allocation3], 0
    %31 = vsyncpa [#allocation5], 0
    // Predicated region
    $region2: #{bert_gat_crf_ner_forward.2} parent=1 // pred_check
      _
    $region3: #{bert_gat_crf_ner_forward.2} parent=1 // pred_check_branch
      %33 = sbr.rel (0) target = $region5
    $region4: #{bert_gat_crf_ner_forward.2} parent=1 // pred_region
      _
    $region5: #{bert_gat_crf_ner_forward.2} parent=1 // pred_fallthru
      _
    // Predicated region
    $region6: #{bert_gat_crf_ner_forward.2} parent=1 // pred_check
      _
    $region7: #{bert_gat_crf_ner_forward.2} parent=1 // pred_check_branch
      %35 = sbr.rel (0) target = $region9
    $region8: #{bert_gat_crf_ner_forward.2} parent=1 // pred_region
      _
    $region9: #{bert_gat_crf_ner_forward.2} parent=1 // pred_fallthru
      _
    // Predicated region
    $region10: #{bert_gat_crf_ner_forward.2} parent=1 // pred_check
      _
    $region11: #{bert_gat_crf_ner_forward.2} parent=1 // pred_check_branch
      %37 = sbr.rel (0) target = $region13
    $region12: #{bert_gat_crf_ner_forward.2} parent=1 // pred_region
      _
    $region13: #{bert_gat_crf_ner_forward.2} parent=1 // pred_fallthru
      _
    // Predicated region
    $region14: #{bert_gat_crf_ner_forward.2} parent=1 // pred_check
      _
    $region15: #{bert_gat_crf_ner_forward.2} parent=1 // pred_check_branch
      %39 = sbr.rel (0) target = $region17
    $region16: #{bert_gat_crf_ner_forward.2} parent=1 // pred_region
      _
    $region17: #{bert_gat_crf_ner_forward.2} parent=1 // pred_fallthru
      _
    // Predicated region
    $region18: #{bert_gat_crf_ner_forward.2} parent=1 // pred_check
      _
    $region19: #{bert_gat_crf_ner_forward.2} parent=1 // pred_check_branch
      %41 = sbr.rel (0) target = $region21
    $region20: #{bert_gat_crf_ner_forward.2} parent=1 // pred_region
      _
    $region21: #{bert_gat_crf_ner_forward.2} parent=1 // pred_fallthru
      _
    // Predicated region
    $region22: #{bert_gat_crf_ner_forward.2} parent=1 // pred_check
      _
    $region23: #{bert_gat_crf_ner_forward.2} parent=1 // pred_check_branch
      %43 = sbr.rel (0) target = $region25
    $region24: #{bert_gat_crf_ner_forward.2} parent=1 // pred_region
      _
    $region25: #{bert_gat_crf_ner_forward.2} parent=1 // pred_fallthru
      _
    // Predicated region
    $region26: #{bert_gat_crf_ner_forward.2} parent=1 // pred_check
      _
    $region27: #{bert_gat_crf_ner_forward.2} parent=1 // pred_check_branch
      %45 = sbr.rel (0) target = $region29
    $region28: #{bert_gat_crf_ner_forward.2} parent=1 // pred_region
      _
    $region29: #{bert_gat_crf_ner_forward.2} parent=1 // pred_fallthru
      _
    // Predicated region
    $region30: #{bert_gat_crf_ner_forward.2} parent=1 // pred_check
      _
    $region31: #{bert_gat_crf_ner_forward.2} parent=1 // pred_check_branch
      %47 = sbr.rel (0) target = $region33
    $region32: #{bert_gat_crf_ner_forward.2} parent=1 // pred_region
      _
    $region33: #{bert_gat_crf_ner_forward.2} parent=1 // pred_fallthru
      _
    // Predicated region
    $region34: #{bert_gat_crf_ner_forward.2} parent=1 // pred_check
      _
    $region35: #{bert_gat_crf_ner_forward.2} parent=1 // pred_check_branch
      %49 = sbr.rel (0) target = $region37
    $region36: #{bert_gat_crf_ner_forward.2} parent=1 // pred_region
      _
    $region37: #{bert_gat_crf_ner_forward.2} parent=1 // pred_fallthru
      _
    // Predicated region
    $region38: #{bert_gat_crf_ner_forward.2} parent=1 // pred_check
      _
    $region39: #{bert_gat_crf_ner_forward.2} parent=1 // pred_check_branch
      %51 = sbr.rel (0) target = $region41
    $region40: #{bert_gat_crf_ner_forward.2} parent=1 // pred_region
      _
    $region41: #{bert_gat_crf_ner_forward.2} parent=1 // pred_fallthru
      _
    // Predicated region
    $region42: #{bert_gat_crf_ner_forward.2} parent=1 // pred_check
      _
    $region43: #{bert_gat_crf_ner_forward.2} parent=1 // pred_check_branch
      %53 = sbr.rel (0) target = $region45
    $region44: #{bert_gat_crf_ner_forward.2} parent=1 // pred_region
      _
    $region45: #{bert_gat_crf_ner_forward.2} parent=1 // pred_fallthru
      _
    // Predicated region
    $region46: #{bert_gat_crf_ner_forward.2} parent=1 // pred_check
      _
    $region47: #{bert_gat_crf_ner_forward.2} parent=1 // pred_check_branch
      %55 = sbr.rel (0) target = $region49
    $region48: #{bert_gat_crf_ner_forward.2} parent=1 // pred_region
      _
    $region49: #{bert_gat_crf_ner_forward.2} parent=1 // pred_fallthru
      _
    // Predicated region
    $region50: #{bert_gat_crf_ner_forward.2} parent=1 // pred_check
      _
    $region51: #{bert_gat_crf_ner_forward.2} parent=1 // pred_check_branch
      %57 = sbr.rel (0) target = $region53
    $region52: #{bert_gat_crf_ner_forward.2} parent=1 // pred_region
      _
    $region53: #{bert_gat_crf_ner_forward.2} parent=1 // pred_fallthru
      _
    // Predicated region
    $region54: #{bert_gat_crf_ner_forward.2} parent=1 // pred_check
      _
    $region55: #{bert_gat_crf_ner_forward.2} parent=1 // pred_check_branch
      %59 = sbr.rel (0) target = $region57
    $region56: #{bert_gat_crf_ner_forward.2} parent=1 // pred_region
      _
    $region57: #{bert_gat_crf_ner_forward.2} parent=1 // pred_fallthru
      _
    // Predicated region
    $region58: #{bert_gat_crf_ner_forward.2} parent=1 // pred_check
      _
    $region59: #{bert_gat_crf_ner_forward.2} parent=1 // pred_check_branch
      %61 = sbr.rel (0) target = $region61
    $region60: #{bert_gat_crf_ner_forward.2} parent=1 // pred_region
      _
    $region61: #{bert_gat_crf_ner_forward.2} parent=1 // pred_fallthru
      _
    // Predicated region
    $region62: #{bert_gat_crf_ner_forward.2} parent=1 // pred_check
      _
    $region63: #{bert_gat_crf_ner_forward.2} parent=1 // pred_check_branch
      %63 = sbr.rel (0) target = $region65
    $region64: #{bert_gat_crf_ner_forward.2} parent=1 // pred_region
      _
    $region65: #{bert_gat_crf_ner_forward.2} parent=1 // pred_fallthru
      _
    // Predicated region
    $region66: #{bert_gat_crf_ner_forward.2} parent=1 // pred_check
      _
    $region67: #{bert_gat_crf_ner_forward.2} parent=1 // pred_check_branch
      %65 = sbr.rel (0) target = $region69
    $region68: #{bert_gat_crf_ner_forward.2} parent=1 // pred_region
      _
    $region69: #{bert_gat_crf_ner_forward.2} parent=1 // pred_fallthru
      _
    // Predicated region
    $region70: #{bert_gat_crf_ner_forward.2} parent=1 // pred_check
      _
    $region71: #{bert_gat_crf_ner_forward.2} parent=1 // pred_check_branch
      %67 = sbr.rel (0) target = $region73
    $region72: #{bert_gat_crf_ner_forward.2} parent=1 // pred_region
      _
    $region73: #{bert_gat_crf_ner_forward.2} parent=1 // pred_fallthru
      _
    // Predicated region
    $region74: #{bert_gat_crf_ner_forward.2} parent=1 // pred_check
      _
    $region75: #{bert_gat_crf_ner_forward.2} parent=1 // pred_check_branch
      %69 = sbr.rel (0) target = $region77
    $region76: #{bert_gat_crf_ner_forward.2} parent=1 // pred_region
      _
    $region77: #{bert_gat_crf_ner_forward.2} parent=1 // pred_fallthru
      _
    // Predicated region
    $region78: #{bert_gat_crf_ner_forward.2} parent=1 // pred_check
      _
    $region79: #{bert_gat_crf_ner_forward.2} parent=1 // pred_check_branch
      %71 = sbr.rel (0) target = $region81
    $region80: #{bert_gat_crf_ner_forward.2} parent=1 // pred_region
      _
    $region81: #{bert_gat_crf_ner_forward.2} parent=1 // pred_fallthru
      _
    // Predicated region
    $region82: #{bert_gat_crf_ner_forward.2} parent=1 // pred_check
      _
    $region83: #{bert_gat_crf_ner_forward.2} parent=1 // pred_check_branch
      %73 = sbr.rel (0) target = $region85
    $region84: #{bert_gat_crf_ner_forward.2} parent=1 // pred_region
      _
    $region85: #{bert_gat_crf_ner_forward.2} parent=1 // pred_fallthru
      _
    // Predicated region
    $region86: #{bert_gat_crf_ner_forward.2} parent=1 // pred_check
      _
    $region87: #{bert_gat_crf_ner_forward.2} parent=1 // pred_check_branch
      %75 = sbr.rel (0) target = $region89
    $region88: #{bert_gat_crf_ner_forward.2} parent=1 // pred_region
      _
    $region89: #{bert_gat_crf_ner_forward.2} parent=1 // pred_fallthru
      _
    // Predicated region
    $region90: #{bert_gat_crf_ner_forward.2} parent=1 // pred_check
      _
    $region91: #{bert_gat_crf_ner_forward.2} parent=1 // pred_check_branch
      %77 = sbr.rel (0) target = $region93
    $region92: #{bert_gat_crf_ner_forward.2} parent=1 // pred_region
      %s79 = ssub.s32 32, 32
      %80 = vsyncadd [#allocation3], %s79
      %s81 = sshll.u32 [#allocation2], 4
      %s82 = int_to_ptr.vmem [resolvable:$true] %s81
      %87 = dma.hbm_to_vmem [thread:$0]  %s22, 32, %s82, [#allocation3], 16, 16, 1
    $region93: #{bert_gat_crf_ner_forward.2} parent=1 // pred_fallthru
      _
    // Predicated region
    $region94: #{bert_gat_crf_ner_forward.2} parent=1 // pred_check
      _
    $region95: #{bert_gat_crf_ner_forward.2} parent=1 // pred_check_branch
      %89 = sbr.rel (0) target = $region97
    $region96: #{bert_gat_crf_ner_forward.2} parent=1 // pred_region
      _
    $region97: #{bert_gat_crf_ner_forward.2} parent=1 // pred_fallthru
      _
    // Predicated region
    $region98: #{bert_gat_crf_ner_forward.2} parent=1 // pred_check
      _
    $region99: #{bert_gat_crf_ner_forward.2} parent=1 // pred_check_branch
      %91 = sbr.rel (0) target = $region101
    $region100: #{bert_gat_crf_ner_forward.2} parent=1 // pred_region
      %s93 = ssub.s32 16, 16
      %94 = vsyncadd [#allocation5], %s93
      %s96 = sshll.u32 [#allocation4], 4
      %s97 = int_to_ptr.vmem [resolvable:$true] %s96
      %99 = dma.hbm_to_vmem [thread:$0]  %s24, 16, %s97, [#allocation5]
    $region101: #{bert_gat_crf_ner_forward.2} parent=1 // pred_fallthru
      _
    // Predicated region
    $region102: #{bert_gat_crf_ner_forward.2} parent=1 // pred_check
      _
    $region103: #{bert_gat_crf_ner_forward.2} parent=1 // pred_check_branch
      %101 = sbr.rel (0) target = $region105
    $region104: #{bert_gat_crf_ner_forward.2} parent=1 // pred_region
      %102 = dma.done [#allocation3], 32
    $region105: #{bert_gat_crf_ner_forward.2} parent=1 // pred_fallthru
      _
    // Predicated region
    $region106: #{bert_gat_crf_ner_forward.2} parent=1 // pred_check
      _
    $region107: #{bert_gat_crf_ner_forward.2} parent=1 // pred_check_branch
      %104 = sbr.rel (0) target = $region109
    $region108: #{bert_gat_crf_ner_forward.2} parent=1 // pred_region
      %105 = dma.done [#allocation5], 16
    $region109: #{bert_gat_crf_ner_forward.2} parent=1 // pred_fallthru
      _
    %v107 = vld [vmem:[%s1] sm:$0x1]
    %v108 = vld [vmem:[%s1 + $0x1] sm:$0x1]
    %v109 = vsub.f32 1.0, %v107
    %v110 = vsub.f32 1.0, %v108
    %v111 = vmul.f32 %v109, -10000.0
    %v112 = vmul.f32 %v110, -10000.0
    %v113 = vld [vmem:[%s0] sm:$0xff]
    %v114 = vld [vmem:[%s0 + $0x8] sm:$0xff]
    %v115 = vlaneseq
    %v116 = vand.u32 %v115, 127
    %117 = vset.pattern.permute.xlu0 0
    %118 = vperm.xlu0 %117, %v113
    %v119 = vpop.permute.xlu0 %118
    %120 = vset.pattern.permute.xlu0 0
    %121 = vperm.xlu0 %120, %v114
    %v122 = vpop.permute.xlu0 %121
    %vm123 = vcmp.eq.s32.totalorder %v119, %v116
    %vm124 = vcmp.eq.s32.totalorder %v122, %v116
    %v125 = vsel %vm123, 1, 0
    %v126 = vsel %vm124, 1, 0
    %v127 = vcvt.s32.f32 %v125
    %v128 = vcvt.s32.f32 %v126
    %v129 = vpack.c.bf16 %v128, %v127
    %v130 = vld [vmem:[%s2] sm:$0xf]
    %v131 = vld [vmem:[%s2 + $0x4] sm:$0xf]
    %v132 = vld [vmem:[%s2 + $0x8] sm:$0xf]
    %v133 = vld [vmem:[%s2 + $0xc] sm:$0xf]
    %v134 = vld [vmem:[%s2 + $0x10] sm:$0xf]
    %v135 = vld [vmem:[%s2 + $0x14] sm:$0xf]
    %v136 = vld [vmem:[%s2 + $0x18] sm:$0xf]
    %v137 = vld [vmem:[%s2 + $0x1c] sm:$0xf]
    %v138 = vld [vmem:[%s2 + $0x20] sm:$0xf]
    %v139 = vld [vmem:[%s2 + $0x24] sm:$0xf]
    %v140 = vld [vmem:[%s2 + $0x28] sm:$0xf]
    %v141 = vld [vmem:[%s2 + $0x2c] sm:$0xf]
    %v142 = vld [vmem:[%s2 + $0x30] sm:$0xf]
    %v143 = vld [vmem:[%s2 + $0x34] sm:$0xf]
    %v144 = vld [vmem:[%s2 + $0x38] sm:$0xf]
    %v145 = vld [vmem:[%s2 + $0x3c] sm:$0xf]
    %v162 = vunpack.c.l.b16 %v130
    %v163 = vunpack.c.l.b16 %v131
    %v164 = vunpack.c.l.b16 %v132
    %v165 = vunpack.c.l.b16 %v133
    %v166 = vunpack.c.l.b16 %v134
    %v167 = vunpack.c.l.b16 %v135
    %v168 = vunpack.c.l.b16 %v136
    %v169 = vunpack.c.l.b16 %v137
    %v170 = vunpack.c.l.b16 %v138
    %v171 = vunpack.c.l.b16 %v139
    %v172 = vunpack.c.l.b16 %v140
    %v173 = vunpack.c.l.b16 %v141
    %v174 = vunpack.c.l.b16 %v142
    %v175 = vunpack.c.l.b16 %v143
    %v176 = vunpack.c.l.b16 %v144
    %v177 = vunpack.c.l.b16 %v145
    %v178 = vpack.c.b16 %v163, %v162
    %v179 = vpack.c.b16 %v165, %v164
    %v180 = vpack.c.b16 %v167, %v166
    %v181 = vpack.c.b16 %v169, %v168
    %v182 = vpack.c.b16 %v171, %v170
    %v183 = vpack.c.b16 %v173, %v172
    %v184 = vpack.c.b16 %v175, %v174
    %v185 = vpack.c.b16 %v177, %v176
    %194 = vmatprep.subr.bf16.mxu0 0
    %195 = vmatpush1.bf16.msra.mxu0 %v178
    %196 = vmatprep.subr.bf16.mxu0 0
    %197 = vmatpush1.bf16.msra.mxu0 %v179
    %198 = vmatprep.subr.bf16.mxu0 0
    %199 = vmatpush1.bf16.msra.mxu0 %v180
    %200 = vmatprep.subr.bf16.mxu0 0
    %201 = vmatpush1.bf16.msra.mxu0 %v181
    %202 = vmatprep.subr.bf16.mxu0 0
    %203 = vmatpush1.bf16.msra.mxu0 %v182
    %204 = vmatprep.subr.bf16.mxu0 0
    %205 = vmatpush1.bf16.msra.mxu0 %v183
    %206 = vmatprep.subr.bf16.mxu0 0
    %207 = vmatpush1.bf16.msra.mxu0 %v184
    %208 = vmatprep.subr.bf16.mxu0 0
    %209 = vmatpush1.bf16.msra.mxu0 %v185
    %210 = vmatprep.subr.bf16.mxu0 0
    %211 = vmatpush1.bf16.msra.mxu0 0
    %212 = vmatprep.subr.bf16.mxu0 0
    %213 = vmatpush1.bf16.msra.mxu0 0
    %214 = vmatprep.subr.bf16.mxu0 0
    %215 = vmatpush1.bf16.msra.mxu0 0
    %216 = vmatprep.subr.bf16.mxu0 0
    %217 = vmatpush1.bf16.msra.mxu0 0
    %218 = vmatprep.subr.bf16.mxu0 0
    %219 = vmatpush1.bf16.msra.mxu0 0
    %220 = vmatprep.subr.bf16.mxu0 0
    %221 = vmatpush1.bf16.msra.mxu0 0
    %222 = vmatprep.subr.bf16.mxu0 0
    %223 = vmatpush1.bf16.msra.mxu0 0
    %224 = vmatprep.subr.bf16.mxu0 0
    %225 = vmatpush1.bf16.msra.mxu0 0
    %226 = vmatprep.mubr.bf16.mxu0 0
    %227 = vmatmul.mubr.bf16.gmra.mrb[0].mxu0 %v129
    %v228 = vpop.f32.mrb[0].mxu0
    %v229 = vadd.f32 0.0, %v228
    %v230 = vpop.f32.mrb[0].mxu0
    %v231 = vpop.f32.mrb[0].mxu0
    %v232 = vadd.f32 0.0, %v231
    %v233 = vpop.f32.mrb[0].mxu0
    %234 = vdwg.mxu0
    %v235 = vld [vmem:[%s3] sm:$0xff]
    %v236 = vadd.f32 %v229, %v235
    %v237 = vadd.f32 %v232, %v235
    %v238 = vld [vmem:[%s4] sm:$0x1]
    %v239 = vlaneseq
    %v240 = vshrl.u32 %v239, 7
    %v241 = vsub.s32 0, %v240
    %v242 = vrot.slane %v238, %v241
    %v243 = vadd.f32 %v236, %v242
    %v244 = vadd.f32 %v237, %v242
    %v245 = vld [vmem:[%s5] sm:$0x1]
    %v246 = vld [vmem:[%s6] sm:$0x1]
    %vm247 = vcmask 261120
    %v248 = vsel %vm247, %v243, 0.0
    %249 = vadd.xlane.f32.xlu0 %v248
    %v250 = vpop.xlane.xlu0 %249
    %v251 = vsel %vm247, %v244, 0.0
    %252 = vadd.xlane.f32.xlu0 %v251
    %v253 = vpop.xlane.xlu0 %252
    %v254 = vrcp.pop 32.0
    %v255 = vmul.f32 %v250, %v254
    %v256 = vmul.f32 %v253, %v254
    %v257 = vsub.f32 %v243, %v255
    %v258 = vsub.f32 %v244, %v256
    %v259 = vmul.f32 %v257, %v257
    %v260 = vmul.f32 %v258, %v258
    %v261 = vsel %vm247, %v259, 0.0
    %262 = vadd.xlane.f32.xlu0 %v261
    %v263 = vpop.xlane.xlu0 %262
    %v264 = vsel %vm247, %v260, 0.0
    %265 = vadd.xlane.f32.xlu0 %v264
    %v266 = vpop.xlane.xlu0 %265
    %v267 = vmul.f32 %v263, %v254
    %v268 = vmul.f32 %v266, %v254
    %v269 = vadd.f32 %v267, 1e-12
    %v270 = vadd.f32 %v268, 1e-12
    %v271 = vrsqrt.pop %v269
    %v272 = vrsqrt.pop %v270
    %v273 = vmul.f32 %v257, %v271
    %v274 = vmul.f32 %v258, %v272
    %v276 = vlaneseq
    %v277 = vshrl.u32 %v276, 7
    %v278 = vsub.s32 0, %v277
    %v279 = vrot.slane %v245, %v278
    %v281 = vmul.f32 %v273, %v279
    %v282 = vmul.f32 %v274, %v279
    %v284 = vlaneseq
    %v285 = vshrl.u32 %v284, 7
    %v286 = vsub.s32 0, %v285
    %v287 = vrot.slane %v246, %v286
    %v289 = vadd.f32 %v281, %v287
    %v290 = vadd.f32 %v282, %v287
    loop: start=0, step=1, limit=2
    $region110: #{bert_gat_crf_ner_forward.2} parent=1 // loop_pre_header
      _
    $region111: #{bert_gat_crf_ner_forward.2} parent=1 // loop_header
      %s292 = sphi 0, %s296
      %p293 = scmp.ge.s32.totalorder %s292, 2
      %v297 = vphi %v289, %v1790
      %v298 = vphi %v290, %v1791
    $region112: #{bert_gat_crf_ner_forward.2} parent=1 // loop_header_branch
      %295 = sbr.rel (%p293) target = $region116
    $region113: #{bert_gat_crf_ner_forward.2} parent=1 // loop_body
      %v299 = vpack.c.bf16 %v298, %v297
      %s300 = smul.u32 %s292, 4
      %s301 = smul.addr %s300, 4
      %s302 = scalar_lea.vmem %s7, %s301
      %v303 = vld [vmem:[%s302] sm:$0xf]
      %v304 = vld [vmem:[%s302 + $0x4] sm:$0xf]
      %v305 = vld [vmem:[%s302 + $0x8] sm:$0xf]
      %v306 = vld [vmem:[%s302 + $0xc] sm:$0xf]
      %s307 = scalar_lea.vmem %s8, %s292
      %v308 = vld [vmem:[%s307] sm:$0x1]
      %v310 = vlaneseq
      %v311 = vshrl.u32 %v310, 7
      %v312 = vsub.s32 0, %v311
      %v313 = vrot.slane %v308, %v312
      %v319 = vunpack.c.l.b16 %v303
      %v320 = vunpack.c.l.b16 %v304
      %v321 = vunpack.c.l.b16 %v305
      %v322 = vunpack.c.l.b16 %v306
      %v323 = vpack.c.b16 %v320, %v319
      %v324 = vpack.c.b16 %v322, %v321
      %v328 = vsel %vm247, %v299, 0
      %330 = vmatprep.subr.bf16.mxu0 0
      %331 = vmatpush1.bf16.msra.mxu0 %v323
      %332 = vmatprep.subr.bf16.mxu0 0
      %333 = vmatpush1.bf16.msra.mxu0 %v324
      %334 = vmatprep.subr.bf16.mxu0 0
      %335 = vmatpush1.bf16.msra.mxu0 0
      %336 = vmatprep.subr.bf16.mxu0 0
      %337 = vmatpush1.bf16.msra.mxu0 0
      %338 = vmatprep.subr.bf16.mxu0 0
      %339 = vmatpush1.bf16.msra.mxu0 0
      %340 = vmatprep.subr.bf16.mxu0 0
      %341 = vmatpush1.bf16.msra.mxu0 0
      %342 = vmatprep.subr.bf16.mxu0 0
      %343 = vmatpush1.bf16.msra.mxu0 0
      %344 = vmatprep.subr.bf16.mxu0 0
      %345 = vmatpush1.bf16.msra.mxu0 0
      %346 = vmatprep.subr.bf16.mxu0 0
      %347 = vmatpush1.bf16.msra.mxu0 0
      %348 = vmatprep.subr.bf16.mxu0 0
      %349 = vmatpush1.bf16.msra.mxu0 0
      %350 = vmatprep.subr.bf16.mxu0 0
      %351 = vmatpush1.bf16.msra.mxu0 0
      %352 = vmatprep.subr.bf16.mxu0 0
      %353 = vmatpush1.bf16.msra.mxu0 0
      %354 = vmatprep.subr.bf16.mxu0 0
      %355 = vmatpush1.bf16.msra.mxu0 0
      %356 = vmatprep.subr.bf16.mxu0 0
      %357 = vmatpush1.bf16.msra.mxu0 0
      %358 = vmatprep.subr.bf16.mxu0 0
      %359 = vmatpush1.bf16.msra.mxu0 0
      %360 = vmatprep.subr.bf16.mxu0 0
      %361 = vmatpush1.bf16.msra.mxu0 0
      %362 = vmatprep.mubr.bf16.mxu0 0
      %363 = vmatmul.mubr.bf16.gmra.mrb[0].mxu0 %v328
      %v364 = vpop.f32.mrb[0].mxu0
      %v365 = vadd.f32 %v313, %v364
      %v366 = vpop.f32.mrb[0].mxu0
      %v367 = vpop.f32.mrb[0].mxu0
      %v368 = vadd.f32 %v313, %v367
      %v369 = vpop.f32.mrb[0].mxu0
      %370 = vdwg.mxu0
      %s371 = smul.addr %s300, 4
      %s372 = scalar_lea.vmem %s9, %s371
      %v373 = vld [vmem:[%s372] sm:$0xf]
      %v374 = vld [vmem:[%s372 + $0x4] sm:$0xf]
      %v375 = vld [vmem:[%s372 + $0x8] sm:$0xf]
      %v376 = vld [vmem:[%s372 + $0xc] sm:$0xf]
      %s377 = scalar_lea.vmem %s10, %s292
      %v378 = vld [vmem:[%s377] sm:$0x1]
      %v380 = vlaneseq
      %v381 = vshrl.u32 %v380, 7
      %v382 = vsub.s32 0, %v381
      %v383 = vrot.slane %v378, %v382
      %v389 = vunpack.c.l.b16 %v373
      %v390 = vunpack.c.l.b16 %v374
      %v391 = vunpack.c.l.b16 %v375
      %v392 = vunpack.c.l.b16 %v376
      %v393 = vpack.c.b16 %v390, %v389
      %v394 = vpack.c.b16 %v392, %v391
      %397 = vmatprep.subr.bf16.mxu0 0
      %398 = vmatpush1.bf16.msra.mxu0 %v393
      %399 = vmatprep.subr.bf16.mxu0 0
      %400 = vmatpush1.bf16.msra.mxu0 %v394
      %401 = vmatprep.subr.bf16.mxu0 0
      %402 = vmatpush1.bf16.msra.mxu0 0
      %403 = vmatprep.subr.bf16.mxu0 0
      %404 = vmatpush1.bf16.msra.mxu0 0
      %405 = vmatprep.subr.bf16.mxu0 0
      %406 = vmatpush1.bf16.msra.mxu0 0
      %407 = vmatprep.subr.bf16.mxu0 0
      %408 = vmatpush1.bf16.msra.mxu0 0
      %409 = vmatprep.subr.bf16.mxu0 0
      %410 = vmatpush1.bf16.msra.mxu0 0
      %411 = vmatprep.subr.bf16.mxu0 0
      %412 = vmatpush1.bf16.msra.mxu0 0
      %413 = vmatprep.subr.bf16.mxu0 0
      %414 = vmatpush1.bf16.msra.mxu0 0
      %415 = vmatprep.subr.bf16.mxu0 0
      %416 = vmatpush1.bf16.msra.mxu0 0
      %417 = vmatprep.subr.bf16.mxu0 0
      %418 = vmatpush1.bf16.msra.mxu0 0
      %419 = vmatprep.subr.bf16.mxu0 0
      %420 = vmatpush1.bf16.msra.mxu0 0
      %421 = vmatprep.subr.bf16.mxu0 0
      %422 = vmatpush1.bf16.msra.mxu0 0
      %423 = vmatprep.subr.bf16.mxu0 0
      %424 = vmatpush1.bf16.msra.mxu0 0
      %425 = vmatprep.subr.bf16.mxu0 0
      %426 = vmatpush1.bf16.msra.mxu0 0
      %427 = vmatprep.subr.bf16.mxu0 0
      %428 = vmatpush1.bf16.msra.mxu0 0
      %429 = vmatprep.mubr.bf16.mxu0 0
      %430 = vmatmul.mubr.bf16.gmra.mrb[0].mxu0 %v328
      %v431 = vpop.f32.mrb[0].mxu0
      %v432 = vadd.f32 %v383, %v431
      %v433 = vpop.f32.mrb[0].mxu0
      %v434 = vpop.f32.mrb[0].mxu0
      %v435 = vadd.f32 %v383, %v434
      %v436 = vpop.f32.mrb[0].mxu0
      %437 = vdwg.mxu0
      %s438 = smul.addr %s300, 4
      %s439 = scalar_lea.vmem %s11, %s438
      %v440 = vld [vmem:[%s439] sm:$0xf]
      %v441 = vld [vmem:[%s439 + $0x4] sm:$0xf]
      %v442 = vld [vmem:[%s439 + $0x8] sm:$0xf]
      %v443 = vld [vmem:[%s439 + $0xc] sm:$0xf]
      %s444 = scalar_lea.vmem %s12, %s292
      %v445 = vld [vmem:[%s444] sm:$0x1]
      %v447 = vlaneseq
      %v448 = vshrl.u32 %v447, 7
      %v449 = vsub.s32 0, %v448
      %v450 = vrot.slane %v445, %v449
      %v456 = vunpack.c.l.b16 %v440
      %v457 = vunpack.c.l.b16 %v441
      %v458 = vunpack.c.l.b16 %v442
      %v459 = vunpack.c.l.b16 %v443
      %v460 = vpack.c.b16 %v457, %v456
      %v461 = vpack.c.b16 %v459, %v458
      %464 = vmatprep.subr.bf16.mxu0 0
      %465 = vmatpush1.bf16.msra.mxu0 %v460
      %466 = vmatprep.subr.bf16.mxu0 0
      %467 = vmatpush1.bf16.msra.mxu0 %v461
      %468 = vmatprep.subr.bf16.mxu0 0
      %469 = vmatpush1.bf16.msra.mxu0 0
      %470 = vmatprep.subr.bf16.mxu0 0
      %471 = vmatpush1.bf16.msra.mxu0 0
      %472 = vmatprep.subr.bf16.mxu0 0
      %473 = vmatpush1.bf16.msra.mxu0 0
      %474 = vmatprep.subr.bf16.mxu0 0
      %475 = vmatpush1.bf16.msra.mxu0 0
      %476 = vmatprep.subr.bf16.mxu0 0
      %477 = vmatpush1.bf16.msra.mxu0 0
      %478 = vmatprep.subr.bf16.mxu0 0
      %479 = vmatpush1.bf16.msra.mxu0 0
      %480 = vmatprep.subr.bf16.mxu0 0
      %481 = vmatpush1.bf16.msra.mxu0 0
      %482 = vmatprep.subr.bf16.mxu0 0
      %483 = vmatpush1.bf16.msra.mxu0 0
      %484 = vmatprep.subr.bf16.mxu0 0
      %485 = vmatpush1.bf16.msra.mxu0 0
      %486 = vmatprep.subr.bf16.mxu0 0
      %487 = vmatpush1.bf16.msra.mxu0 0
      %488 = vmatprep.subr.bf16.mxu0 0
      %489 = vmatpush1.bf16.msra.mxu0 0
      %490 = vmatprep.subr.bf16.mxu0 0
      %491 = vmatpush1.bf16.msra.mxu0 0
      %492 = vmatprep.subr.bf16.mxu0 0
      %493 = vmatpush1.bf16.msra.mxu0 0
      %494 = vmatprep.subr.bf16.mxu0 0
      %495 = vmatpush1.bf16.msra.mxu0 0
      %496 = vmatprep.mubr.bf16.mxu0 0
      %497 = vmatmul.mubr.bf16.gmra.mrb[0].mxu0 %v328
      %v498 = vpop.f32.mrb[0].mxu0
      %v499 = vadd.f32 %v450, %v498
      %v500 = vpop.f32.mrb[0].mxu0
      %v501 = vpop.f32.mrb[0].mxu0
      %v502 = vadd.f32 %v450, %v501
      %v503 = vpop.f32.mrb[0].mxu0
      %504 = vdwg.mxu0
      %v505 = vpack.c.bf16 %v365, %v365
      %v506 = vpack.c.bf16 %v368, %v368
      %v507 = vpack.c.bf16 %v432, %v432
      %v508 = vpack.c.bf16 %v435, %v435
      %v509 = vpack.c.bf16 %v499, %v499
      %v510 = vpack.c.bf16 %v502, %v502
      %vm511 = vcmask 64512
      %v513 = vsel %vm511, %v505, 0
      %v516 = vsel %vm511, %v507, 0
      %518 = vmatprep.subr.bf16.mxu0 0
      %519 = vmatpush1.bf16.xpose.msra.mxu0 %v516
      %520 = vmatprep.subr.bf16.mxu0 0
      %521 = vmatpush1.bf16.xpose.msra.mxu0 0
      %522 = vmatprep.subr.bf16.mxu0 0
      %523 = vmatpush1.bf16.xpose.msra.mxu0 0
      %524 = vmatprep.subr.bf16.mxu0 0
      %525 = vmatpush1.bf16.xpose.msra.mxu0 0
      %526 = vmatprep.subr.bf16.mxu0 0
      %527 = vmatpush1.bf16.xpose.msra.mxu0 0
      %528 = vmatprep.subr.bf16.mxu0 0
      %529 = vmatpush1.bf16.xpose.msra.mxu0 0
      %530 = vmatprep.subr.bf16.mxu0 0
      %531 = vmatpush1.bf16.xpose.msra.mxu0 0
      %532 = vmatprep.subr.bf16.mxu0 0
      %533 = vmatpush1.bf16.xpose.msra.mxu0 0
      %534 = vmatprep.subr.bf16.mxu0 0
      %535 = vmatpush1.bf16.xpose.msra.mxu0 0
      %536 = vmatprep.subr.bf16.mxu0 0
      %537 = vmatpush1.bf16.xpose.msra.mxu0 0
      %538 = vmatprep.subr.bf16.mxu0 0
      %539 = vmatpush1.bf16.xpose.msra.mxu0 0
      %540 = vmatprep.subr.bf16.mxu0 0
      %541 = vmatpush1.bf16.xpose.msra.mxu0 0
      %542 = vmatprep.subr.bf16.mxu0 0
      %543 = vmatpush1.bf16.xpose.msra.mxu0 0
      %544 = vmatprep.subr.bf16.mxu0 0
      %545 = vmatpush1.bf16.xpose.msra.mxu0 0
      %546 = vmatprep.subr.bf16.mxu0 0
      %547 = vmatpush1.bf16.xpose.msra.mxu0 0
      %548 = vmatprep.subr.bf16.mxu0 0
      %549 = vmatpush1.bf16.xpose.msra.mxu0 0
      %550 = vmatprep.mubr.bf16.mxu0 0
      %551 = vmatmul.mubr.bf16.gmra.mrb[0].mxu0 %v513
      %v552 = vpop.f32.mrb[0].mxu0
      %v553 = vadd.f32 0.0, %v552
      %v554 = vpop.f32.mrb[0].mxu0
      %v555 = vpop.f32.mrb[0].mxu0
      %v556 = vpop.f32.mrb[0].mxu0
      %557 = vdwg.mxu0
      %v559 = vsel %vm511, %v506, 0
      %v562 = vsel %vm511, %v508, 0
      %564 = vmatprep.subr.bf16.mxu0 0
      %565 = vmatpush1.bf16.xpose.msra.mxu0 %v562
      %566 = vmatprep.subr.bf16.mxu0 0
      %567 = vmatpush1.bf16.xpose.msra.mxu0 0
      %568 = vmatprep.subr.bf16.mxu0 0
      %569 = vmatpush1.bf16.xpose.msra.mxu0 0
      %570 = vmatprep.subr.bf16.mxu0 0
      %571 = vmatpush1.bf16.xpose.msra.mxu0 0
      %572 = vmatprep.subr.bf16.mxu0 0
      %573 = vmatpush1.bf16.xpose.msra.mxu0 0
      %574 = vmatprep.subr.bf16.mxu0 0
      %575 = vmatpush1.bf16.xpose.msra.mxu0 0
      %576 = vmatprep.subr.bf16.mxu0 0
      %577 = vmatpush1.bf16.xpose.msra.mxu0 0
      %578 = vmatprep.subr.bf16.mxu0 0
      %579 = vmatpush1.bf16.xpose.msra.mxu0 0
      %580 = vmatprep.subr.bf16.mxu0 0
      %581 = vmatpush1.bf16.xpose.msra.mxu0 0
      %582 = vmatprep.subr.bf16.mxu0 0
      %583 = vmatpush1.bf16.xpose.msra.mxu0 0
      %584 = vmatprep.subr.bf16.mxu0 0
      %585 = vmatpush1.bf16.xpose.msra.mxu0 0
      %586 = vmatprep.subr.bf16.mxu0 0
      %587 = vmatpush1.bf16.xpose.msra.mxu0 0
      %588 = vmatprep.subr.bf16.mxu0 0
      %589 = vmatpush1.bf16.xpose.msra.mxu0 0
      %590 = vmatprep.subr.bf16.mxu0 0
      %591 = vmatpush1.bf16.xpose.msra.mxu0 0
      %592 = vmatprep.subr.bf16.mxu0 0
      %593 = vmatpush1.bf16.xpose.msra.mxu0 0
      %594 = vmatprep.subr.bf16.mxu0 0
      %595 = vmatpush1.bf16.xpose.msra.mxu0 0
      %596 = vmatprep.mubr.bf16.mxu0 0
      %597 = vmatmul.mubr.bf16.gmra.mrb[0].mxu0 %v559
      %v598 = vpop.f32.mrb[0].mxu0
      %v599 = vadd.f32 0.0, %v598
      %v600 = vpop.f32.mrb[0].mxu0
      %v601 = vpop.f32.mrb[0].mxu0
      %v602 = vpop.f32.mrb[0].mxu0
      %603 = vdwg.mxu0
      %v604 = vmul.f32 %v553, 0.35355338
      %v605 = vmul.f32 %v599, 0.35355338
      %v608 = vlaneseq
      %v609 = vshrl.u32 %v608, 7
      %v610 = vsub.s32 0, %v609
      %v611 = vrot.slane %v111, %v610
      %v612 = vlaneseq
      %v613 = vshrl.u32 %v612, 7
      %v614 = vsub.s32 0, %v613
      %v615 = vrot.slane %v112, %v614
      %v618 = vadd.f32 %v604, %v611
      %v619 = vadd.f32 %v605, %v615
      %v620 = vsel %vm511, %v618, -inf
      %621 = vmax.xlane.f32.xlu0 %v620
      %v622 = vpop.xlane.xlu0 %621
      %v623 = vsel %vm511, %v619, -inf
      %624 = vmax.xlane.f32.xlu0 %v623
      %v625 = vpop.xlane.xlu0 %624
      %v626 = vsub.f32 %v618, %v622
      %v627 = vsub.f32 %v619, %v625
      %v628 = vmul.f32 %v626, 1.442695
      %v629 = vpow.pop %v628
      %v630 = vmul.f32 %v627, 1.442695
      %v631 = vpow.pop %v630
      %v632 = vsel %vm511, %v629, 0.0
      %633 = vadd.xlane.f32.xlu0 %v632
      %v634 = vpop.xlane.xlu0 %633
      %v635 = vsel %vm511, %v631, 0.0
      %636 = vadd.xlane.f32.xlu0 %v635
      %v637 = vpop.xlane.xlu0 %636
      %v638 = vrcp.pop %v634
      %v639 = vrcp.pop %v637
      %v640 = vmul.f32 %v629, %v638
      %v641 = vmul.f32 %v631, %v639
      %v642 = vpack.c.bf16 %v640, %v640
      %v643 = vpack.c.bf16 %v641, %v641
      %v645 = vsel %vm511, %v642, 0
      %vm647 = vcmask 1043456
      %v649 = vsel %vm647, %v509, 0
      %651 = vmatprep.subr.bf16.mxu0 0
      %652 = vmatpush1.bf16.msra.mxu0 %v649
      %653 = vmatprep.subr.bf16.mxu0 0
      %654 = vmatpush1.bf16.msra.mxu0 0
      %655 = vmatprep.subr.bf16.mxu0 0
      %656 = vmatpush1.bf16.msra.mxu0 0
      %657 = vmatprep.subr.bf16.mxu0 0
      %658 = vmatpush1.bf16.msra.mxu0 0
      %659 = vmatprep.subr.bf16.mxu0 0
      %660 = vmatpush1.bf16.msra.mxu0 0
      %661 = vmatprep.subr.bf16.mxu0 0
      %662 = vmatpush1.bf16.msra.mxu0 0
      %663 = vmatprep.subr.bf16.mxu0 0
      %664 = vmatpush1.bf16.msra.mxu0 0
      %665 = vmatprep.subr.bf16.mxu0 0
      %666 = vmatpush1.bf16.msra.mxu0 0
      %667 = vmatprep.subr.bf16.mxu0 0
      %668 = vmatpush1.bf16.msra.mxu0 0
      %669 = vmatprep.subr.bf16.mxu0 0
      %670 = vmatpush1.bf16.msra.mxu0 0
      %671 = vmatprep.subr.bf16.mxu0 0
      %672 = vmatpush1.bf16.msra.mxu0 0
      %673 = vmatprep.subr.bf16.mxu0 0
      %674 = vmatpush1.bf16.msra.mxu0 0
      %675 = vmatprep.subr.bf16.mxu0 0
      %676 = vmatpush1.bf16.msra.mxu0 0
      %677 = vmatprep.subr.bf16.mxu0 0
      %678 = vmatpush1.bf16.msra.mxu0 0
      %679 = vmatprep.subr.bf16.mxu0 0
      %680 = vmatpush1.bf16.msra.mxu0 0
      %681 = vmatprep.subr.bf16.mxu0 0
      %682 = vmatpush1.bf16.msra.mxu0 0
      %683 = vmatprep.mubr.bf16.mxu0 0
      %684 = vmatmul.mubr.bf16.gmra.mrb[0].mxu0 %v645
      %v685 = vpop.f32.mrb[0].mxu0
      %v686 = vadd.f32 0.0, %v685
      %v687 = vpop.f32.mrb[0].mxu0
      %v688 = vpop.f32.mrb[0].mxu0
      %v689 = vpop.f32.mrb[0].mxu0
      %690 = vdwg.mxu0
      %v692 = vsel %vm511, %v643, 0
      %v695 = vsel %vm647, %v510, 0
      %697 = vmatprep.subr.bf16.mxu0 0
      %698 = vmatpush1.bf16.msra.mxu0 %v695
      %699 = vmatprep.subr.bf16.mxu0 0
      %700 = vmatpush1.bf16.msra.mxu0 0
      %701 = vmatprep.subr.bf16.mxu0 0
      %702 = vmatpush1.bf16.msra.mxu0 0
      %703 = vmatprep.subr.bf16.mxu0 0
      %704 = vmatpush1.bf16.msra.mxu0 0
      %705 = vmatprep.subr.bf16.mxu0 0
      %706 = vmatpush1.bf16.msra.mxu0 0
      %707 = vmatprep.subr.bf16.mxu0 0
      %708 = vmatpush1.bf16.msra.mxu0 0
      %709 = vmatprep.subr.bf16.mxu0 0
      %710 = vmatpush1.bf16.msra.mxu0 0
      %711 = vmatprep.subr.bf16.mxu0 0
      %712 = vmatpush1.bf16.msra.mxu0 0
      %713 = vmatprep.subr.bf16.mxu0 0
      %714 = vmatpush1.bf16.msra.mxu0 0
      %715 = vmatprep.subr.bf16.mxu0 0
      %716 = vmatpush1.bf16.msra.mxu0 0
      %717 = vmatprep.subr.bf16.mxu0 0
      %718 = vmatpush1.bf16.msra.mxu0 0
      %719 = vmatprep.subr.bf16.mxu0 0
      %720 = vmatpush1.bf16.msra.mxu0 0
      %721 = vmatprep.subr.bf16.mxu0 0
      %722 = vmatpush1.bf16.msra.mxu0 0
      %723 = vmatprep.subr.bf16.mxu0 0
      %724 = vmatpush1.bf16.msra.mxu0 0
      %725 = vmatprep.subr.bf16.mxu0 0
      %726 = vmatpush1.bf16.msra.mxu0 0
      %727 = vmatprep.subr.bf16.mxu0 0
      %728 = vmatpush1.bf16.msra.mxu0 0
      %729 = vmatprep.mubr.bf16.mxu0 0
      %730 = vmatmul.mubr.bf16.gmra.mrb[0].mxu0 %v692
      %v731 = vpop.f32.mrb[0].mxu0
      %v732 = vadd.f32 0.0, %v731
      %v733 = vpop.f32.mrb[0].mxu0
      %v734 = vpop.f32.mrb[0].mxu0
      %v735 = vpop.f32.mrb[0].mxu0
      %736 = vdwg.mxu0
      %738 = vrot.lane.b32.xlu0 %v505, 120
      %v739 = vpop.permute.xlu0 %738
      %741 = vrot.lane.b32.xlu0 %v507, 120
      %v742 = vpop.permute.xlu0 %741
      %v744 = vsel %vm511, %v739, 0
      %v747 = vsel %vm511, %v742, 0
      %749 = vmatprep.subr.bf16.mxu0 0
      %750 = vmatpush1.bf16.xpose.msra.mxu0 %v747
      %751 = vmatprep.subr.bf16.mxu0 0
      %752 = vmatpush1.bf16.xpose.msra.mxu0 0
      %753 = vmatprep.subr.bf16.mxu0 0
      %754 = vmatpush1.bf16.xpose.msra.mxu0 0
      %755 = vmatprep.subr.bf16.mxu0 0
      %756 = vmatpush1.bf16.xpose.msra.mxu0 0
      %757 = vmatprep.subr.bf16.mxu0 0
      %758 = vmatpush1.bf16.xpose.msra.mxu0 0
      %759 = vmatprep.subr.bf16.mxu0 0
      %760 = vmatpush1.bf16.xpose.msra.mxu0 0
      %761 = vmatprep.subr.bf16.mxu0 0
      %762 = vmatpush1.bf16.xpose.msra.mxu0 0
      %763 = vmatprep.subr.bf16.mxu0 0
      %764 = vmatpush1.bf16.xpose.msra.mxu0 0
      %765 = vmatprep.subr.bf16.mxu0 0
      %766 = vmatpush1.bf16.xpose.msra.mxu0 0
      %767 = vmatprep.subr.bf16.mxu0 0
      %768 = vmatpush1.bf16.xpose.msra.mxu0 0
      %769 = vmatprep.subr.bf16.mxu0 0
      %770 = vmatpush1.bf16.xpose.msra.mxu0 0
      %771 = vmatprep.subr.bf16.mxu0 0
      %772 = vmatpush1.bf16.xpose.msra.mxu0 0
      %773 = vmatprep.subr.bf16.mxu0 0
      %774 = vmatpush1.bf16.xpose.msra.mxu0 0
      %775 = vmatprep.subr.bf16.mxu0 0
      %776 = vmatpush1.bf16.xpose.msra.mxu0 0
      %777 = vmatprep.subr.bf16.mxu0 0
      %778 = vmatpush1.bf16.xpose.msra.mxu0 0
      %779 = vmatprep.subr.bf16.mxu0 0
      %780 = vmatpush1.bf16.xpose.msra.mxu0 0
      %781 = vmatprep.mubr.bf16.mxu0 0
      %782 = vmatmul.mubr.bf16.gmra.mrb[0].mxu0 %v744
      %v783 = vpop.f32.mrb[0].mxu0
      %v784 = vadd.f32 0.0, %v783
      %v785 = vpop.f32.mrb[0].mxu0
      %v786 = vpop.f32.mrb[0].mxu0
      %v787 = vpop.f32.mrb[0].mxu0
      %788 = vdwg.mxu0
      %790 = vrot.lane.b32.xlu0 %v506, 120
      %v791 = vpop.permute.xlu0 %790
      %793 = vrot.lane.b32.xlu0 %v508, 120
      %v794 = vpop.permute.xlu0 %793
      %v796 = vsel %vm511, %v791, 0
      %v799 = vsel %vm511, %v794, 0
      %801 = vmatprep.subr.bf16.mxu0 0
      %802 = vmatpush1.bf16.xpose.msra.mxu0 %v799
      %803 = vmatprep.subr.bf16.mxu0 0
      %804 = vmatpush1.bf16.xpose.msra.mxu0 0
      %805 = vmatprep.subr.bf16.mxu0 0
      %806 = vmatpush1.bf16.xpose.msra.mxu0 0
      %807 = vmatprep.subr.bf16.mxu0 0
      %808 = vmatpush1.bf16.xpose.msra.mxu0 0
      %809 = vmatprep.subr.bf16.mxu0 0
      %810 = vmatpush1.bf16.xpose.msra.mxu0 0
      %811 = vmatprep.subr.bf16.mxu0 0
      %812 = vmatpush1.bf16.xpose.msra.mxu0 0
      %813 = vmatprep.subr.bf16.mxu0 0
      %814 = vmatpush1.bf16.xpose.msra.mxu0 0
      %815 = vmatprep.subr.bf16.mxu0 0
      %816 = vmatpush1.bf16.xpose.msra.mxu0 0
      %817 = vmatprep.subr.bf16.mxu0 0
      %818 = vmatpush1.bf16.xpose.msra.mxu0 0
      %819 = vmatprep.subr.bf16.mxu0 0
      %820 = vmatpush1.bf16.xpose.msra.mxu0 0
      %821 = vmatprep.subr.bf16.mxu0 0
      %822 = vmatpush1.bf16.xpose.msra.mxu0 0
      %823 = vmatprep.subr.bf16.mxu0 0
      %824 = vmatpush1.bf16.xpose.msra.mxu0 0
      %825 = vmatprep.subr.bf16.mxu0 0
      %826 = vmatpush1.bf16.xpose.msra.mxu0 0
      %827 = vmatprep.subr.bf16.mxu0 0
      %828 = vmatpush1.bf16.xpose.msra.mxu0 0
      %829 = vmatprep.subr.bf16.mxu0 0
      %830 = vmatpush1.bf16.xpose.msra.mxu0 0
      %831 = vmatprep.subr.bf16.mxu0 0
      %832 = vmatpush1.bf16.xpose.msra.mxu0 0
      %833 = vmatprep.mubr.bf16.mxu0 0
      %834 = vmatmul.mubr.bf16.gmra.mrb[0].mxu0 %v796
      %v835 = vpop.f32.mrb[0].mxu0
      %v836 = vadd.f32 0.0, %v835
      %v837 = vpop.f32.mrb[0].mxu0
      %v838 = vpop.f32.mrb[0].mxu0
      %v839 = vpop.f32.mrb[0].mxu0
      %840 = vdwg.mxu0
      %v841 = vmul.f32 %v784, 0.35355338
      %v842 = vmul.f32 %v836, 0.35355338
      %v843 = vadd.f32 %v841, %v611
      %v844 = vadd.f32 %v842, %v615
      %v845 = vsel %vm511, %v843, -inf
      %846 = vmax.xlane.f32.xlu0 %v845
      %v847 = vpop.xlane.xlu0 %846
      %v848 = vsel %vm511, %v844, -inf
      %849 = vmax.xlane.f32.xlu0 %v848
      %v850 = vpop.xlane.xlu0 %849
      %v851 = vsub.f32 %v843, %v847
      %v852 = vsub.f32 %v844, %v850
      %v853 = vmul.f32 %v851, 1.442695
      %v854 = vpow.pop %v853
      %v855 = vmul.f32 %v852, 1.442695
      %v856 = vpow.pop %v855
      %v857 = vsel %vm511, %v854, 0.0
      %858 = vadd.xlane.f32.xlu0 %v857
      %v859 = vpop.xlane.xlu0 %858
      %v860 = vsel %vm511, %v856, 0.0
      %861 = vadd.xlane.f32.xlu0 %v860
      %v862 = vpop.xlane.xlu0 %861
      %v863 = vrcp.pop %v859
      %v864 = vrcp.pop %v862
      %v865 = vmul.f32 %v854, %v863
      %v866 = vmul.f32 %v856, %v864
      %v867 = vpack.c.bf16 %v865, %v865
      %v868 = vpack.c.bf16 %v866, %v866
      %870 = vrot.lane.b32.xlu0 %v509, 120
      %v871 = vpop.permute.xlu0 %870
      %v873 = vsel %vm511, %v867, 0
      %v876 = vsel %vm647, %v871, 0
      %878 = vmatprep.subr.bf16.mxu0 0
      %879 = vmatpush1.bf16.msra.mxu0 %v876
      %880 = vmatprep.subr.bf16.mxu0 0
      %881 = vmatpush1.bf16.msra.mxu0 0
      %882 = vmatprep.subr.bf16.mxu0 0
      %883 = vmatpush1.bf16.msra.mxu0 0
      %884 = vmatprep.subr.bf16.mxu0 0
      %885 = vmatpush1.bf16.msra.mxu0 0
      %886 = vmatprep.subr.bf16.mxu0 0
      %887 = vmatpush1.bf16.msra.mxu0 0
      %888 = vmatprep.subr.bf16.mxu0 0
      %889 = vmatpush1.bf16.msra.mxu0 0
      %890 = vmatprep.subr.bf16.mxu0 0
      %891 = vmatpush1.bf16.msra.mxu0 0
      %892 = vmatprep.subr.bf16.mxu0 0
      %893 = vmatpush1.bf16.msra.mxu0 0
      %894 = vmatprep.subr.bf16.mxu0 0
      %895 = vmatpush1.bf16.msra.mxu0 0
      %896 = vmatprep.subr.bf16.mxu0 0
      %897 = vmatpush1.bf16.msra.mxu0 0
      %898 = vmatprep.subr.bf16.mxu0 0
      %899 = vmatpush1.bf16.msra.mxu0 0
      %900 = vmatprep.subr.bf16.mxu0 0
      %901 = vmatpush1.bf16.msra.mxu0 0
      %902 = vmatprep.subr.bf16.mxu0 0
      %903 = vmatpush1.bf16.msra.mxu0 0
      %904 = vmatprep.subr.bf16.mxu0 0
      %905 = vmatpush1.bf16.msra.mxu0 0
      %906 = vmatprep.subr.bf16.mxu0 0
      %907 = vmatpush1.bf16.msra.mxu0 0
      %908 = vmatprep.subr.bf16.mxu0 0
      %909 = vmatpush1.bf16.msra.mxu0 0
      %910 = vmatprep.mubr.bf16.mxu0 0
      %911 = vmatmul.mubr.bf16.gmra.mrb[0].mxu0 %v873
      %v912 = vpop.f32.mrb[0].mxu0
      %v913 = vadd.f32 0.0, %v912
      %v914 = vpop.f32.mrb[0].mxu0
      %v915 = vpop.f32.mrb[0].mxu0
      %v916 = vpop.f32.mrb[0].mxu0
      %917 = vdwg.mxu0
      %919 = vrot.lane.b32.xlu0 %v510, 120
      %v920 = vpop.permute.xlu0 %919
      %v922 = vsel %vm511, %v868, 0
      %v925 = vsel %vm647, %v920, 0
      %927 = vmatprep.subr.bf16.mxu0 0
      %928 = vmatpush1.bf16.msra.mxu0 %v925
      %929 = vmatprep.subr.bf16.mxu0 0
      %930 = vmatpush1.bf16.msra.mxu0 0
      %931 = vmatprep.subr.bf16.mxu0 0
      %932 = vmatpush1.bf16.msra.mxu0 0
      %933 = vmatprep.subr.bf16.mxu0 0
      %934 = vmatpush1.bf16.msra.mxu0 0
      %935 = vmatprep.subr.bf16.mxu0 0
      %936 = vmatpush1.bf16.msra.mxu0 0
      %937 = vmatprep.subr.bf16.mxu0 0
      %938 = vmatpush1.bf16.msra.mxu0 0
      %939 = vmatprep.subr.bf16.mxu0 0
      %940 = vmatpush1.bf16.msra.mxu0 0
      %941 = vmatprep.subr.bf16.mxu0 0
      %942 = vmatpush1.bf16.msra.mxu0 0
      %943 = vmatprep.subr.bf16.mxu0 0
      %944 = vmatpush1.bf16.msra.mxu0 0
      %945 = vmatprep.subr.bf16.mxu0 0
      %946 = vmatpush1.bf16.msra.mxu0 0
      %947 = vmatprep.subr.bf16.mxu0 0
      %948 = vmatpush1.bf16.msra.mxu0 0
      %949 = vmatprep.subr.bf16.mxu0 0
      %950 = vmatpush1.bf16.msra.mxu0 0
      %951 = vmatprep.subr.bf16.mxu0 0
      %952 = vmatpush1.bf16.msra.mxu0 0
      %953 = vmatprep.subr.bf16.mxu0 0
      %954 = vmatpush1.bf16.msra.mxu0 0
      %955 = vmatprep.subr.bf16.mxu0 0
      %956 = vmatpush1.bf16.msra.mxu0 0
      %957 = vmatprep.subr.bf16.mxu0 0
      %958 = vmatpush1.bf16.msra.mxu0 0
      %959 = vmatprep.mubr.bf16.mxu0 0
      %960 = vmatmul.mubr.bf16.gmra.mrb[0].mxu0 %v922
      %v961 = vpop.f32.mrb[0].mxu0
      %v962 = vadd.f32 0.0, %v961
      %v963 = vpop.f32.mrb[0].mxu0
      %v964 = vpop.f32.mrb[0].mxu0
      %v965 = vpop.f32.mrb[0].mxu0
      %966 = vdwg.mxu0
      %967 = vrot.lane.b32.xlu0 %v505, 112
      %v968 = vpop.permute.xlu0 %967
      %969 = vrot.lane.b32.xlu0 %v507, 112
      %v970 = vpop.permute.xlu0 %969
      %v972 = vsel %vm511, %v968, 0
      %v975 = vsel %vm511, %v970, 0
      %977 = vmatprep.subr.bf16.mxu0 0
      %978 = vmatpush1.bf16.xpose.msra.mxu0 %v975
      %979 = vmatprep.subr.bf16.mxu0 0
      %980 = vmatpush1.bf16.xpose.msra.mxu0 0
      %981 = vmatprep.subr.bf16.mxu0 0
      %982 = vmatpush1.bf16.xpose.msra.mxu0 0
      %983 = vmatprep.subr.bf16.mxu0 0
      %984 = vmatpush1.bf16.xpose.msra.mxu0 0
      %985 = vmatprep.subr.bf16.mxu0 0
      %986 = vmatpush1.bf16.xpose.msra.mxu0 0
      %987 = vmatprep.subr.bf16.mxu0 0
      %988 = vmatpush1.bf16.xpose.msra.mxu0 0
      %989 = vmatprep.subr.bf16.mxu0 0
      %990 = vmatpush1.bf16.xpose.msra.mxu0 0
      %991 = vmatprep.subr.bf16.mxu0 0
      %992 = vmatpush1.bf16.xpose.msra.mxu0 0
      %993 = vmatprep.subr.bf16.mxu0 0
      %994 = vmatpush1.bf16.xpose.msra.mxu0 0
      %995 = vmatprep.subr.bf16.mxu0 0
      %996 = vmatpush1.bf16.xpose.msra.mxu0 0
      %997 = vmatprep.subr.bf16.mxu0 0
      %998 = vmatpush1.bf16.xpose.msra.mxu0 0
      %999 = vmatprep.subr.bf16.mxu0 0
      %1000 = vmatpush1.bf16.xpose.msra.mxu0 0
      %1001 = vmatprep.subr.bf16.mxu0 0
      %1002 = vmatpush1.bf16.xpose.msra.mxu0 0
      %1003 = vmatprep.subr.bf16.mxu0 0
      %1004 = vmatpush1.bf16.xpose.msra.mxu0 0
      %1005 = vmatprep.subr.bf16.mxu0 0
      %1006 = vmatpush1.bf16.xpose.msra.mxu0 0
      %1007 = vmatprep.subr.bf16.mxu0 0
      %1008 = vmatpush1.bf16.xpose.msra.mxu0 0
      %1009 = vmatprep.mubr.bf16.mxu0 0
      %1010 = vmatmul.mubr.bf16.gmra.mrb[0].mxu0 %v972
      %v1011 = vpop.f32.mrb[0].mxu0
      %v1012 = vadd.f32 0.0, %v1011
      %v1013 = vpop.f32.mrb[0].mxu0
      %v1014 = vpop.f32.mrb[0].mxu0
      %v1015 = vpop.f32.mrb[0].mxu0
      %1016 = vdwg.mxu0
      %1017 = vrot.lane.b32.xlu0 %v506, 112
      %v1018 = vpop.permute.xlu0 %1017
      %1019 = vrot.lane.b32.xlu0 %v508, 112
      %v1020 = vpop.permute.xlu0 %1019
      %v1022 = vsel %vm511, %v1018, 0
      %v1025 = vsel %vm511, %v1020, 0
      %1027 = vmatprep.subr.bf16.mxu0 0
      %1028 = vmatpush1.bf16.xpose.msra.mxu0 %v1025
      %1029 = vmatprep.subr.bf16.mxu0 0
      %1030 = vmatpush1.bf16.xpose.msra.mxu0 0
      %1031 = vmatprep.subr.bf16.mxu0 0
      %1032 = vmatpush1.bf16.xpose.msra.mxu0 0
      %1033 = vmatprep.subr.bf16.mxu0 0
      %1034 = vmatpush1.bf16.xpose.msra.mxu0 0
      %1035 = vmatprep.subr.bf16.mxu0 0
      %1036 = vmatpush1.bf16.xpose.msra.mxu0 0
      %1037 = vmatprep.subr.bf16.mxu0 0
      %1038 = vmatpush1.bf16.xpose.msra.mxu0 0
      %1039 = vmatprep.subr.bf16.mxu0 0
      %1040 = vmatpush1.bf16.xpose.msra.mxu0 0
      %1041 = vmatprep.subr.bf16.mxu0 0
      %1042 = vmatpush1.bf16.xpose.msra.mxu0 0
      %1043 = vmatprep.subr.bf16.mxu0 0
      %1044 = vmatpush1.bf16.xpose.msra.mxu0 0
      %1045 = vmatprep.subr.bf16.mxu0 0
      %1046 = vmatpush1.bf16.xpose.msra.mxu0 0
      %1047 = vmatprep.subr.bf16.mxu0 0
      %1048 = vmatpush1.bf16.xpose.msra.mxu0 0
      %1049 = vmatprep.subr.bf16.mxu0 0
      %1050 = vmatpush1.bf16.xpose.msra.mxu0 0
      %1051 = vmatprep.subr.bf16.mxu0 0
      %1052 = vmatpush1.bf16.xpose.msra.mxu0 0
      %1053 = vmatprep.subr.bf16.mxu0 0
      %1054 = vmatpush1.bf16.xpose.msra.mxu0 0
      %1055 = vmatprep.subr.bf16.mxu0 0
      %1056 = vmatpush1.bf16.xpose.msra.mxu0 0
      %1057 = vmatprep.subr.bf16.mxu0 0
      %1058 = vmatpush1.bf16.xpose.msra.mxu0 0
      %1059 = vmatprep.mubr.bf16.mxu0 0
      %1060 = vmatmul.mubr.bf16.gmra.mrb[0].mxu0 %v1022
      %v1061 = vpop.f32.mrb[0].mxu0
      %v1062 = vadd.f32 0.0, %v1061
      %v1063 = vpop.f32.mrb[0].mxu0
      %v1064 = vpop.f32.mrb[0].mxu0
      %v1065 = vpop.f32.mrb[0].mxu0
      %1066 = vdwg.mxu0
      %v1067 = vmul.f32 %v1012, 0.35355338
      %v1068 = vmul.f32 %v1062, 0.35355338
      %v1069 = vadd.f32 %v1067, %v611
      %v1070 = vadd.f32 %v1068, %v615
      %v1071 = vsel %vm511, %v1069, -inf
      %1072 = vmax.xlane.f32.xlu0 %v1071
      %v1073 = vpop.xlane.xlu0 %1072
      %v1074 = vsel %vm511, %v1070, -inf
      %1075 = vmax.xlane.f32.xlu0 %v1074
      %v1076 = vpop.xlane.xlu0 %1075
      %v1077 = vsub.f32 %v1069, %v1073
      %v1078 = vsub.f32 %v1070, %v1076
      %v1079 = vmul.f32 %v1077, 1.442695
      %v1080 = vpow.pop %v1079
      %v1081 = vmul.f32 %v1078, 1.442695
      %v1082 = vpow.pop %v1081
      %v1083 = vsel %vm511, %v1080, 0.0
      %1084 = vadd.xlane.f32.xlu0 %v1083
      %v1085 = vpop.xlane.xlu0 %1084
      %v1086 = vsel %vm511, %v1082, 0.0
      %1087 = vadd.xlane.f32.xlu0 %v1086
      %v1088 = vpop.xlane.xlu0 %1087
      %v1089 = vrcp.pop %v1085
      %v1090 = vrcp.pop %v1088
      %v1091 = vmul.f32 %v1080, %v1089
      %v1092 = vmul.f32 %v1082, %v1090
      %v1093 = vpack.c.bf16 %v1091, %v1091
      %v1094 = vpack.c.bf16 %v1092, %v1092
      %1095 = vrot.lane.b32.xlu0 %v509, 112
      %v1096 = vpop.permute.xlu0 %1095
      %v1098 = vsel %vm511, %v1093, 0
      %v1101 = vsel %vm647, %v1096, 0
      %1103 = vmatprep.subr.bf16.mxu0 0
      %1104 = vmatpush1.bf16.msra.mxu0 %v1101
      %1105 = vmatprep.subr.bf16.mxu0 0
      %1106 = vmatpush1.bf16.msra.mxu0 0
      %1107 = vmatprep.subr.bf16.mxu0 0
      %1108 = vmatpush1.bf16.msra.mxu0 0
      %1109 = vmatprep.subr.bf16.mxu0 0
      %1110 = vmatpush1.bf16.msra.mxu0 0
      %1111 = vmatprep.subr.bf16.mxu0 0
      %1112 = vmatpush1.bf16.msra.mxu0 0
      %1113 = vmatprep.subr.bf16.mxu0 0
      %1114 = vmatpush1.bf16.msra.mxu0 0
      %1115 = vmatprep.subr.bf16.mxu0 0
      %1116 = vmatpush1.bf16.msra.mxu0 0
      %1117 = vmatprep.subr.bf16.mxu0 0
      %1118 = vmatpush1.bf16.msra.mxu0 0
      %1119 = vmatprep.subr.bf16.mxu0 0
      %1120 = vmatpush1.bf16.msra.mxu0 0
      %1121 = vmatprep.subr.bf16.mxu0 0
      %1122 = vmatpush1.bf16.msra.mxu0 0
      %1123 = vmatprep.subr.bf16.mxu0 0
      %1124 = vmatpush1.bf16.msra.mxu0 0
      %1125 = vmatprep.subr.bf16.mxu0 0
      %1126 = vmatpush1.bf16.msra.mxu0 0
      %1127 = vmatprep.subr.bf16.mxu0 0
      %1128 = vmatpush1.bf16.msra.mxu0 0
      %1129 = vmatprep.subr.bf16.mxu0 0
      %1130 = vmatpush1.bf16.msra.mxu0 0
      %1131 = vmatprep.subr.bf16.mxu0 0
      %1132 = vmatpush1.bf16.msra.mxu0 0
      %1133 = vmatprep.subr.bf16.mxu0 0
      %1134 = vmatpush1.bf16.msra.mxu0 0
      %1135 = vmatprep.mubr.bf16.mxu0 0
      %1136 = vmatmul.mubr.bf16.gmra.mrb[0].mxu0 %v1098
      %v1137 = vpop.f32.mrb[0].mxu0
      %v1138 = vadd.f32 0.0, %v1137
      %v1139 = vpop.f32.mrb[0].mxu0
      %v1140 = vpop.f32.mrb[0].mxu0
      %v1141 = vpop.f32.mrb[0].mxu0
      %1142 = vdwg.mxu0
      %1143 = vrot.lane.b32.xlu0 %v510, 112
      %v1144 = vpop.permute.xlu0 %1143
      %v1146 = vsel %vm511, %v1094, 0
      %v1149 = vsel %vm647, %v1144, 0
      %1151 = vmatprep.subr.bf16.mxu0 0
      %1152 = vmatpush1.bf16.msra.mxu0 %v1149
      %1153 = vmatprep.subr.bf16.mxu0 0
      %1154 = vmatpush1.bf16.msra.mxu0 0
      %1155 = vmatprep.subr.bf16.mxu0 0
      %1156 = vmatpush1.bf16.msra.mxu0 0
      %1157 = vmatprep.subr.bf16.mxu0 0
      %1158 = vmatpush1.bf16.msra.mxu0 0
      %1159 = vmatprep.subr.bf16.mxu0 0
      %1160 = vmatpush1.bf16.msra.mxu0 0
      %1161 = vmatprep.subr.bf16.mxu0 0
      %1162 = vmatpush1.bf16.msra.mxu0 0
      %1163 = vmatprep.subr.bf16.mxu0 0
      %1164 = vmatpush1.bf16.msra.mxu0 0
      %1165 = vmatprep.subr.bf16.mxu0 0
      %1166 = vmatpush1.bf16.msra.mxu0 0
      %1167 = vmatprep.subr.bf16.mxu0 0
      %1168 = vmatpush1.bf16.msra.mxu0 0
      %1169 = vmatprep.subr.bf16.mxu0 0
      %1170 = vmatpush1.bf16.msra.mxu0 0
      %1171 = vmatprep.subr.bf16.mxu0 0
      %1172 = vmatpush1.bf16.msra.mxu0 0
      %1173 = vmatprep.subr.bf16.mxu0 0
      %1174 = vmatpush1.bf16.msra.mxu0 0
      %1175 = vmatprep.subr.bf16.mxu0 0
      %1176 = vmatpush1.bf16.msra.mxu0 0
      %1177 = vmatprep.subr.bf16.mxu0 0
      %1178 = vmatpush1.bf16.msra.mxu0 0
      %1179 = vmatprep.subr.bf16.mxu0 0
      %1180 = vmatpush1.bf16.msra.mxu0 0
      %1181 = vmatprep.subr.bf16.mxu0 0
      %1182 = vmatpush1.bf16.msra.mxu0 0
      %1183 = vmatprep.mubr.bf16.mxu0 0
      %1184 = vmatmul.mubr.bf16.gmra.mrb[0].mxu0 %v1146
      %v1185 = vpop.f32.mrb[0].mxu0
      %v1186 = vadd.f32 0.0, %v1185
      %v1187 = vpop.f32.mrb[0].mxu0
      %v1188 = vpop.f32.mrb[0].mxu0
      %v1189 = vpop.f32.mrb[0].mxu0
      %1190 = vdwg.mxu0
      %1191 = vrot.lane.b32.xlu0 %v505, 104
      %v1192 = vpop.permute.xlu0 %1191
      %1193 = vrot.lane.b32.xlu0 %v507, 104
      %v1194 = vpop.permute.xlu0 %1193
      %v1196 = vsel %vm511, %v1192, 0
      %v1199 = vsel %vm511, %v1194, 0
      %1201 = vmatprep.subr.bf16.mxu0 0
      %1202 = vmatpush1.bf16.xpose.msra.mxu0 %v1199
      %1203 = vmatprep.subr.bf16.mxu0 0
      %1204 = vmatpush1.bf16.xpose.msra.mxu0 0
      %1205 = vmatprep.subr.bf16.mxu0 0
      %1206 = vmatpush1.bf16.xpose.msra.mxu0 0
      %1207 = vmatprep.subr.bf16.mxu0 0
      %1208 = vmatpush1.bf16.xpose.msra.mxu0 0
      %1209 = vmatprep.subr.bf16.mxu0 0
      %1210 = vmatpush1.bf16.xpose.msra.mxu0 0
      %1211 = vmatprep.subr.bf16.mxu0 0
      %1212 = vmatpush1.bf16.xpose.msra.mxu0 0
      %1213 = vmatprep.subr.bf16.mxu0 0
      %1214 = vmatpush1.bf16.xpose.msra.mxu0 0
      %1215 = vmatprep.subr.bf16.mxu0 0
      %1216 = vmatpush1.bf16.xpose.msra.mxu0 0
      %1217 = vmatprep.subr.bf16.mxu0 0
      %1218 = vmatpush1.bf16.xpose.msra.mxu0 0
      %1219 = vmatprep.subr.bf16.mxu0 0
      %1220 = vmatpush1.bf16.xpose.msra.mxu0 0
      %1221 = vmatprep.subr.bf16.mxu0 0
      %1222 = vmatpush1.bf16.xpose.msra.mxu0 0
      %1223 = vmatprep.subr.bf16.mxu0 0
      %1224 = vmatpush1.bf16.xpose.msra.mxu0 0
      %1225 = vmatprep.subr.bf16.mxu0 0
      %1226 = vmatpush1.bf16.xpose.msra.mxu0 0
      %1227 = vmatprep.subr.bf16.mxu0 0
      %1228 = vmatpush1.bf16.xpose.msra.mxu0 0
      %1229 = vmatprep.subr.bf16.mxu0 0
      %1230 = vmatpush1.bf16.xpose.msra.mxu0 0
      %1231 = vmatprep.subr.bf16.mxu0 0
      %1232 = vmatpush1.bf16.xpose.msra.mxu0 0
      %1233 = vmatprep.mubr.bf16.mxu0 0
      %1234 = vmatmul.mubr.bf16.gmra.mrb[0].mxu0 %v1196
      %v1235 = vpop.f32.mrb[0].mxu0
      %v1236 = vadd.f32 0.0, %v1235
      %v1237 = vpop.f32.mrb[0].mxu0
      %v1238 = vpop.f32.mrb[0].mxu0
      %v1239 = vpop.f32.mrb[0].mxu0
      %1240 = vdwg.mxu0
      %1241 = vrot.lane.b32.xlu0 %v506, 104
      %v1242 = vpop.permute.xlu0 %1241
      %1243 = vrot.lane.b32.xlu0 %v508, 104
      %v1244 = vpop.permute.xlu0 %1243
      %v1246 = vsel %vm511, %v1242, 0
      %v1249 = vsel %vm511, %v1244, 0
      %1251 = vmatprep.subr.bf16.mxu0 0
      %1252 = vmatpush1.bf16.xpose.msra.mxu0 %v1249
      %1253 = vmatprep.subr.bf16.mxu0 0
      %1254 = vmatpush1.bf16.xpose.msra.mxu0 0
      %1255 = vmatprep.subr.bf16.mxu0 0
      %1256 = vmatpush1.bf16.xpose.msra.mxu0 0
      %1257 = vmatprep.subr.bf16.mxu0 0
      %1258 = vmatpush1.bf16.xpose.msra.mxu0 0
      %1259 = vmatprep.subr.bf16.mxu0 0
      %1260 = vmatpush1.bf16.xpose.msra.mxu0 0
      %1261 = vmatprep.subr.bf16.mxu0 0
      %1262 = vmatpush1.bf16.xpose.msra.mxu0 0
      %1263 = vmatprep.subr.bf16.mxu0 0
      %1264 = vmatpush1.bf16.xpose.msra.mxu0 0
      %1265 = vmatprep.subr.bf16.mxu0 0
      %1266 = vmatpush1.bf16.xpose.msra.mxu0 0
      %1267 = vmatprep.subr.bf16.mxu0 0
      %1268 = vmatpush1.bf16.xpose.msra.mxu0 0
      %1269 = vmatprep.subr.bf16.mxu0 0
      %1270 = vmatpush1.bf16.xpose.msra.mxu0 0
      %1271 = vmatprep.subr.bf16.mxu0 0
      %1272 = vmatpush1.bf16.xpose.msra.mxu0 0
      %1273 = vmatprep.subr.bf16.mxu0 0
      %1274 = vmatpush1.bf16.xpose.msra.mxu0 0
      %1275 = vmatprep.subr.bf16.mxu0 0
      %1276 = vmatpush1.bf16.xpose.msra.mxu0 0
      %1277 = vmatprep.subr.bf16.mxu0 0
      %1278 = vmatpush1.bf16.xpose.msra.mxu0 0
      %1279 = vmatprep.subr.bf16.mxu0 0
      %1280 = vmatpush1.bf16.xpose.msra.mxu0 0
      %1281 = vmatprep.subr.bf16.mxu0 0
      %1282 = vmatpush1.bf16.xpose.msra.mxu0 0
      %1283 = vmatprep.mubr.bf16.mxu0 0
      %1284 = vmatmul.mubr.bf16.gmra.mrb[0].mxu0 %v1246
      %v1285 = vpop.f32.mrb[0].mxu0
      %v1286 = vadd.f32 0.0, %v1285
      %v1287 = vpop.f32.mrb[0].mxu0
      %v1288 = vpop.f32.mrb[0].mxu0
      %v1289 = vpop.f32.mrb[0].mxu0
      %1290 = vdwg.mxu0
      %v1291 = vmul.f32 %v1236, 0.35355338
      %v1292 = vmul.f32 %v1286, 0.35355338
      %v1293 = vadd.f32 %v1291, %v611
      %v1294 = vadd.f32 %v1292, %v615
      %v1295 = vsel %vm511, %v1293, -inf
      %1296 = vmax.xlane.f32.xlu0 %v1295
      %v1297 = vpop.xlane.xlu0 %1296
      %v1298 = vsel %vm511, %v1294, -inf
      %1299 = vmax.xlane.f32.xlu0 %v1298
      %v1300 = vpop.xlane.xlu0 %1299
      %v1301 = vsub.f32 %v1293, %v1297
      %v1302 = vsub.f32 %v1294, %v1300
      %v1303 = vmul.f32 %v1301, 1.442695
      %v1304 = vpow.pop %v1303
      %v1305 = vmul.f32 %v1302, 1.442695
      %v1306 = vpow.pop %v1305
      %v1307 = vsel %vm511, %v1304, 0.0
      %1308 = vadd.xlane.f32.xlu0 %v1307
      %v1309 = vpop.xlane.xlu0 %1308
      %v1310 = vsel %vm511, %v1306, 0.0
      %1311 = vadd.xlane.f32.xlu0 %v1310
      %v1312 = vpop.xlane.xlu0 %1311
      %v1313 = vrcp.pop %v1309
      %v1314 = vrcp.pop %v1312
      %v1315 = vmul.f32 %v1304, %v1313
      %v1316 = vmul.f32 %v1306, %v1314
      %v1317 = vpack.c.bf16 %v1315, %v1315
      %v1318 = vpack.c.bf16 %v1316, %v1316
      %1319 = vrot.lane.b32.xlu0 %v509, 104
      %v1320 = vpop.permute.xlu0 %1319
      %v1322 = vsel %vm511, %v1317, 0
      %v1325 = vsel %vm647, %v1320, 0
      %1327 = vmatprep.subr.bf16.mxu0 0
      %1328 = vmatpush1.bf16.msra.mxu0 %v1325
      %1329 = vmatprep.subr.bf16.mxu0 0
      %1330 = vmatpush1.bf16.msra.mxu0 0
      %1331 = vmatprep.subr.bf16.mxu0 0
      %1332 = vmatpush1.bf16.msra.mxu0 0
      %1333 = vmatprep.subr.bf16.mxu0 0
      %1334 = vmatpush1.bf16.msra.mxu0 0
      %1335 = vmatprep.subr.bf16.mxu0 0
      %1336 = vmatpush1.bf16.msra.mxu0 0
      %1337 = vmatprep.subr.bf16.mxu0 0
      %1338 = vmatpush1.bf16.msra.mxu0 0
      %1339 = vmatprep.subr.bf16.mxu0 0
      %1340 = vmatpush1.bf16.msra.mxu0 0
      %1341 = vmatprep.subr.bf16.mxu0 0
      %1342 = vmatpush1.bf16.msra.mxu0 0
      %1343 = vmatprep.subr.bf16.mxu0 0
      %1344 = vmatpush1.bf16.msra.mxu0 0
      %1345 = vmatprep.subr.bf16.mxu0 0
      %1346 = vmatpush1.bf16.msra.mxu0 0
      %1347 = vmatprep.subr.bf16.mxu0 0
      %1348 = vmatpush1.bf16.msra.mxu0 0
      %1349 = vmatprep.subr.bf16.mxu0 0
      %1350 = vmatpush1.bf16.msra.mxu0 0
      %1351 = vmatprep.subr.bf16.mxu0 0
      %1352 = vmatpush1.bf16.msra.mxu0 0
      %1353 = vmatprep.subr.bf16.mxu0 0
      %1354 = vmatpush1.bf16.msra.mxu0 0
      %1355 = vmatprep.subr.bf16.mxu0 0
      %1356 = vmatpush1.bf16.msra.mxu0 0
      %1357 = vmatprep.subr.bf16.mxu0 0
      %1358 = vmatpush1.bf16.msra.mxu0 0
      %1359 = vmatprep.mubr.bf16.mxu0 0
      %1360 = vmatmul.mubr.bf16.gmra.mrb[0].mxu0 %v1322
      %v1361 = vpop.f32.mrb[0].mxu0
      %v1362 = vadd.f32 0.0, %v1361
      %v1363 = vpop.f32.mrb[0].mxu0
      %v1364 = vpop.f32.mrb[0].mxu0
      %v1365 = vpop.f32.mrb[0].mxu0
      %1366 = vdwg.mxu0
      %1367 = vrot.lane.b32.xlu0 %v510, 104
      %v1368 = vpop.permute.xlu0 %1367
      %v1370 = vsel %vm511, %v1318, 0
      %v1373 = vsel %vm647, %v1368, 0
      %1375 = vmatprep.subr.bf16.mxu0 0
      %1376 = vmatpush1.bf16.msra.mxu0 %v1373
      %1377 = vmatprep.subr.bf16.mxu0 0
      %1378 = vmatpush1.bf16.msra.mxu0 0
      %1379 = vmatprep.subr.bf16.mxu0 0
      %1380 = vmatpush1.bf16.msra.mxu0 0
      %1381 = vmatprep.subr.bf16.mxu0 0
      %1382 = vmatpush1.bf16.msra.mxu0 0
      %1383 = vmatprep.subr.bf16.mxu0 0
      %1384 = vmatpush1.bf16.msra.mxu0 0
      %1385 = vmatprep.subr.bf16.mxu0 0
      %1386 = vmatpush1.bf16.msra.mxu0 0
      %1387 = vmatprep.subr.bf16.mxu0 0
      %1388 = vmatpush1.bf16.msra.mxu0 0
      %1389 = vmatprep.subr.bf16.mxu0 0
      %1390 = vmatpush1.bf16.msra.mxu0 0
      %1391 = vmatprep.subr.bf16.mxu0 0
      %1392 = vmatpush1.bf16.msra.mxu0 0
      %1393 = vmatprep.subr.bf16.mxu0 0
      %1394 = vmatpush1.bf16.msra.mxu0 0
      %1395 = vmatprep.subr.bf16.mxu0 0
      %1396 = vmatpush1.bf16.msra.mxu0 0
      %1397 = vmatprep.subr.bf16.mxu0 0
      %1398 = vmatpush1.bf16.msra.mxu0 0
      %1399 = vmatprep.subr.bf16.mxu0 0
      %1400 = vmatpush1.bf16.msra.mxu0 0
      %1401 = vmatprep.subr.bf16.mxu0 0
      %1402 = vmatpush1.bf16.msra.mxu0 0
      %1403 = vmatprep.subr.bf16.mxu0 0
      %1404 = vmatpush1.bf16.msra.mxu0 0
      %1405 = vmatprep.subr.bf16.mxu0 0
      %1406 = vmatpush1.bf16.msra.mxu0 0
      %1407 = vmatprep.mubr.bf16.mxu0 0
      %1408 = vmatmul.mubr.bf16.gmra.mrb[0].mxu0 %v1370
      %v1409 = vpop.f32.mrb[0].mxu0
      %v1410 = vadd.f32 0.0, %v1409
      %v1411 = vpop.f32.mrb[0].mxu0
      %v1412 = vpop.f32.mrb[0].mxu0
      %v1413 = vpop.f32.mrb[0].mxu0
      %1414 = vdwg.mxu0
      %1417 = vrot.lane.b32.xlu0 %v913, 8
      %v1418 = vpop.permute.xlu0 %1417
      %1419 = vrot.lane.b32.xlu0 %v962, 8
      %v1420 = vpop.permute.xlu0 %1419
      %1425 = vrot.lane.b32.xlu0 %v1138, 16
      %v1426 = vpop.permute.xlu0 %1425
      %1427 = vrot.lane.b32.xlu0 %v1186, 16
      %v1428 = vpop.permute.xlu0 %1427
      %1433 = vrot.lane.b32.xlu0 %v1362, 24
      %v1434 = vpop.permute.xlu0 %1433
      %1435 = vrot.lane.b32.xlu0 %v1410, 24
      %v1436 = vpop.permute.xlu0 %1435
      %v1439 = vsel %vm511, %v686, %v1418
      %v1440 = vsel %vm511, %v732, %v1420
      %vm1441 = vcmask 130048
      %v1442 = vsel %vm1441, %v1439, %v1426
      %v1443 = vsel %vm1441, %v1440, %v1428
      %vm1444 = vcmask 195584
      %v1445 = vsel %vm1444, %v1442, %v1434
      %v1446 = vsel %vm1444, %v1443, %v1436
      %v1447 = vpack.c.bf16 %v1446, %v1445
      %s1448 = smul.addr %s300, 4
      %s1449 = scalar_lea.vmem %s13, %s1448
      %v1450 = vld [vmem:[%s1449] sm:$0xf]
      %v1451 = vld [vmem:[%s1449 + $0x4] sm:$0xf]
      %v1452 = vld [vmem:[%s1449 + $0x8] sm:$0xf]
      %v1453 = vld [vmem:[%s1449 + $0xc] sm:$0xf]
      %s1454 = scalar_lea.vmem %s14, %s292
      %v1455 = vld [vmem:[%s1454] sm:$0x1]
      %v1457 = vlaneseq
      %v1458 = vshrl.u32 %v1457, 7
      %v1459 = vsub.s32 0, %v1458
      %v1460 = vrot.slane %v1455, %v1459
      %v1466 = vunpack.c.l.b16 %v1450
      %v1467 = vunpack.c.l.b16 %v1451
      %v1468 = vunpack.c.l.b16 %v1452
      %v1469 = vunpack.c.l.b16 %v1453
      %v1470 = vpack.c.b16 %v1467, %v1466
      %v1471 = vpack.c.b16 %v1469, %v1468
      %v1475 = vsel %vm247, %v1447, 0
      %1477 = vmatprep.subr.bf16.mxu0 0
      %1478 = vmatpush1.bf16.msra.mxu0 %v1470
      %1479 = vmatprep.subr.bf16.mxu0 0
      %1480 = vmatpush1.bf16.msra.mxu0 %v1471
      %1481 = vmatprep.subr.bf16.mxu0 0
      %1482 = vmatpush1.bf16.msra.mxu0 0
      %1483 = vmatprep.subr.bf16.mxu0 0
      %1484 = vmatpush1.bf16.msra.mxu0 0
      %1485 = vmatprep.subr.bf16.mxu0 0
      %1486 = vmatpush1.bf16.msra.mxu0 0
      %1487 = vmatprep.subr.bf16.mxu0 0
      %1488 = vmatpush1.bf16.msra.mxu0 0
      %1489 = vmatprep.subr.bf16.mxu0 0
      %1490 = vmatpush1.bf16.msra.mxu0 0
      %1491 = vmatprep.subr.bf16.mxu0 0
      %1492 = vmatpush1.bf16.msra.mxu0 0
      %1493 = vmatprep.subr.bf16.mxu0 0
      %1494 = vmatpush1.bf16.msra.mxu0 0
      %1495 = vmatprep.subr.bf16.mxu0 0
      %1496 = vmatpush1.bf16.msra.mxu0 0
      %1497 = vmatprep.subr.bf16.mxu0 0
      %1498 = vmatpush1.bf16.msra.mxu0 0
      %1499 = vmatprep.subr.bf16.mxu0 0
      %1500 = vmatpush1.bf16.msra.mxu0 0
      %1501 = vmatprep.subr.bf16.mxu0 0
      %1502 = vmatpush1.bf16.msra.mxu0 0
      %1503 = vmatprep.subr.bf16.mxu0 0
      %1504 = vmatpush1.bf16.msra.mxu0 0
      %1505 = vmatprep.subr.bf16.mxu0 0
      %1506 = vmatpush1.bf16.msra.mxu0 0
      %1507 = vmatprep.subr.bf16.mxu0 0
      %1508 = vmatpush1.bf16.msra.mxu0 0
      %1509 = vmatprep.mubr.bf16.mxu0 0
      %1510 = vmatmul.mubr.bf16.gmra.mrb[0].mxu0 %v1475
      %v1511 = vpop.f32.mrb[0].mxu0
      %v1512 = vadd.f32 %v1460, %v1511
      %v1513 = vpop.f32.mrb[0].mxu0
      %v1514 = vpop.f32.mrb[0].mxu0
      %v1515 = vadd.f32 %v1460, %v1514
      %v1516 = vpop.f32.mrb[0].mxu0
      %1517 = vdwg.mxu0
      %v1518 = vadd.f32 %v297, %v1512
      %v1519 = vadd.f32 %v298, %v1515
      %s1520 = scalar_lea.vmem %s15, %s292
      %v1521 = vld [vmem:[%s1520] sm:$0x1]
      %s1522 = scalar_lea.vmem %s16, %s292
      %v1523 = vld [vmem:[%s1522] sm:$0x1]
      %v1524 = vsel %vm247, %v1518, 0.0
      %1525 = vadd.xlane.f32.xlu0 %v1524
      %v1526 = vpop.xlane.xlu0 %1525
      %v1527 = vsel %vm247, %v1519, 0.0
      %1528 = vadd.xlane.f32.xlu0 %v1527
      %v1529 = vpop.xlane.xlu0 %1528
      %v1530 = vmul.f32 %v1526, %v254
      %v1531 = vmul.f32 %v1529, %v254
      %v1532 = vsub.f32 %v1518, %v1530
      %v1533 = vsub.f32 %v1519, %v1531
      %v1534 = vmul.f32 %v1532, %v1532
      %v1535 = vmul.f32 %v1533, %v1533
      %v1536 = vsel %vm247, %v1534, 0.0
      %1537 = vadd.xlane.f32.xlu0 %v1536
      %v1538 = vpop.xlane.xlu0 %1537
      %v1539 = vsel %vm247, %v1535, 0.0
      %1540 = vadd.xlane.f32.xlu0 %v1539
      %v1541 = vpop.xlane.xlu0 %1540
      %v1542 = vmul.f32 %v1538, %v254
      %v1543 = vmul.f32 %v1541, %v254
      %v1544 = vadd.f32 %v1542, 1e-12
      %v1545 = vadd.f32 %v1543, 1e-12
      %v1546 = vrsqrt.pop %v1544
      %v1547 = vrsqrt.pop %v1545
      %v1548 = vmul.f32 %v1532, %v1546
      %v1549 = vmul.f32 %v1533, %v1547
      %v1551 = vlaneseq
      %v1552 = vshrl.u32 %v1551, 7
      %v1553 = vsub.s32 0, %v1552
      %v1554 = vrot.slane %v1521, %v1553
      %v1556 = vmul.f32 %v1548, %v1554
      %v1557 = vmul.f32 %v1549, %v1554
      %v1559 = vlaneseq
      %v1560 = vshrl.u32 %v1559, 7
      %v1561 = vsub.s32 0, %v1560
      %v1562 = vrot.slane %v1523, %v1561
      %v1564 = vadd.f32 %v1556, %v1562
      %v1565 = vadd.f32 %v1557, %v1562
      %v1566 = vpack.c.bf16 %v1565, %v1564
      %s1567 = smul.addr %s300, 4
      %s1568 = scalar_lea.vmem %s17, %s1567
      %v1569 = vld [vmem:[%s1568] sm:$0xf]
      %v1570 = vld [vmem:[%s1568 + $0x4] sm:$0xf]
      %v1571 = vld [vmem:[%s1568 + $0x8] sm:$0xf]
      %v1572 = vld [vmem:[%s1568 + $0xc] sm:$0xf]
      %s1573 = scalar_lea.vmem %s18, %s292
      %v1574 = vld [vmem:[%s1573] sm:$0x1]
      %v1576 = vlaneseq
      %v1577 = vshrl.u32 %v1576, 7
      %v1578 = vsub.s32 0, %v1577
      %v1579 = vrot.slane %v1574, %v1578
      %v1585 = vunpack.c.l.b16 %v1569
      %v1586 = vunpack.c.l.b16 %v1570
      %v1587 = vunpack.c.l.b16 %v1571
      %v1588 = vunpack.c.l.b16 %v1572
      %v1589 = vpack.c.b16 %v1586, %v1585
      %v1590 = vpack.c.b16 %v1588, %v1587
      %v1594 = vsel %vm247, %v1566, 0
      %1596 = vmatprep.subr.bf16.mxu0 0
      %1597 = vmatpush1.bf16.msra.mxu0 %v1589
      %1598 = vmatprep.subr.bf16.mxu0 0
      %1599 = vmatpush1.bf16.msra.mxu0 %v1590
      %1600 = vmatprep.subr.bf16.mxu0 0
      %1601 = vmatpush1.bf16.msra.mxu0 0
      %1602 = vmatprep.subr.bf16.mxu0 0
      %1603 = vmatpush1.bf16.msra.mxu0 0
      %1604 = vmatprep.subr.bf16.mxu0 0
      %1605 = vmatpush1.bf16.msra.mxu0 0
      %1606 = vmatprep.subr.bf16.mxu0 0
      %1607 = vmatpush1.bf16.msra.mxu0 0
      %1608 = vmatprep.subr.bf16.mxu0 0
      %1609 = vmatpush1.bf16.msra.mxu0 0
      %1610 = vmatprep.subr.bf16.mxu0 0
      %1611 = vmatpush1.bf16.msra.mxu0 0
      %1612 = vmatprep.subr.bf16.mxu0 0
      %1613 = vmatpush1.bf16.msra.mxu0 0
      %1614 = vmatprep.subr.bf16.mxu0 0
      %1615 = vmatpush1.bf16.msra.mxu0 0
      %1616 = vmatprep.subr.bf16.mxu0 0
      %1617 = vmatpush1.bf16.msra.mxu0 0
      %1618 = vmatprep.subr.bf16.mxu0 0
      %1619 = vmatpush1.bf16.msra.mxu0 0
      %1620 = vmatprep.subr.bf16.mxu0 0
      %1621 = vmatpush1.bf16.msra.mxu0 0
      %1622 = vmatprep.subr.bf16.mxu0 0
      %1623 = vmatpush1.bf16.msra.mxu0 0
      %1624 = vmatprep.subr.bf16.mxu0 0
      %1625 = vmatpush1.bf16.msra.mxu0 0
      %1626 = vmatprep.subr.bf16.mxu0 0
      %1627 = vmatpush1.bf16.msra.mxu0 0
      %1628 = vmatprep.mubr.bf16.mxu0 0
      %1629 = vmatmul.mubr.bf16.gmra.mrb[0].mxu0 %v1594
      %v1630 = vpop.f32.mrb[0].mxu0
      %v1631 = vadd.f32 %v1579, %v1630
      %v1632 = vpop.f32.mrb[0].mxu0
      %v1633 = vpop.f32.mrb[0].mxu0
      %v1634 = vadd.f32 %v1579, %v1633
      %v1635 = vpop.f32.mrb[0].mxu0
      %1636 = vdwg.mxu0
      %v1637 = vmul.f32 %v1631, %v1631
      %v1638 = vmul.f32 %v1634, %v1634
      %v1639 = vmul.f32 %v1631, %v1637
      %v1640 = vmul.f32 %v1634, %v1638
      %v1641 = vmul.f32 %v1639, 0.044715
      %v1642 = vmul.f32 %v1640, 0.044715
      %v1643 = vadd.f32 %v1631, %v1641
      %v1644 = vadd.f32 %v1634, %v1642
      %v1645 = vmul.f32 %v1643, 0.7978846
      %v1646 = vmul.f32 %v1644, 0.7978846
      %v1647 = vtanh.pop %v1645
      %v1648 = vtanh.pop %v1646
      %v1649 = vadd.f32 %v1647, 1.0
      %v1650 = vadd.f32 %v1648, 1.0
      %v1651 = vmul.f32 %v1649, 0.5
      %v1652 = vmul.f32 %v1650, 0.5
      %v1653 = vmul.f32 %v1631, %v1651
      %v1654 = vmul.f32 %v1634, %v1652
      %v1655 = vpack.c.bf16 %v1654, %v1653
      %s1656 = smul.u32 %s292, 8
      %s1657 = smul.addr %s1656, 4
      %s1658 = scalar_lea.vmem %s19, %s1657
      %v1659 = vld [vmem:[%s1658] sm:$0xf]
      %v1660 = vld [vmem:[%s1658 + $0x4] sm:$0xf]
      %v1661 = vld [vmem:[%s1658 + $0x8] sm:$0xf]
      %v1662 = vld [vmem:[%s1658 + $0xc] sm:$0xf]
      %v1663 = vld [vmem:[%s1658 + $0x10] sm:$0xf]
      %v1664 = vld [vmem:[%s1658 + $0x14] sm:$0xf]
      %v1665 = vld [vmem:[%s1658 + $0x18] sm:$0xf]
      %v1666 = vld [vmem:[%s1658 + $0x1c] sm:$0xf]
      %s1667 = scalar_lea.vmem %s20, %s292
      %v1668 = vld [vmem:[%s1667] sm:$0x1]
      %v1670 = vlaneseq
      %v1671 = vshrl.u32 %v1670, 7
      %v1672 = vsub.s32 0, %v1671
      %v1673 = vrot.slane %v1668, %v1672
      %v1683 = vunpack.c.l.b16 %v1659
      %v1684 = vunpack.c.l.b16 %v1660
      %v1685 = vunpack.c.l.b16 %v1661
      %v1686 = vunpack.c.l.b16 %v1662
      %v1687 = vunpack.c.l.b16 %v1663
      %v1688 = vunpack.c.l.b16 %v1664
      %v1689 = vunpack.c.l.b16 %v1665
      %v1690 = vunpack.c.l.b16 %v1666
      %v1691 = vpack.c.b16 %v1684, %v1683
      %v1692 = vpack.c.b16 %v1686, %v1685
      %v1693 = vpack.c.b16 %v1688, %v1687
      %v1694 = vpack.c.b16 %v1690, %v1689
      %vm1699 = vcmask 523264
      %v1701 = vsel %vm1699, %v1655, 0
      %1703 = vmatprep.subr.bf16.mxu0 0
      %1704 = vmatpush1.bf16.msra.mxu0 %v1691
      %1705 = vmatprep.subr.bf16.mxu0 0
      %1706 = vmatpush1.bf16.msra.mxu0 %v1692
      %1707 = vmatprep.subr.bf16.mxu0 0
      %1708 = vmatpush1.bf16.msra.mxu0 %v1693
      %1709 = vmatprep.subr.bf16.mxu0 0
      %1710 = vmatpush1.bf16.msra.mxu0 %v1694
      %1711 = vmatprep.subr.bf16.mxu0 0
      %1712 = vmatpush1.bf16.msra.mxu0 0
      %1713 = vmatprep.subr.bf16.mxu0 0
      %1714 = vmatpush1.bf16.msra.mxu0 0
      %1715 = vmatprep.subr.bf16.mxu0 0
      %1716 = vmatpush1.bf16.msra.mxu0 0
      %1717 = vmatprep.subr.bf16.mxu0 0
      %1718 = vmatpush1.bf16.msra.mxu0 0
      %1719 = vmatprep.subr.bf16.mxu0 0
      %1720 = vmatpush1.bf16.msra.mxu0 0
      %1721 = vmatprep.subr.bf16.mxu0 0
      %1722 = vmatpush1.bf16.msra.mxu0 0
      %1723 = vmatprep.subr.bf16.mxu0 0
      %1724 = vmatpush1.bf16.msra.mxu0 0
      %1725 = vmatprep.subr.bf16.mxu0 0
      %1726 = vmatpush1.bf16.msra.mxu0 0
      %1727 = vmatprep.subr.bf16.mxu0 0
      %1728 = vmatpush1.bf16.msra.mxu0 0
      %1729 = vmatprep.subr.bf16.mxu0 0
      %1730 = vmatpush1.bf16.msra.mxu0 0
      %1731 = vmatprep.subr.bf16.mxu0 0
      %1732 = vmatpush1.bf16.msra.mxu0 0
      %1733 = vmatprep.subr.bf16.mxu0 0
      %1734 = vmatpush1.bf16.msra.mxu0 0
      %1735 = vmatprep.mubr.bf16.mxu0 0
      %1736 = vmatmul.mubr.bf16.gmra.mrb[0].mxu0 %v1701
      %v1737 = vpop.f32.mrb[0].mxu0
      %v1738 = vadd.f32 %v1673, %v1737
      %v1739 = vpop.f32.mrb[0].mxu0
      %v1740 = vpop.f32.mrb[0].mxu0
      %v1741 = vadd.f32 %v1673, %v1740
      %v1742 = vpop.f32.mrb[0].mxu0
      %1743 = vdwg.mxu0
      %v1744 = vadd.f32 %v1564, %v1738
      %v1745 = vadd.f32 %v1565, %v1741
      %s1746 = scalar_lea.vmem %s21, %s292
      %v1747 = vld [vmem:[%s1746] sm:$0x1]
      %s1748 = scalar_lea.vmem [#allocation2], %s292
      %v1749 = vld [vmem:[%s1748] sm:$0x1]
      %v1750 = vsel %vm247, %v1744, 0.0
      %1751 = vadd.xlane.f32.xlu0 %v1750
      %v1752 = vpop.xlane.xlu0 %1751
      %v1753 = vsel %vm247, %v1745, 0.0
      %1754 = vadd.xlane.f32.xlu0 %v1753
      %v1755 = vpop.xlane.xlu0 %1754
      %v1756 = vmul.f32 %v1752, %v254
      %v1757 = vmul.f32 %v1755, %v254
      %v1758 = vsub.f32 %v1744, %v1756
      %v1759 = vsub.f32 %v1745, %v1757
      %v1760 = vmul.f32 %v1758, %v1758
      %v1761 = vmul.f32 %v1759, %v1759
      %v1762 = vsel %vm247, %v1760, 0.0
      %1763 = vadd.xlane.f32.xlu0 %v1762
      %v1764 = vpop.xlane.xlu0 %1763
      %v1765 = vsel %vm247, %v1761, 0.0
      %1766 = vadd.xlane.f32.xlu0 %v1765
      %v1767 = vpop.xlane.xlu0 %1766
      %v1768 = vmul.f32 %v1764, %v254
      %v1769 = vmul.f32 %v1767, %v254
      %v1770 = vadd.f32 %v1768, 1e-12
      %v1771 = vadd.f32 %v1769, 1e-12
      %v1772 = vrsqrt.pop %v1770
      %v1773 = vrsqrt.pop %v1771
      %v1774 = vmul.f32 %v1758, %v1772
      %v1775 = vmul.f32 %v1759, %v1773
      %v1777 = vlaneseq
      %v1778 = vshrl.u32 %v1777, 7
      %v1779 = vsub.s32 0, %v1778
      %v1780 = vrot.slane %v1747, %v1779
      %v1782 = vmul.f32 %v1774, %v1780
      %v1783 = vmul.f32 %v1775, %v1780
      %v1785 = vlaneseq
      %v1786 = vshrl.u32 %v1785, 7
      %v1787 = vsub.s32 0, %v1786
      %v1788 = vrot.slane %v1749, %v1787
      %v1790 = vadd.f32 %v1782, %v1788
      %v1791 = vadd.f32 %v1783, %v1788
    $region114: #{bert_gat_crf_ner_forward.2} parent=1 // loop_footer
      %s296 = sadd.s32 1, %s292
    $region115: #{bert_gat_crf_ner_forward.2} parent=1 // loop_footer_branch
      %291 = sbr.rel target = $region111
    $region116: #{bert_gat_crf_ner_forward.2} parent=1 // loop_exit
      _
    %v1792 = vpack.c.bf16 %v298, %v297
    %v1793 = vld [vmem:[%s23] sm:$0xf]
    %v1794 = vld [vmem:[%s23 + $0x4] sm:$0xf]
    %v1795 = vld [vmem:[%s23 + $0x8] sm:$0xf]
    %v1796 = vld [vmem:[%s23 + $0xc] sm:$0xf]
    %v1797 = vld [vmem:[#allocation4] sm:$0x1]
    %v1799 = vlaneseq
    %v1800 = vshrl.u32 %v1799, 7
    %v1801 = vsub.s32 0, %v1800
    %v1802 = vrot.slane %v1797, %v1801
    %v1808 = vunpack.c.l.b16 %v1793
    %v1809 = vunpack.c.l.b16 %v1794
    %v1810 = vunpack.c.l.b16 %v1795
    %v1811 = vunpack.c.l.b16 %v1796
    %v1812 = vpack.c.b16 %v1809, %v1808
    %v1813 = vpack.c.b16 %v1811, %v1810
    %v1817 = vsel %vm247, %v1792, 0
    %1819 = vmatprep.subr.bf16.mxu0 0
    %1820 = vmatpush1.bf16.msra.mxu0 %v1812
    %1821 = vmatprep.subr.bf16.mxu0 0
    %1822 = vmatpush1.bf16.msra.mxu0 %v1813
    %1823 = vmatprep.subr.bf16.mxu0 0
    %1824 = vmatpush1.bf16.msra.mxu0 0
    %1825 = vmatprep.subr.bf16.mxu0 0
    %1826 = vmatpush1.bf16.msra.mxu0 0
    %1827 = vmatprep.subr.bf16.mxu0 0
    %1828 = vmatpush1.bf16.msra.mxu0 0
    %1829 = vmatprep.subr.bf16.mxu0 0
    %1830 = vmatpush1.bf16.msra.mxu0 0
    %1831 = vmatprep.subr.bf16.mxu0 0
    %1832 = vmatpush1.bf16.msra.mxu0 0
    %1833 = vmatprep.subr.bf16.mxu0 0
    %1834 = vmatpush1.bf16.msra.mxu0 0
    %1835 = vmatprep.subr.bf16.mxu0 0
    %1836 = vmatpush1.bf16.msra.mxu0 0
    %1837 = vmatprep.subr.bf16.mxu0 0
    %1838 = vmatpush1.bf16.msra.mxu0 0
    %1839 = vmatprep.subr.bf16.mxu0 0
    %1840 = vmatpush1.bf16.msra.mxu0 0
    %1841 = vmatprep.subr.bf16.mxu0 0
    %1842 = vmatpush1.bf16.msra.mxu0 0
    %1843 = vmatprep.subr.bf16.mxu0 0
    %1844 = vmatpush1.bf16.msra.mxu0 0
    %1845 = vmatprep.subr.bf16.mxu0 0
    %1846 = vmatpush1.bf16.msra.mxu0 0
    %1847 = vmatprep.subr.bf16.mxu0 0
    %1848 = vmatpush1.bf16.msra.mxu0 0
    %1849 = vmatprep.subr.bf16.mxu0 0
    %1850 = vmatpush1.bf16.msra.mxu0 0
    %1851 = vmatprep.mubr.bf16.mxu0 0
    %1852 = vmatmul.mubr.bf16.gmra.mrb[0].mxu0 %v1817
    %v1853 = vpop.f32.mrb[0].mxu0
    %v1854 = vadd.f32 %v1802, %v1853
    %v1855 = vpop.f32.mrb[0].mxu0
    %v1856 = vpop.f32.mrb[0].mxu0
    %v1857 = vadd.f32 %v1802, %v1856
    %v1858 = vpop.f32.mrb[0].mxu0
    %1859 = vdwg.mxu0
    %vm1860 = vcmask 105472
    %1861 = vst.msk [vmem:[%s25] sm:$0xff] %vm1860, %v1854
    %1862 = vst.msk [vmem:[%s25 + $0x8] sm:$0xff] %vm1860, %v1857
    // Predicated region
    $region117: #{bert_gat_crf_ner_forward.2} parent=1 // pred_check
      _
    $region118: #{bert_gat_crf_ner_forward.2} parent=1 // pred_check_branch
      %1864 = sbr.rel (0) target = $region120
    $region119: #{bert_gat_crf_ner_forward.2} parent=1 // pred_region
      _
    $region120: #{bert_gat_crf_ner_forward.2} parent=1 // pred_fallthru
      _
    // Predicated region
    $region121: #{bert_gat_crf_ner_forward.2} parent=1 // pred_check
      _
    $region122: #{bert_gat_crf_ner_forward.2} parent=1 // pred_check_branch
      %1866 = sbr.rel (0) target = $region124
    $region123: #{bert_gat_crf_ner_forward.2} parent=1 // pred_region
      _
    $region124: #{bert_gat_crf_ner_forward.2} parent=1 // pred_fallthru
      _
    %1867 = vsyncpa [#allocation3], 1
    %1868 = vsyncpa [#allocation5], 1

</llo_original>
